<compile_context>
chip_gen: v5e
topology: v5e:2x2
jax: 0.10.0
libtpu: 0.0.40
codegen_flags: <defaults>
</compile_context>

<pallas_src>
import jax
import jax.numpy as jnp
from jax.experimental import pallas as pl
from jax.experimental.pallas import tpu as pltpu


_PITCH = 11                                   # block-grid / slab row pitch
_PARITIES = ((0, 0), (0, 1), (1, 0), (1, 1))  # (row parity, col parity)
_C1_BLOCKS = {0: (0,), 1: (0, 1)}             # active 8-blocks per parity
_K1, _K2, _K3 = 109, 97, 73                   # slab row counts (pitch 11)


def _round_up(x, m):
    return ((x + m - 1) // m) * m


# ---------------------------------------------------------------------------
# Kernel 1: fused conv1 -> conv2 -> conv3 (one image per grid step).
# ---------------------------------------------------------------------------
def _conv_stack_kernel(x_ref, w1_ref, b1_ref, w2_ref, b2_ref, w3_ref, b3_ref,
                       o_ref):
    P = _PITCH

    # ---- conv1: 8x8 stride 4 on 8x8 space-to-depth blocks -----------------
    # 4 shifted-slab matmuls; output lanes pack the 4 output parities
    # (lane = parity*32 + channel).  109 rows = 10x10 valid outputs, pitch 11.
    acc1 = jnp.zeros((_K1, 128), jnp.float32)
    t = 0
    for bi in (0, 1):
        for bj in (0, 1):
            s = bi * P + bj
            acc1 = acc1 + jnp.dot(x_ref[0, s:s + _K1, :], w1_ref[t],
                                  preferred_element_type=jnp.float32)
            t += 1
    a1 = jnp.maximum(acc1 + b1_ref[...], 0.0)          # (109, 128)

    # ---- conv2: 4x4 stride 2 == 2x2 conv over the parity-packed lanes -----
    acc2 = jnp.zeros((_K2, 128), jnp.float32)
    t = 0
    for bi in (0, 1):
        for bj in (0, 1):
            s = bi * P + bj
            acc2 = acc2 + jnp.dot(a1[s:s + _K2, :], w2_ref[t],
                                  preferred_element_type=jnp.float32)
            t += 1
    a2 = jnp.maximum(acc2 + b2_ref[...], 0.0)          # (97,128): 9x9 valid, 64 ch

    # ---- conv3: 3x3 stride 1 -----------------------------------------------
    acc3 = jnp.zeros((_K3, 128), jnp.float32)
    t = 0
    for di in range(3):
        for dj in range(3):
            s = di * P + dj
            acc3 = acc3 + jnp.dot(a2[s:s + _K3, :], w3_ref[t],
                                  preferred_element_type=jnp.float32)
            t += 1
    a3 = jnp.maximum(acc3 + b3_ref[...], 0.0)          # (73,128): 7x7 valid, 32 ch

    # ---- compact pitch-11 rows -> dense 49 rows (lane-dense 128-wide store).
    for h in range(7):
        o_ref[0, h * 7:(h + 1) * 7, :] = a3[h * P:h * P + 7, :]


def conv_stack(xblk, p):
    """xblk: (N,121,256) space-to-depth input -> (N,49,128) conv3 features
    (channels 0..31 valid, 32..127 exactly zero)."""
    n = xblk.shape[0]
    return pl.pallas_call(
        _conv_stack_kernel,
        out_shape=jax.ShapeDtypeStruct((n, 49, 128), jnp.float32),
        grid=(n,),
        in_specs=[
            pl.BlockSpec((1, 121, 256), lambda i: (i, 0, 0)),
            pl.BlockSpec((4, 256, 128), lambda i: (0, 0, 0)),
            pl.BlockSpec((1, 128), lambda i: (0, 0)),
            pl.BlockSpec((4, 128, 128), lambda i: (0, 0, 0)),
            pl.BlockSpec((1, 128), lambda i: (0, 0)),
            pl.BlockSpec((9, 128, 128), lambda i: (0, 0, 0)),
            pl.BlockSpec((1, 128), lambda i: (0, 0)),
        ],
        out_specs=pl.BlockSpec((1, 49, 128), lambda i: (i, 0, 0)),
        compiler_params=pltpu.CompilerParams(
            dimension_semantics=("parallel",)),
    )(xblk, p["w1"], p["b1"], p["w2"], p["b2"], p["w3"], p["b3"])


# ---------------------------------------------------------------------------
# Kernel 2: fused batched matmul + bias + ReLU for fc1.
# ---------------------------------------------------------------------------
def _fc_kernel(x_ref, w_ref, b_ref, o_ref):
    acc = jnp.dot(x_ref[...], w_ref[...], preferred_element_type=jnp.float32)
    o_ref[...] = jnp.maximum(acc + b_ref[...], 0.0)


def matmul_bias_relu(x, w, b, *, tn=256):
    m, k = x.shape
    kw_, nf = w.shape
    if m <= 8:
        tm, mp = m, m                       # block == full dim (allowed)
    elif m <= 512:
        tm = _round_up(m, 8)
        mp = tm                             # single M tile
    else:
        tm = 256
        mp = _round_up(m, 256)
    xp = x if mp == m else jnp.pad(x, ((0, mp - m), (0, 0)))
    out = pl.pallas_call(
        _fc_kernel,
        out_shape=jax.ShapeDtypeStruct((mp, nf), jnp.float32),
        grid=(mp // tm, nf // tn),
        in_specs=[
            pl.BlockSpec((tm, k), lambda i, j: (i, 0)),
            pl.BlockSpec((kw_, tn), lambda i, j: (0, j)),
            pl.BlockSpec((1, tn), lambda i, j: (0, j)),
        ],
        out_specs=pl.BlockSpec((tm, tn), lambda i, j: (i, j)),
        compiler_params=pltpu.CompilerParams(
            dimension_semantics=("parallel", "parallel")),
    )(xp, w, b)
    return out if mp == m else out[:m]


# ---------------------------------------------------------------------------
# Init (PyTorch-equivalent orthogonal weights) + one-time weight packing.
# ---------------------------------------------------------------------------
def _orthogonal(key, rows, cols, gain):
    big, small = max(rows, cols), min(rows, cols)
    a = jax.random.normal(key, (big, small), dtype=jnp.float32)
    q, r = jnp.linalg.qr(a)
    q = q * jnp.where(jnp.diagonal(r) >= 0.0, 1.0, -1.0)[None, :]
    if rows < cols:
        q = q.T
    return (gain * q[:rows, :cols]).astype(jnp.float32)


def init_params(key):
    """PyTorch-layout parameters (same semantics as the nn.Module init)."""
    gain = float(jnp.sqrt(2.0))
    k1, k2, k3, k4 = jax.random.split(key, 4)
    return {
        "conv1_w": _orthogonal(k1, 32, 4 * 8 * 8, gain).reshape(32, 4, 8, 8),
        "conv1_b": jnp.zeros((32,), jnp.float32),
        "conv2_w": _orthogonal(k2, 64, 32 * 4 * 4, gain).reshape(64, 32, 4, 4),
        "conv2_b": jnp.zeros((64,), jnp.float32),
        "conv3_w": _orthogonal(k3, 32, 64 * 3 * 3, gain).reshape(32, 64, 3, 3),
        "conv3_b": jnp.zeros((32,), jnp.float32),
        "fc1_w": _orthogonal(k4, 512, 32 * 7 * 7, gain),   # (512, 1568)
        "fc1_b": jnp.zeros((512,), jnp.float32),
    }


def _tap_ranges(par, blk):
    """Within-block rows r0..r0+L-1 map to conv1 kernel taps k0..k0+L-1."""
    if par == 0:
        return 0, 0, 8
    if blk == 0:
        return 4, 0, 4
    return 0, 4, 4


def prepare_params(p):
    """One-time packing of PyTorch weights into kernel-ready slabs."""
    w1, w2, w3 = p["conv1_w"], p["conv2_w"], p["conv3_w"]

    # conv1: one (256,128) slab per 8x8-block offset (bi,bj); output lanes
    # grouped by output-pixel parity: lane = parity*32 + out_channel.
    slabs1 = []
    for bi in (0, 1):
        for bj in (0, 1):
            slab = jnp.zeros((4, 8, 8, 128), jnp.float32)
            for pi, (ii, jj) in enumerate(_PARITIES):
                if bi not in _C1_BLOCKS[ii] or bj not in _C1_BLOCKS[jj]:
                    continue
                hr0, kh0, hl = _tap_ranges(ii, bi)
                wr0, kw0, wl = _tap_ranges(jj, bj)
                blk = w1[:, :, kh0:kh0 + hl, kw0:kw0 + wl]      # (co,ci,hl,wl)
                blk = jnp.transpose(blk, (1, 2, 3, 0))          # (ci,u,v,co)
                slab = slab.at[:, hr0:hr0 + hl, wr0:wr0 + wl,
                               pi * 32:(pi + 1) * 32].set(blk)
            slabs1.append(slab.reshape(256, 128))
    w1p = jnp.stack(slabs1)                                     # (4, 256, 128)
    b1p = jnp.tile(p["conv1_b"], 4).reshape(1, 128)

    # conv2: one (128,128) slab per 2x2 block offset; input rows grouped by
    # conv1 parity, output columns = conv2 channels (64 valid).
    slabs2 = []
    for bi in (0, 1):
        for bj in (0, 1):
            wslab = jnp.zeros((128, 128), jnp.float32)
            for pi, (ii, jj) in enumerate(_PARITIES):
                sub = jnp.transpose(w2[:, :, 2 * bi + ii, 2 * bj + jj], (1, 0))
                wslab = wslab.at[pi * 32:(pi + 1) * 32, 0:64].set(sub)
            slabs2.append(wslab)
    w2p = jnp.stack(slabs2)                                     # (4, 128, 128)
    b2p = jnp.pad(p["conv2_b"], (0, 64)).reshape(1, 128)

    # conv3: 9 tap slabs (128,128), 64 valid input rows / 32 valid output cols.
    slabs3 = []
    for di in range(3):
        for dj in range(3):
            sub = jnp.transpose(w3[:, :, di, dj], (1, 0))       # (64, 32)
            slabs3.append(jnp.pad(sub, ((0, 64), (0, 96))))     # (128, 128)
    w3p = jnp.stack(slabs3)                                     # (9, 128, 128)
    b3p = jnp.pad(p["conv3_b"], (0, 96)).reshape(1, 128)

    # fc1: transpose + fold the PyTorch NCHW flatten order into a row perm.
    # feature index produced by the conv kernel = (h*7+w)*32 + c.
    fc_w = p["fc1_w"].reshape(512, 32, 7, 7)
    fc_w = jnp.transpose(fc_w, (2, 3, 1, 0)).reshape(49 * 32, 512)

    return {"w1": w1p, "b1": b1p, "w2": w2p, "b2": b2p, "w3": w3p, "b3": b3p,
            "fc_w": fc_w, "fc_b": p["fc1_b"].reshape(1, 512)}


# ---------------------------------------------------------------------------
# Forward pass (matches deepmind.forward exactly, f32 end to end).
# ---------------------------------------------------------------------------
@jax.jit
def deepmind_forward(packed, x):
    n = x.shape[0]
    # zero-amplification space-to-depth(8): (N,4,84,84) -> (N,121,256)
    xp = jnp.pad(x, ((0, 0), (0, 0), (0, 4), (0, 4)))
    xblk = xp.reshape(n, 4, 11, 8, 11, 8)
    xblk = jnp.transpose(xblk, (0, 2, 4, 1, 3, 5)).reshape(n, 121, 256)
    feat = conv_stack(xblk, packed)                   # (N, 49, 128)
    feat = feat[:, :, :32].reshape(n, 49 * 32)        # (N, 1568)
    return matmul_bias_relu(feat, packed["fc_w"], packed["fc_b"])   # (N, 512)


# Plain-JAX reference (exact PyTorch semantics) used only for the self-check.
@jax.jit
def reference_forward(params, x):
    dn = ("NCHW", "OIHW", "NCHW")
    hp = jax.lax.Precision.HIGHEST
    y = jax.lax.conv_general_dilated(x, params["conv1_w"], (4, 4), "VALID",
                                     dimension_numbers=dn, precision=hp)
    y = jax.nn.relu(y + params["conv1_b"][None, :, None, None])
    y = jax.lax.conv_general_dilated(y, params["conv2_w"], (2, 2), "VALID",
                                     dimension_numbers=dn, precision=hp)
    y = jax.nn.relu(y + params["conv2_b"][None, :, None, None])
    y = jax.lax.conv_general_dilated(y, params["conv3_w"], (1, 1), "VALID",
                                     dimension_numbers=dn, precision=hp)
    y = jax.nn.relu(y + params["conv3_b"][None, :, None, None])
    y = y.reshape(y.shape[0], -1)                     # NCHW flatten (32*7*7)
    y = jnp.dot(y, params["fc1_w"].T, precision=hp) + params["fc1_b"]
    return jax.nn.relu(y)


if __name__ == "__main__":
    key = jax.random.PRNGKey(0)
    pkey, xkey = jax.random.split(key)
    params = init_params(pkey)
    packed = prepare_params(params)          # one-time weight packing

    # fc1 expects 32*7*7 features -> spatial input must be 84x84, 4 channels.
    x = jax.random.normal(xkey, (2, 4, 84, 84), dtype=jnp.float32)

    out = jax.block_until_ready(deepmind_forward(packed, x))
    ref = jax.block_until_ready(reference_forward(params, x))

    assert out.shape == (2, 512), out.shape
    assert bool(jnp.all(out >= 0.0))         # ReLU output
    rel = float(jnp.linalg.norm(out - ref) / (jnp.linalg.norm(ref) + 1e-8))
    assert rel < 3e-2, f"mismatch vs reference: rel={rel}"
    print("KERNEL_OK")
</pallas_src>

<mosaic_0001>
module attributes {stable_mosaic.version = 11 : i64} {
  func.func @_conv_stack_kernel(%arg0: i32, %arg1: memref<1x121x256xf32, #tpu.memory_space<vmem>>, %arg2: memref<4x256x128xf32, #tpu.memory_space<vmem>>, %arg3: memref<1x128xf32, #tpu.memory_space<vmem>>, %arg4: memref<4x128x128xf32, #tpu.memory_space<vmem>>, %arg5: memref<1x128xf32, #tpu.memory_space<vmem>>, %arg6: memref<9x128x128xf32, #tpu.memory_space<vmem>>, %arg7: memref<1x128xf32, #tpu.memory_space<vmem>>, %arg8: memref<1x49x128xf32, #tpu.memory_space<vmem>>) attributes {dimension_semantics = [#tpu.dimension_semantics<parallel>], iteration_bounds = array<i64: 2>, scalar_prefetch = 0 : i64, scratch_operands = 0 : i64, tpu.core_type = #tpu.core_type<tc>, window_params = [{transform_indices = @transform_0, window_bounds = array<i64: 1, 121, 256>}, {pipeline_mode = #tpu.pipeline_mode<synchronous>, transform_indices = @transform_1, window_bounds = array<i64: 4, 256, 128>}, {pipeline_mode = #tpu.pipeline_mode<synchronous>, transform_indices = @transform_2, window_bounds = array<i64: 1, 128>}, {pipeline_mode = #tpu.pipeline_mode<synchronous>, transform_indices = @transform_3, window_bounds = array<i64: 4, 128, 128>}, {pipeline_mode = #tpu.pipeline_mode<synchronous>, transform_indices = @transform_4, window_bounds = array<i64: 1, 128>}, {pipeline_mode = #tpu.pipeline_mode<synchronous>, transform_indices = @transform_5, window_bounds = array<i64: 9, 128, 128>}, {pipeline_mode = #tpu.pipeline_mode<synchronous>, transform_indices = @transform_6, window_bounds = array<i64: 1, 128>}, {transform_indices = @transform_7, window_bounds = array<i64: 1, 49, 128>}]} {
    %cst = arith.constant 0.000000e+00 : f32
    %0 = vector.broadcast %cst : f32 to vector<109x128xf32>
    %c0 = arith.constant 0 : index
    %c0_0 = arith.constant 0 : index
    %c0_1 = arith.constant 0 : index
    %1 = vector.load %arg1[%c0, %c0_0, %c0_1] : memref<1x121x256xf32, #tpu.memory_space<vmem>>, vector<1x109x256xf32>
    %2 = vector.shape_cast %1 : vector<1x109x256xf32> to vector<109x256xf32>
    %c0_2 = arith.constant 0 : index
    %c0_3 = arith.constant 0 : index
    %c0_4 = arith.constant 0 : index
    %3 = vector.load %arg2[%c0_2, %c0_3, %c0_4] : memref<4x256x128xf32, #tpu.memory_space<vmem>>, vector<1x256x128xf32>
    %4 = vector.shape_cast %3 : vector<1x256x128xf32> to vector<256x128xf32>
    %cst_5 = arith.constant dense<0.000000e+00> : vector<109x128xf32>
    %5 = tpu.matmul %2, %4, %cst_5 {dimension_numbers = #tpu.dot_dimension_numbers<[1], [0], [0], [1], [0, 0, 1, 1], [], []>} : vector<109x256xf32>, vector<256x128xf32>, vector<109x128xf32> -> vector<109x128xf32>
    %6 = arith.addf %0, %5 : vector<109x128xf32>
    %c0_6 = arith.constant 0 : index
    %c1 = arith.constant 1 : index
    %c0_7 = arith.constant 0 : index
    %7 = vector.load %arg1[%c0_6, %c1, %c0_7] : memref<1x121x256xf32, #tpu.memory_space<vmem>>, vector<1x109x256xf32>
    %8 = vector.shape_cast %7 : vector<1x109x256xf32> to vector<109x256xf32>
    %c1_8 = arith.constant 1 : index
    %c0_9 = arith.constant 0 : index
    %c0_10 = arith.constant 0 : index
    %9 = vector.load %arg2[%c1_8, %c0_9, %c0_10] : memref<4x256x128xf32, #tpu.memory_space<vmem>>, vector<1x256x128xf32>
    %10 = vector.shape_cast %9 : vector<1x256x128xf32> to vector<256x128xf32>
    %cst_11 = arith.constant dense<0.000000e+00> : vector<109x128xf32>
    %11 = tpu.matmul %8, %10, %cst_11 {dimension_numbers = #tpu.dot_dimension_numbers<[1], [0], [0], [1], [0, 0, 1, 1], [], []>} : vector<109x256xf32>, vector<256x128xf32>, vector<109x128xf32> -> vector<109x128xf32>
    %12 = arith.addf %6, %11 : vector<109x128xf32>
    %c0_12 = arith.constant 0 : index
    %c11 = arith.constant 11 : index
    %c0_13 = arith.constant 0 : index
    %13 = vector.load %arg1[%c0_12, %c11, %c0_13] : memref<1x121x256xf32, #tpu.memory_space<vmem>>, vector<1x109x256xf32>
    %14 = vector.shape_cast %13 : vector<1x109x256xf32> to vector<109x256xf32>
    %c2 = arith.constant 2 : index
    %c0_14 = arith.constant 0 : index
    %c0_15 = arith.constant 0 : index
    %15 = vector.load %arg2[%c2, %c0_14, %c0_15] : memref<4x256x128xf32, #tpu.memory_space<vmem>>, vector<1x256x128xf32>
    %16 = vector.shape_cast %15 : vector<1x256x128xf32> to vector<256x128xf32>
    %cst_16 = arith.constant dense<0.000000e+00> : vector<109x128xf32>
    %17 = tpu.matmul %14, %16, %cst_16 {dimension_numbers = #tpu.dot_dimension_numbers<[1], [0], [0], [1], [0, 0, 1, 1], [], []>} : vector<109x256xf32>, vector<256x128xf32>, vector<109x128xf32> -> vector<109x128xf32>
    %18 = arith.addf %12, %17 : vector<109x128xf32>
    %c0_17 = arith.constant 0 : index
    %c12 = arith.constant 12 : index
    %c0_18 = arith.constant 0 : index
    %19 = vector.load %arg1[%c0_17, %c12, %c0_18] : memref<1x121x256xf32, #tpu.memory_space<vmem>>, vector<1x109x256xf32>
    %20 = vector.shape_cast %19 : vector<1x109x256xf32> to vector<109x256xf32>
    %c3 = arith.constant 3 : index
    %c0_19 = arith.constant 0 : index
    %c0_20 = arith.constant 0 : index
    %21 = vector.load %arg2[%c3, %c0_19, %c0_20] : memref<4x256x128xf32, #tpu.memory_space<vmem>>, vector<1x256x128xf32>
    %22 = vector.shape_cast %21 : vector<1x256x128xf32> to vector<256x128xf32>
    %cst_21 = arith.constant dense<0.000000e+00> : vector<109x128xf32>
    %23 = tpu.matmul %20, %22, %cst_21 {dimension_numbers = #tpu.dot_dimension_numbers<[1], [0], [0], [1], [0, 0, 1, 1], [], []>} : vector<109x256xf32>, vector<256x128xf32>, vector<109x128xf32> -> vector<109x128xf32>
    %24 = arith.addf %18, %23 : vector<109x128xf32>
    %c0_22 = arith.constant 0 : index
    %c0_23 = arith.constant 0 : index
    %25 = vector.load %arg3[%c0_22, %c0_23] : memref<1x128xf32, #tpu.memory_space<vmem>>, vector<1x128xf32>
    %26 = vector.broadcast %25 : vector<1x128xf32> to vector<109x128xf32>
    %27 = arith.addf %24, %26 : vector<109x128xf32>
    %cst_24 = arith.constant 0.000000e+00 : f32
    %28 = vector.broadcast %cst_24 : f32 to vector<109x128xf32>
    %29 = arith.maximumf %27, %28 : vector<109x128xf32>
    %cst_25 = arith.constant 0.000000e+00 : f32
    %30 = vector.broadcast %cst_25 : f32 to vector<97x128xf32>
    %31 = vector.extract_strided_slice %29 {offsets = [0, 0], sizes = [97, 128], strides = [1, 1]} : vector<109x128xf32> to vector<97x128xf32>
    %c0_26 = arith.constant 0 : index
    %c0_27 = arith.constant 0 : index
    %c0_28 = arith.constant 0 : index
    %32 = vector.load %arg4[%c0_26, %c0_27, %c0_28] : memref<4x128x128xf32, #tpu.memory_space<vmem>>, vector<1x128x128xf32>
    %33 = vector.shape_cast %32 : vector<1x128x128xf32> to vector<128x128xf32>
    %cst_29 = arith.constant dense<0.000000e+00> : vector<97x128xf32>
    %34 = tpu.matmul %31, %33, %cst_29 {dimension_numbers = #tpu.dot_dimension_numbers<[1], [0], [0], [1], [0, 0, 1, 1], [], []>} : vector<97x128xf32>, vector<128x128xf32>, vector<97x128xf32> -> vector<97x128xf32>
    %35 = arith.addf %30, %34 : vector<97x128xf32>
    %36 = vector.extract_strided_slice %29 {offsets = [1, 0], sizes = [97, 128], strides = [1, 1]} : vector<109x128xf32> to vector<97x128xf32>
    %c1_30 = arith.constant 1 : index
    %c0_31 = arith.constant 0 : index
    %c0_32 = arith.constant 0 : index
    %37 = vector.load %arg4[%c1_30, %c0_31, %c0_32] : memref<4x128x128xf32, #tpu.memory_space<vmem>>, vector<1x128x128xf32>
    %38 = vector.shape_cast %37 : vector<1x128x128xf32> to vector<128x128xf32>
    %cst_33 = arith.constant dense<0.000000e+00> : vector<97x128xf32>
    %39 = tpu.matmul %36, %38, %cst_33 {dimension_numbers = #tpu.dot_dimension_numbers<[1], [0], [0], [1], [0, 0, 1, 1], [], []>} : vector<97x128xf32>, vector<128x128xf32>, vector<97x128xf32> -> vector<97x128xf32>
    %40 = arith.addf %35, %39 : vector<97x128xf32>
    %41 = vector.extract_strided_slice %29 {offsets = [11, 0], sizes = [97, 128], strides = [1, 1]} : vector<109x128xf32> to vector<97x128xf32>
    %c2_34 = arith.constant 2 : index
    %c0_35 = arith.constant 0 : index
    %c0_36 = arith.constant 0 : index
    %42 = vector.load %arg4[%c2_34, %c0_35, %c0_36] : memref<4x128x128xf32, #tpu.memory_space<vmem>>, vector<1x128x128xf32>
    %43 = vector.shape_cast %42 : vector<1x128x128xf32> to vector<128x128xf32>
    %cst_37 = arith.constant dense<0.000000e+00> : vector<97x128xf32>
    %44 = tpu.matmul %41, %43, %cst_37 {dimension_numbers = #tpu.dot_dimension_numbers<[1], [0], [0], [1], [0, 0, 1, 1], [], []>} : vector<97x128xf32>, vector<128x128xf32>, vector<97x128xf32> -> vector<97x128xf32>
    %45 = arith.addf %40, %44 : vector<97x128xf32>
    %46 = vector.extract_strided_slice %29 {offsets = [12, 0], sizes = [97, 128], strides = [1, 1]} : vector<109x128xf32> to vector<97x128xf32>
    %c3_38 = arith.constant 3 : index
    %c0_39 = arith.constant 0 : index
    %c0_40 = arith.constant 0 : index
    %47 = vector.load %arg4[%c3_38, %c0_39, %c0_40] : memref<4x128x128xf32, #tpu.memory_space<vmem>>, vector<1x128x128xf32>
    %48 = vector.shape_cast %47 : vector<1x128x128xf32> to vector<128x128xf32>
    %cst_41 = arith.constant dense<0.000000e+00> : vector<97x128xf32>
    %49 = tpu.matmul %46, %48, %cst_41 {dimension_numbers = #tpu.dot_dimension_numbers<[1], [0], [0], [1], [0, 0, 1, 1], [], []>} : vector<97x128xf32>, vector<128x128xf32>, vector<97x128xf32> -> vector<97x128xf32>
    %50 = arith.addf %45, %49 : vector<97x128xf32>
    %c0_42 = arith.constant 0 : index
    %c0_43 = arith.constant 0 : index
    %51 = vector.load %arg5[%c0_42, %c0_43] : memref<1x128xf32, #tpu.memory_space<vmem>>, vector<1x128xf32>
    %52 = vector.broadcast %51 : vector<1x128xf32> to vector<97x128xf32>
    %53 = arith.addf %50, %52 : vector<97x128xf32>
    %cst_44 = arith.constant 0.000000e+00 : f32
    %54 = vector.broadcast %cst_44 : f32 to vector<97x128xf32>
    %55 = arith.maximumf %53, %54 : vector<97x128xf32>
    %cst_45 = arith.constant 0.000000e+00 : f32
    %56 = vector.broadcast %cst_45 : f32 to vector<73x128xf32>
    %57 = vector.extract_strided_slice %55 {offsets = [0, 0], sizes = [73, 128], strides = [1, 1]} : vector<97x128xf32> to vector<73x128xf32>
    %c0_46 = arith.constant 0 : index
    %c0_47 = arith.constant 0 : index
    %c0_48 = arith.constant 0 : index
    %58 = vector.load %arg6[%c0_46, %c0_47, %c0_48] : memref<9x128x128xf32, #tpu.memory_space<vmem>>, vector<1x128x128xf32>
    %59 = vector.shape_cast %58 : vector<1x128x128xf32> to vector<128x128xf32>
    %cst_49 = arith.constant dense<0.000000e+00> : vector<73x128xf32>
    %60 = tpu.matmul %57, %59, %cst_49 {dimension_numbers = #tpu.dot_dimension_numbers<[1], [0], [0], [1], [0, 0, 1, 1], [], []>} : vector<73x128xf32>, vector<128x128xf32>, vector<73x128xf32> -> vector<73x128xf32>
    %61 = arith.addf %56, %60 : vector<73x128xf32>
    %62 = vector.extract_strided_slice %55 {offsets = [1, 0], sizes = [73, 128], strides = [1, 1]} : vector<97x128xf32> to vector<73x128xf32>
    %c1_50 = arith.constant 1 : index
    %c0_51 = arith.constant 0 : index
    %c0_52 = arith.constant 0 : index
    %63 = vector.load %arg6[%c1_50, %c0_51, %c0_52] : memref<9x128x128xf32, #tpu.memory_space<vmem>>, vector<1x128x128xf32>
    %64 = vector.shape_cast %63 : vector<1x128x128xf32> to vector<128x128xf32>
    %cst_53 = arith.constant dense<0.000000e+00> : vector<73x128xf32>
    %65 = tpu.matmul %62, %64, %cst_53 {dimension_numbers = #tpu.dot_dimension_numbers<[1], [0], [0], [1], [0, 0, 1, 1], [], []>} : vector<73x128xf32>, vector<128x128xf32>, vector<73x128xf32> -> vector<73x128xf32>
    %66 = arith.addf %61, %65 : vector<73x128xf32>
    %67 = vector.extract_strided_slice %55 {offsets = [2, 0], sizes = [73, 128], strides = [1, 1]} : vector<97x128xf32> to vector<73x128xf32>
    %c2_54 = arith.constant 2 : index
    %c0_55 = arith.constant 0 : index
    %c0_56 = arith.constant 0 : index
    %68 = vector.load %arg6[%c2_54, %c0_55, %c0_56] : memref<9x128x128xf32, #tpu.memory_space<vmem>>, vector<1x128x128xf32>
    %69 = vector.shape_cast %68 : vector<1x128x128xf32> to vector<128x128xf32>
    %cst_57 = arith.constant dense<0.000000e+00> : vector<73x128xf32>
    %70 = tpu.matmul %67, %69, %cst_57 {dimension_numbers = #tpu.dot_dimension_numbers<[1], [0], [0], [1], [0, 0, 1, 1], [], []>} : vector<73x128xf32>, vector<128x128xf32>, vector<73x128xf32> -> vector<73x128xf32>
    %71 = arith.addf %66, %70 : vector<73x128xf32>
    %72 = vector.extract_strided_slice %55 {offsets = [11, 0], sizes = [73, 128], strides = [1, 1]} : vector<97x128xf32> to vector<73x128xf32>
    %c3_58 = arith.constant 3 : index
    %c0_59 = arith.constant 0 : index
    %c0_60 = arith.constant 0 : index
    %73 = vector.load %arg6[%c3_58, %c0_59, %c0_60] : memref<9x128x128xf32, #tpu.memory_space<vmem>>, vector<1x128x128xf32>
    %74 = vector.shape_cast %73 : vector<1x128x128xf32> to vector<128x128xf32>
    %cst_61 = arith.constant dense<0.000000e+00> : vector<73x128xf32>
    %75 = tpu.matmul %72, %74, %cst_61 {dimension_numbers = #tpu.dot_dimension_numbers<[1], [0], [0], [1], [0, 0, 1, 1], [], []>} : vector<73x128xf32>, vector<128x128xf32>, vector<73x128xf32> -> vector<73x128xf32>
    %76 = arith.addf %71, %75 : vector<73x128xf32>
    %77 = vector.extract_strided_slice %55 {offsets = [12, 0], sizes = [73, 128], strides = [1, 1]} : vector<97x128xf32> to vector<73x128xf32>
    %c4 = arith.constant 4 : index
    %c0_62 = arith.constant 0 : index
    %c0_63 = arith.constant 0 : index
    %78 = vector.load %arg6[%c4, %c0_62, %c0_63] : memref<9x128x128xf32, #tpu.memory_space<vmem>>, vector<1x128x128xf32>
    %79 = vector.shape_cast %78 : vector<1x128x128xf32> to vector<128x128xf32>
    %cst_64 = arith.constant dense<0.000000e+00> : vector<73x128xf32>
    %80 = tpu.matmul %77, %79, %cst_64 {dimension_numbers = #tpu.dot_dimension_numbers<[1], [0], [0], [1], [0, 0, 1, 1], [], []>} : vector<73x128xf32>, vector<128x128xf32>, vector<73x128xf32> -> vector<73x128xf32>
    %81 = arith.addf %76, %80 : vector<73x128xf32>
    %82 = vector.extract_strided_slice %55 {offsets = [13, 0], sizes = [73, 128], strides = [1, 1]} : vector<97x128xf32> to vector<73x128xf32>
    %c5 = arith.constant 5 : index
    %c0_65 = arith.constant 0 : index
    %c0_66 = arith.constant 0 : index
    %83 = vector.load %arg6[%c5, %c0_65, %c0_66] : memref<9x128x128xf32, #tpu.memory_space<vmem>>, vector<1x128x128xf32>
    %84 = vector.shape_cast %83 : vector<1x128x128xf32> to vector<128x128xf32>
    %cst_67 = arith.constant dense<0.000000e+00> : vector<73x128xf32>
    %85 = tpu.matmul %82, %84, %cst_67 {dimension_numbers = #tpu.dot_dimension_numbers<[1], [0], [0], [1], [0, 0, 1, 1], [], []>} : vector<73x128xf32>, vector<128x128xf32>, vector<73x128xf32> -> vector<73x128xf32>
    %86 = arith.addf %81, %85 : vector<73x128xf32>
    %87 = vector.extract_strided_slice %55 {offsets = [22, 0], sizes = [73, 128], strides = [1, 1]} : vector<97x128xf32> to vector<73x128xf32>
    %c6 = arith.constant 6 : index
    %c0_68 = arith.constant 0 : index
    %c0_69 = arith.constant 0 : index
    %88 = vector.load %arg6[%c6, %c0_68, %c0_69] : memref<9x128x128xf32, #tpu.memory_space<vmem>>, vector<1x128x128xf32>
    %89 = vector.shape_cast %88 : vector<1x128x128xf32> to vector<128x128xf32>
    %cst_70 = arith.constant dense<0.000000e+00> : vector<73x128xf32>
    %90 = tpu.matmul %87, %89, %cst_70 {dimension_numbers = #tpu.dot_dimension_numbers<[1], [0], [0], [1], [0, 0, 1, 1], [], []>} : vector<73x128xf32>, vector<128x128xf32>, vector<73x128xf32> -> vector<73x128xf32>
    %91 = arith.addf %86, %90 : vector<73x128xf32>
    %92 = vector.extract_strided_slice %55 {offsets = [23, 0], sizes = [73, 128], strides = [1, 1]} : vector<97x128xf32> to vector<73x128xf32>
    %c7 = arith.constant 7 : index
    %c0_71 = arith.constant 0 : index
    %c0_72 = arith.constant 0 : index
    %93 = vector.load %arg6[%c7, %c0_71, %c0_72] : memref<9x128x128xf32, #tpu.memory_space<vmem>>, vector<1x128x128xf32>
    %94 = vector.shape_cast %93 : vector<1x128x128xf32> to vector<128x128xf32>
    %cst_73 = arith.constant dense<0.000000e+00> : vector<73x128xf32>
    %95 = tpu.matmul %92, %94, %cst_73 {dimension_numbers = #tpu.dot_dimension_numbers<[1], [0], [0], [1], [0, 0, 1, 1], [], []>} : vector<73x128xf32>, vector<128x128xf32>, vector<73x128xf32> -> vector<73x128xf32>
    %96 = arith.addf %91, %95 : vector<73x128xf32>
    %97 = vector.extract_strided_slice %55 {offsets = [24, 0], sizes = [73, 128], strides = [1, 1]} : vector<97x128xf32> to vector<73x128xf32>
    %c8 = arith.constant 8 : index
    %c0_74 = arith.constant 0 : index
    %c0_75 = arith.constant 0 : index
    %98 = vector.load %arg6[%c8, %c0_74, %c0_75] : memref<9x128x128xf32, #tpu.memory_space<vmem>>, vector<1x128x128xf32>
    %99 = vector.shape_cast %98 : vector<1x128x128xf32> to vector<128x128xf32>
    %cst_76 = arith.constant dense<0.000000e+00> : vector<73x128xf32>
    %100 = tpu.matmul %97, %99, %cst_76 {dimension_numbers = #tpu.dot_dimension_numbers<[1], [0], [0], [1], [0, 0, 1, 1], [], []>} : vector<73x128xf32>, vector<128x128xf32>, vector<73x128xf32> -> vector<73x128xf32>
    %101 = arith.addf %96, %100 : vector<73x128xf32>
    %c0_77 = arith.constant 0 : index
    %c0_78 = arith.constant 0 : index
    %102 = vector.load %arg7[%c0_77, %c0_78] : memref<1x128xf32, #tpu.memory_space<vmem>>, vector<1x128xf32>
    %103 = vector.broadcast %102 : vector<1x128xf32> to vector<73x128xf32>
    %104 = arith.addf %101, %103 : vector<73x128xf32>
    %cst_79 = arith.constant 0.000000e+00 : f32
    %105 = vector.broadcast %cst_79 : f32 to vector<73x128xf32>
    %106 = arith.maximumf %104, %105 : vector<73x128xf32>
    %107 = vector.extract_strided_slice %106 {offsets = [0, 0], sizes = [7, 128], strides = [1, 1]} : vector<73x128xf32> to vector<7x128xf32>
    %c0_80 = arith.constant 0 : index
    %c0_81 = arith.constant 0 : index
    %c0_82 = arith.constant 0 : index
    %108 = vector.load %arg8[%c0_80, %c0_81, %c0_82] : memref<1x49x128xf32, #tpu.memory_space<vmem>>, vector<1x7x128xf32>
    %109 = vector.shape_cast %108 : vector<1x7x128xf32> to vector<7x128xf32>
    %110 = vector.shape_cast %107 : vector<7x128xf32> to vector<1x7x128xf32>
    tpu.vector_store %arg8[%c0_80, %c0_81, %c0_82], %110 {strides = array<i32>} : memref<1x49x128xf32, #tpu.memory_space<vmem>>, vector<1x7x128xf32>,
    %111 = vector.extract_strided_slice %106 {offsets = [11, 0], sizes = [7, 128], strides = [1, 1]} : vector<73x128xf32> to vector<7x128xf32>
    %c0_83 = arith.constant 0 : index
    %c7_84 = arith.constant 7 : index
    %c0_85 = arith.constant 0 : index
    %112 = vector.load %arg8[%c0_83, %c7_84, %c0_85] : memref<1x49x128xf32, #tpu.memory_space<vmem>>, vector<1x7x128xf32>
    %113 = vector.shape_cast %112 : vector<1x7x128xf32> to vector<7x128xf32>
    %114 = vector.shape_cast %111 : vector<7x128xf32> to vector<1x7x128xf32>
    tpu.vector_store %arg8[%c0_83, %c7_84, %c0_85], %114 {strides = array<i32>} : memref<1x49x128xf32, #tpu.memory_space<vmem>>, vector<1x7x128xf32>,
    %115 = vector.extract_strided_slice %106 {offsets = [22, 0], sizes = [7, 128], strides = [1, 1]} : vector<73x128xf32> to vector<7x128xf32>
    %c0_86 = arith.constant 0 : index
    %c14 = arith.constant 14 : index
    %c0_87 = arith.constant 0 : index
    %116 = vector.load %arg8[%c0_86, %c14, %c0_87] : memref<1x49x128xf32, #tpu.memory_space<vmem>>, vector<1x7x128xf32>
    %117 = vector.shape_cast %116 : vector<1x7x128xf32> to vector<7x128xf32>
    %118 = vector.shape_cast %115 : vector<7x128xf32> to vector<1x7x128xf32>
    tpu.vector_store %arg8[%c0_86, %c14, %c0_87], %118 {strides = array<i32>} : memref<1x49x128xf32, #tpu.memory_space<vmem>>, vector<1x7x128xf32>,
    %119 = vector.extract_strided_slice %106 {offsets = [33, 0], sizes = [7, 128], strides = [1, 1]} : vector<73x128xf32> to vector<7x128xf32>
    %c0_88 = arith.constant 0 : index
    %c21 = arith.constant 21 : index
    %c0_89 = arith.constant 0 : index
    %120 = vector.load %arg8[%c0_88, %c21, %c0_89] : memref<1x49x128xf32, #tpu.memory_space<vmem>>, vector<1x7x128xf32>
    %121 = vector.shape_cast %120 : vector<1x7x128xf32> to vector<7x128xf32>
    %122 = vector.shape_cast %119 : vector<7x128xf32> to vector<1x7x128xf32>
    tpu.vector_store %arg8[%c0_88, %c21, %c0_89], %122 {strides = array<i32>} : memref<1x49x128xf32, #tpu.memory_space<vmem>>, vector<1x7x128xf32>,
    %123 = vector.extract_strided_slice %106 {offsets = [44, 0], sizes = [7, 128], strides = [1, 1]} : vector<73x128xf32> to vector<7x128xf32>
    %c0_90 = arith.constant 0 : index
    %c28 = arith.constant 28 : index
    %c0_91 = arith.constant 0 : index
    %124 = vector.load %arg8[%c0_90, %c28, %c0_91] : memref<1x49x128xf32, #tpu.memory_space<vmem>>, vector<1x7x128xf32>
    %125 = vector.shape_cast %124 : vector<1x7x128xf32> to vector<7x128xf32>
    %126 = vector.shape_cast %123 : vector<7x128xf32> to vector<1x7x128xf32>
    tpu.vector_store %arg8[%c0_90, %c28, %c0_91], %126 {strides = array<i32>} : memref<1x49x128xf32, #tpu.memory_space<vmem>>, vector<1x7x128xf32>,
    %127 = vector.extract_strided_slice %106 {offsets = [55, 0], sizes = [7, 128], strides = [1, 1]} : vector<73x128xf32> to vector<7x128xf32>
    %c0_92 = arith.constant 0 : index
    %c35 = arith.constant 35 : index
    %c0_93 = arith.constant 0 : index
    %128 = vector.load %arg8[%c0_92, %c35, %c0_93] : memref<1x49x128xf32, #tpu.memory_space<vmem>>, vector<1x7x128xf32>
    %129 = vector.shape_cast %128 : vector<1x7x128xf32> to vector<7x128xf32>
    %130 = vector.shape_cast %127 : vector<7x128xf32> to vector<1x7x128xf32>
    tpu.vector_store %arg8[%c0_92, %c35, %c0_93], %130 {strides = array<i32>} : memref<1x49x128xf32, #tpu.memory_space<vmem>>, vector<1x7x128xf32>,
    %131 = vector.extract_strided_slice %106 {offsets = [66, 0], sizes = [7, 128], strides = [1, 1]} : vector<73x128xf32> to vector<7x128xf32>
    %c0_94 = arith.constant 0 : index
    %c42 = arith.constant 42 : index
    %c0_95 = arith.constant 0 : index
    %132 = vector.load %arg8[%c0_94, %c42, %c0_95] : memref<1x49x128xf32, #tpu.memory_space<vmem>>, vector<1x7x128xf32>
    %133 = vector.shape_cast %132 : vector<1x7x128xf32> to vector<7x128xf32>
    %134 = vector.shape_cast %131 : vector<7x128xf32> to vector<1x7x128xf32>
    tpu.vector_store %arg8[%c0_94, %c42, %c0_95], %134 {strides = array<i32>} : memref<1x49x128xf32, #tpu.memory_space<vmem>>, vector<1x7x128xf32>,
    return
  }
  func.func @transform_0(%arg0: i32) -> (i32, i32, i32) {
    %c0_i32 = arith.constant 0 : i32
    %c0_i32_0 = arith.constant 0 : i32
    %c0_i32_1 = arith.constant 0 : i32
    return %arg0, %c0_i32, %c0_i32_0 : i32, i32, i32
  }
  func.func @transform_1(%arg0: i32) -> (i32, i32, i32) {
    %c0_i32 = arith.constant 0 : i32
    %c0_i32_0 = arith.constant 0 : i32
    %c0_i32_1 = arith.constant 0 : i32
    %c0_i32_2 = arith.constant 0 : i32
    return %c0_i32, %c0_i32_0, %c0_i32_1 : i32, i32, i32
  }
  func.func @transform_2(%arg0: i32) -> (i32, i32) {
    %c0_i32 = arith.constant 0 : i32
    %c0_i32_0 = arith.constant 0 : i32
    %c0_i32_1 = arith.constant 0 : i32
    return %c0_i32, %c0_i32_0 : i32, i32
  }
  func.func @transform_3(%arg0: i32) -> (i32, i32, i32) {
    %c0_i32 = arith.constant 0 : i32
    %c0_i32_0 = arith.constant 0 : i32
    %c0_i32_1 = arith.constant 0 : i32
    %c0_i32_2 = arith.constant 0 : i32
    return %c0_i32, %c0_i32_0, %c0_i32_1 : i32, i32, i32
  }
  func.func @transform_4(%arg0: i32) -> (i32, i32) {
    %c0_i32 = arith.constant 0 : i32
    %c0_i32_0 = arith.constant 0 : i32
    %c0_i32_1 = arith.constant 0 : i32
    return %c0_i32, %c0_i32_0 : i32, i32
  }
  func.func @transform_5(%arg0: i32) -> (i32, i32, i32) {
    %c0_i32 = arith.constant 0 : i32
    %c0_i32_0 = arith.constant 0 : i32
    %c0_i32_1 = arith.constant 0 : i32
    %c0_i32_2 = arith.constant 0 : i32
    return %c0_i32, %c0_i32_0, %c0_i32_1 : i32, i32, i32
  }
  func.func @transform_6(%arg0: i32) -> (i32, i32) {
    %c0_i32 = arith.constant 0 : i32
    %c0_i32_0 = arith.constant 0 : i32
    %c0_i32_1 = arith.constant 0 : i32
    return %c0_i32, %c0_i32_0 : i32, i32
  }
  func.func @transform_7(%arg0: i32) -> (i32, i32, i32) {
    %c0_i32 = arith.constant 0 : i32
    %c0_i32_0 = arith.constant 0 : i32
    %c0_i32_1 = arith.constant 0 : i32
    return %arg0, %c0_i32, %c0_i32_0 : i32, i32, i32
  }
}

module attributes {stable_mosaic.version = 11 : i64} {
  func.func @_fc_kernel(%arg0: i32, %arg1: i32, %arg2: memref<2x1568xf32, #tpu.memory_space<vmem>>, %arg3: memref<1568x256xf32, #tpu.memory_space<vmem>>, %arg4: memref<1x256xf32, #tpu.memory_space<vmem>>, %arg5: memref<2x256xf32, #tpu.memory_space<vmem>>) attributes {dimension_semantics = [#tpu.dimension_semantics<parallel>, #tpu.dimension_semantics<parallel>], iteration_bounds = array<i64: 1, 2>, scalar_prefetch = 0 : i64, scratch_operands = 0 : i64, tpu.core_type = #tpu.core_type<tc>, window_params = [{transform_indices = @transform_0, window_bounds = array<i64: 2, 1568>}, {transform_indices = @transform_1, window_bounds = array<i64: 1568, 256>}, {transform_indices = @transform_2, window_bounds = array<i64: 1, 256>}, {transform_indices = @transform_3, window_bounds = array<i64: 2, 256>}]} {
    %c0 = arith.constant 0 : index
    %c0_0 = arith.constant 0 : index
    %0 = vector.load %arg2[%c0, %c0_0] : memref<2x1568xf32, #tpu.memory_space<vmem>>, vector<2x1568xf32>
    %c0_1 = arith.constant 0 : index
    %c0_2 = arith.constant 0 : index
    %1 = vector.load %arg3[%c0_1, %c0_2] : memref<1568x256xf32, #tpu.memory_space<vmem>>, vector<1568x256xf32>
    %cst = arith.constant dense<0.000000e+00> : vector<2x256xf32>
    %2 = tpu.matmul %0, %1, %cst {dimension_numbers = #tpu.dot_dimension_numbers<[1], [0], [0], [1], [0, 0, 1, 1], [], []>} : vector<2x1568xf32>, vector<1568x256xf32>, vector<2x256xf32> -> vector<2x256xf32>
    %c0_3 = arith.constant 0 : index
    %c0_4 = arith.constant 0 : index
    %3 = vector.load %arg4[%c0_3, %c0_4] : memref<1x256xf32, #tpu.memory_space<vmem>>, vector<1x256xf32>
    %4 = vector.broadcast %3 : vector<1x256xf32> to vector<2x256xf32>
    %5 = arith.addf %2, %4 : vector<2x256xf32>
    %cst_5 = arith.constant 0.000000e+00 : f32
    %6 = vector.broadcast %cst_5 : f32 to vector<2x256xf32>
    %7 = arith.maximumf %5, %6 : vector<2x256xf32>
    %c0_6 = arith.constant 0 : index
    %c0_7 = arith.constant 0 : index
    %8 = vector.load %arg5[%c0_6, %c0_7] : memref<2x256xf32, #tpu.memory_space<vmem>>, vector<2x256xf32>
    tpu.vector_store %arg5[%c0_6, %c0_7], %7 {strides = array<i32>} : memref<2x256xf32, #tpu.memory_space<vmem>>, vector<2x256xf32>,
    return
  }
  func.func @transform_0(%arg0: i32, %arg1: i32) -> (i32, i32) {
    %c0_i32 = arith.constant 0 : i32
    %c0_i32_0 = arith.constant 0 : i32
    return %arg0, %c0_i32 : i32, i32
  }
  func.func @transform_1(%arg0: i32, %arg1: i32) -> (i32, i32) {
    %c0_i32 = arith.constant 0 : i32
    %c0_i32_0 = arith.constant 0 : i32
    return %c0_i32, %arg1 : i32, i32
  }
  func.func @transform_2(%arg0: i32, %arg1: i32) -> (i32, i32) {
    %c0_i32 = arith.constant 0 : i32
    %c0_i32_0 = arith.constant 0 : i32
    return %c0_i32, %arg1 : i32, i32
  }
  func.func @transform_3(%arg0: i32, %arg1: i32) -> (i32, i32) {
    %c0_i32 = arith.constant 0 : i32
    return %arg0, %arg1 : i32, i32
  }
}

</mosaic_0001>

<llo_original>
// kernel: deepmind_forward.2
$region0: #{deepmind_forward.2}
  #allocation0 [shape = 'u32[]', space=smem, size = 0x4, offset = 0x4, fixed_abs, tag = 'smem constant byte address 0x4 - core index']
  #allocation1 [shape = 'u32[72,128]{1,0:T(1,128)}', space=vmem, size = 0x9000, scoped, tag = 'internal scratch']
  %s0 = inlined_call_operand.vmem [shape: f32[2,121,256], index: 0, kind: input, shape index: {}]
  %s1 = inlined_call_operand.vmem [shape: f32[4,256,128], index: 1, kind: input, shape index: {}]
  %s2 = inlined_call_operand.vmem [shape: f32[1,128], index: 2, kind: input, shape index: {}]
  %s3 = inlined_call_operand.vmem [shape: f32[4,128,128], index: 3, kind: input, shape index: {}]
  %s4 = inlined_call_operand.vmem [shape: f32[1,128], index: 4, kind: input, shape index: {}]
  %s5 = inlined_call_operand.vmem [shape: f32[9,128,128], index: 5, kind: input, shape index: {}]
  %s6 = inlined_call_operand.vmem [shape: f32[1,128], index: 6, kind: input, shape index: {}]
  %s7 = inlined_call_operand.vmem [shape: f32[2,49,128], index: 7, kind: output, shape index: {}]
  %s8 = sld [smem:[#allocation0]]
  $region61: #{deepmind_forward.2} parent=0
    _
  %s10 = ssub.s32 1, %s8
  %s11 = scalar_select 0, %s10, %s8
  loop: start=0, step=1, limit=4
  $region2: #{deepmind_forward.2} parent=0 // loop_pre_header
    _
  $region3: #{deepmind_forward.2} parent=0 // loop_header
    %s13 = sphi 0, %s17
    %p14 = scmp.ge.s32.totalorder %s13, 4
    %s23 = sphi 0, %s25
    %s26 = sphi 0, %s23
    %s27 = sphi 0, %s26
    %s43 = sphi 0, %s27
    %s47 = sphi 0, %s47
    %s49 = sphi 0, %s47
    %s50 = sphi 0, %s49
    %s64 = sphi 0, %s50
    %s68 = sphi 0, %s68
    %s70 = sphi 0, %s68
    %s71 = sphi 0, %s70
    %s85 = sphi 0, %s71
    %s89 = sphi 0, %s89
    %s91 = sphi 0, %s89
    %s92 = sphi 0, %s91
    %s106 = sphi 0, %s92
    %s110 = sphi 0, %s110
    %s112 = sphi 0, %s110
    %s113 = sphi 0, %s112
    %s127 = sphi 0, %s113
    %s131 = sphi 0, %s131
    %s133 = sphi 0, %s131
    %s134 = sphi 0, %s133
    %s148 = sphi 0, %s134
    %s152 = sphi 0, %s152
    %s154 = sphi 0, %s152
    %s155 = sphi 0, %s154
    %s169 = sphi 0, %s155
    %s175 = sphi 0, %s177
    %s178 = sphi 0, %s175
    %s179 = sphi 0, %s178
    %s195 = sphi 0, %s179
  $region4: #{deepmind_forward.2} parent=0 // loop_header_branch
    %16 = sbr.rel (%p14) target = $region8
  $region5: #{deepmind_forward.2} parent=0 // loop_body
    %s18 = ssub.s32 %s13, 1
    %s19 = ssub.s32 %s13, 2
    %s20 = sadd.s32 %s13, 1
    %s21 = ssub.s32 %s13, %s20
    %p22 = scmp.eq.s32.totalorder %s21, 0
    %s24 = sadd.s32 %s23, 1
    %s25 = scalar_select %p22, %s23, %s24
    %p28 = pneg %p22
    %p29 = scmp.eq.s32.totalorder %s13, 1
    %p30 = por %p28, %p29
    %p31 = scmp.ne.s32.totalorder %s23, %s26
    %p32 = scmp.eq.s32.totalorder %s13, 0
    %p33 = por %p31, %p32
    %p34 = scmp.ne.s32.totalorder %s23, %s26
    %p35 = scmp.eq.s32.totalorder %s18, 1
    %p36 = por %p34, %p35
    %p37 = scmp.ne.s32.totalorder %s26, %s27
    %p38 = scmp.eq.s32.totalorder %s18, 0
    %p39 = por %p37, %p38
    %p40 = scmp.ne.s32.totalorder %s26, %s27
    %p41 = scmp.eq.s32.totalorder %s19, 1
    %p42 = por %p40, %p41
    %p44 = scmp.ne.s32.totalorder %s27, %s43
    %p45 = scmp.eq.s32.totalorder %s19, 0
    %p46 = por %p44, %p45
    %s48 = sadd.s32 %s47, 1
    %p51 = scmp.eq.s32.totalorder %s13, 1
    %p52 = scmp.ne.s32.totalorder %s47, %s49
    %p53 = scmp.eq.s32.totalorder %s13, 0
    %p54 = por %p52, %p53
    %p55 = scmp.ne.s32.totalorder %s47, %s49
    %p56 = scmp.eq.s32.totalorder %s18, 1
    %p57 = por %p55, %p56
    %p58 = scmp.ne.s32.totalorder %s49, %s50
    %p59 = scmp.eq.s32.totalorder %s18, 0
    %p60 = por %p58, %p59
    %p61 = scmp.ne.s32.totalorder %s49, %s50
    %p62 = scmp.eq.s32.totalorder %s19, 1
    %p63 = por %p61, %p62
    %p65 = scmp.ne.s32.totalorder %s50, %s64
    %p66 = scmp.eq.s32.totalorder %s19, 0
    %p67 = por %p65, %p66
    %s69 = sadd.s32 %s68, 1
    %p72 = scmp.eq.s32.totalorder %s13, 1
    %p73 = scmp.ne.s32.totalorder %s68, %s70
    %p74 = scmp.eq.s32.totalorder %s13, 0
    %p75 = por %p73, %p74
    %p76 = scmp.ne.s32.totalorder %s68, %s70
    %p77 = scmp.eq.s32.totalorder %s18, 1
    %p78 = por %p76, %p77
    %p79 = scmp.ne.s32.totalorder %s70, %s71
    %p80 = scmp.eq.s32.totalorder %s18, 0
    %p81 = por %p79, %p80
    %p82 = scmp.ne.s32.totalorder %s70, %s71
    %p83 = scmp.eq.s32.totalorder %s19, 1
    %p84 = por %p82, %p83
    %p86 = scmp.ne.s32.totalorder %s71, %s85
    %p87 = scmp.eq.s32.totalorder %s19, 0
    %p88 = por %p86, %p87
    %s90 = sadd.s32 %s89, 1
    %p93 = scmp.eq.s32.totalorder %s13, 1
    %p94 = scmp.ne.s32.totalorder %s89, %s91
    %p95 = scmp.eq.s32.totalorder %s13, 0
    %p96 = por %p94, %p95
    %p97 = scmp.ne.s32.totalorder %s89, %s91
    %p98 = scmp.eq.s32.totalorder %s18, 1
    %p99 = por %p97, %p98
    %p100 = scmp.ne.s32.totalorder %s91, %s92
    %p101 = scmp.eq.s32.totalorder %s18, 0
    %p102 = por %p100, %p101
    %p103 = scmp.ne.s32.totalorder %s91, %s92
    %p104 = scmp.eq.s32.totalorder %s19, 1
    %p105 = por %p103, %p104
    %p107 = scmp.ne.s32.totalorder %s92, %s106
    %p108 = scmp.eq.s32.totalorder %s19, 0
    %p109 = por %p107, %p108
    %s111 = sadd.s32 %s110, 1
    %p114 = scmp.eq.s32.totalorder %s13, 1
    %p115 = scmp.ne.s32.totalorder %s110, %s112
    %p116 = scmp.eq.s32.totalorder %s13, 0
    %p117 = por %p115, %p116
    %p118 = scmp.ne.s32.totalorder %s110, %s112
    %p119 = scmp.eq.s32.totalorder %s18, 1
    %p120 = por %p118, %p119
    %p121 = scmp.ne.s32.totalorder %s112, %s113
    %p122 = scmp.eq.s32.totalorder %s18, 0
    %p123 = por %p121, %p122
    %p124 = scmp.ne.s32.totalorder %s112, %s113
    %p125 = scmp.eq.s32.totalorder %s19, 1
    %p126 = por %p124, %p125
    %p128 = scmp.ne.s32.totalorder %s113, %s127
    %p129 = scmp.eq.s32.totalorder %s19, 0
    %p130 = por %p128, %p129
    %s132 = sadd.s32 %s131, 1
    %p135 = scmp.eq.s32.totalorder %s13, 1
    %p136 = scmp.ne.s32.totalorder %s131, %s133
    %p137 = scmp.eq.s32.totalorder %s13, 0
    %p138 = por %p136, %p137
    %p139 = scmp.ne.s32.totalorder %s131, %s133
    %p140 = scmp.eq.s32.totalorder %s18, 1
    %p141 = por %p139, %p140
    %p142 = scmp.ne.s32.totalorder %s133, %s134
    %p143 = scmp.eq.s32.totalorder %s18, 0
    %p144 = por %p142, %p143
    %p145 = scmp.ne.s32.totalorder %s133, %s134
    %p146 = scmp.eq.s32.totalorder %s19, 1
    %p147 = por %p145, %p146
    %p149 = scmp.ne.s32.totalorder %s134, %s148
    %p150 = scmp.eq.s32.totalorder %s19, 0
    %p151 = por %p149, %p150
    %s153 = sadd.s32 %s152, 1
    %p156 = scmp.eq.s32.totalorder %s13, 1
    %p157 = scmp.ne.s32.totalorder %s152, %s154
    %p158 = scmp.eq.s32.totalorder %s13, 0
    %p159 = por %p157, %p158
    %p160 = scmp.ne.s32.totalorder %s152, %s154
    %p161 = scmp.eq.s32.totalorder %s18, 1
    %p162 = por %p160, %p161
    %p163 = scmp.ne.s32.totalorder %s154, %s155
    %p164 = scmp.eq.s32.totalorder %s18, 0
    %p165 = por %p163, %p164
    %p166 = scmp.ne.s32.totalorder %s154, %s155
    %p167 = scmp.eq.s32.totalorder %s19, 1
    %p168 = por %p166, %p167
    %p170 = scmp.ne.s32.totalorder %s155, %s169
    %p171 = scmp.eq.s32.totalorder %s19, 0
    %p172 = por %p170, %p171
    %s173 = ssub.s32 %s13, %s20
    %p174 = scmp.eq.s32.totalorder %s173, 0
    %s176 = sadd.s32 %s175, 1
    %s177 = scalar_select %p174, %s175, %s176
    %p180 = pneg %p174
    %p181 = scmp.eq.s32.totalorder %s13, 1
    %p182 = por %p180, %p181
    %p183 = scmp.ne.s32.totalorder %s175, %s178
    %p184 = scmp.eq.s32.totalorder %s13, 0
    %p185 = por %p183, %p184
    %p186 = scmp.ne.s32.totalorder %s175, %s178
    %p187 = scmp.eq.s32.totalorder %s18, 1
    %p188 = por %p186, %p187
    %p189 = scmp.ne.s32.totalorder %s178, %s179
    %p190 = scmp.eq.s32.totalorder %s18, 0
    %p191 = por %p189, %p190
    %p192 = scmp.ne.s32.totalorder %s178, %s179
    %p193 = scmp.eq.s32.totalorder %s19, 1
    %p194 = por %p192, %p193
    %p196 = scmp.ne.s32.totalorder %s179, %s195
    %p197 = scmp.eq.s32.totalorder %s19, 0
    %p198 = por %p196, %p197
    %p199 = scmp.le.s32.totalorder 1, %s13
    %p200 = scmp.lt.s32.totalorder %s13, 3
    %p201 = pnand %p199, %p200
    %p202 = pneg %p201
    // Predicated region
    $region9: #{deepmind_forward.2} parent=5 // pred_check
      _
    $region10: #{deepmind_forward.2} parent=5 // pred_check_branch
      %204 = sbr.rel (%p201) target = $region12
    $region11: #{deepmind_forward.2} parent=5 // pred_region
      %s205 = ssub.s32 %s13, 1
      // Predicated region
      $region13: #{deepmind_forward.2} parent=11 // pred_check
        %p206 = pneg %p60
      $region14: #{deepmind_forward.2} parent=11 // pred_check_branch
        %208 = sbr.rel (%p206) target = $region16
      $region15: #{deepmind_forward.2} parent=11 // pred_region
        _
      $region16: #{deepmind_forward.2} parent=11 // pred_fallthru
        _
      // Predicated region
      $region17: #{deepmind_forward.2} parent=11 // pred_check
        %p209 = pneg %p81
      $region18: #{deepmind_forward.2} parent=11 // pred_check_branch
        %211 = sbr.rel (%p209) target = $region20
      $region19: #{deepmind_forward.2} parent=11 // pred_region
        _
      $region20: #{deepmind_forward.2} parent=11 // pred_fallthru
        _
      // Predicated region
      $region21: #{deepmind_forward.2} parent=11 // pred_check
        %p212 = pneg %p102
      $region22: #{deepmind_forward.2} parent=11 // pred_check_branch
        %214 = sbr.rel (%p212) target = $region24
      $region23: #{deepmind_forward.2} parent=11 // pred_region
        _
      $region24: #{deepmind_forward.2} parent=11 // pred_fallthru
        _
      // Predicated region
      $region25: #{deepmind_forward.2} parent=11 // pred_check
        %p215 = pneg %p123
      $region26: #{deepmind_forward.2} parent=11 // pred_check_branch
        %217 = sbr.rel (%p215) target = $region28
      $region27: #{deepmind_forward.2} parent=11 // pred_region
        _
      $region28: #{deepmind_forward.2} parent=11 // pred_fallthru
        _
      // Predicated region
      $region29: #{deepmind_forward.2} parent=11 // pred_check
        %p218 = pneg %p144
      $region30: #{deepmind_forward.2} parent=11 // pred_check_branch
        %220 = sbr.rel (%p218) target = $region32
      $region31: #{deepmind_forward.2} parent=11 // pred_region
        _
      $region32: #{deepmind_forward.2} parent=11 // pred_fallthru
        _
      // Predicated region
      $region33: #{deepmind_forward.2} parent=11 // pred_check
        %p221 = pneg %p165
      $region34: #{deepmind_forward.2} parent=11 // pred_check_branch
        %223 = sbr.rel (%p221) target = $region36
      $region35: #{deepmind_forward.2} parent=11 // pred_region
        _
      $region36: #{deepmind_forward.2} parent=11 // pred_fallthru
        _
    $region12: #{deepmind_forward.2} parent=5 // pred_fallthru
      _
    %p224 = scmp.lt.s32.totalorder %s13, 2
    // Predicated region
    $region37: #{deepmind_forward.2} parent=5 // pred_check
      %p225 = pneg %p224
    $region38: #{deepmind_forward.2} parent=5 // pred_check_branch
      %227 = sbr.rel (%p225) target = $region40
    $region39: #{deepmind_forward.2} parent=5 // pred_region
      // Predicated region
      $region41: #{deepmind_forward.2} parent=39 // pred_check
        %p228 = pneg %p33
      $region42: #{deepmind_forward.2} parent=39 // pred_check_branch
        %230 = sbr.rel (%p228) target = $region44
      $region43: #{deepmind_forward.2} parent=39 // pred_region
        %p231 = scmp.lt.s32.totalorder %s13, 1
        %s232 = scalar_select %p231, %s13, 1
        %s233 = smul.addr %s232, 32
        %s234 = smul.addr %s233, 8
        %s235 = scalar_lea.vmem %s0, %s234
      $region44: #{deepmind_forward.2} parent=39 // pred_fallthru
        _
    $region40: #{deepmind_forward.2} parent=5 // pred_fallthru
      _
    %p236 = scmp.le.s32.totalorder 1, %s13
    %p237 = scmp.lt.s32.totalorder %s13, 3
    %p238 = pnand %p236, %p237
    %p239 = pneg %p238
    // Predicated region
    $region45: #{deepmind_forward.2} parent=5 // pred_check
      _
    $region46: #{deepmind_forward.2} parent=5 // pred_check_branch
      %241 = sbr.rel (%p238) target = $region48
    $region47: #{deepmind_forward.2} parent=5 // pred_region
      %s242 = ssub.s32 %s13, 1
      %p243 = scmp.lt.s32.totalorder %s18, 1
      %s244 = scalar_select %p243, %s18, 1
      %s245 = smul.addr %s244, 32
      %s246 = smul.addr %s245, 8
      %s247 = scalar_lea.vmem %s0, %s246
      %p248 = pneg %p39
      %p249 = pneg %p36
      %p250 = pneg %p60
      %p251 = pneg %p57
      %p252 = pneg %p81
      %p253 = pneg %p78
      %p254 = pneg %p102
      %p255 = pneg %p99
      %p256 = pneg %p123
      %p257 = pneg %p120
      %p258 = pneg %p144
      %p259 = pneg %p141
      %p260 = pneg %p165
      %p261 = pneg %p162
      %p262 = pneg %p191
      %p263 = pneg %p188
      %p264 = scmp.lt.s32.totalorder %s18, 1
      %s265 = scalar_select %p264, %s18, 1
      %s266 = smul.addr %s265, 7
      %s267 = smul.addr %s266, 8
      %s268 = scalar_lea.vmem %s7, %s267
      %p269 = scmp.lt.s32.totalorder %s18, 1
      %s270 = scalar_select %p269, %s18, 1
      %s271 = smul.addr %s270, 32
      %s272 = smul.addr %s271, 8
      %s273 = scalar_lea.vmem %s0, %s272
      %p274 = scmp.lt.s32.totalorder %s18, 1
      %s275 = scalar_select %p274, %s18, 1
      %s276 = smul.addr %s275, 7
      %s277 = smul.addr %s276, 8
      %s278 = scalar_lea.vmem %s7, %s277
      %v279 = vld [vmem:[%s273] sm:$0xff]
      %v280 = vld [vmem:[%s273 + $0x8] sm:$0xff]
      %v281 = vld [vmem:[%s273 + $0x10] sm:$0xff]
      %v282 = vld [vmem:[%s273 + $0x18] sm:$0xff]
      %v283 = vld [vmem:[%s273 + $0x20] sm:$0xff]
      %v284 = vld [vmem:[%s273 + $0x28] sm:$0xff]
      %v285 = vld [vmem:[%s273 + $0x30] sm:$0xff]
      %v286 = vld [vmem:[%s273 + $0x38] sm:$0xff]
      %v287 = vld [vmem:[%s273 + $0x40] sm:$0xff]
      %v288 = vld [vmem:[%s273 + $0x48] sm:$0xff]
      %v289 = vld [vmem:[%s273 + $0x50] sm:$0xff]
      %v290 = vld [vmem:[%s273 + $0x58] sm:$0xff]
      %v291 = vld [vmem:[%s273 + $0x60] sm:$0xff]
      %v292 = vld [vmem:[%s273 + $0x68] sm:$0xff]
      %v293 = vld [vmem:[%s273 + $0x70] sm:$0xff]
      %v294 = vld [vmem:[%s273 + $0x78] sm:$0xff]
      %v295 = vld [vmem:[%s273 + $0x80] sm:$0xff]
      %v296 = vld [vmem:[%s273 + $0x88] sm:$0xff]
      %v297 = vld [vmem:[%s273 + $0x90] sm:$0xff]
      %v298 = vld [vmem:[%s273 + $0x98] sm:$0xff]
      %v299 = vld [vmem:[%s273 + $0xa0] sm:$0xff]
      %v300 = vld [vmem:[%s273 + $0xa8] sm:$0xff]
      %v301 = vld [vmem:[%s273 + $0xb0] sm:$0xff]
      %v302 = vld [vmem:[%s273 + $0xb8] sm:$0xff]
      %v303 = vld [vmem:[%s273 + $0xc0] sm:$0xff]
      %v304 = vld [vmem:[%s273 + $0xc8] sm:$0xff]
      %v305 = vld [vmem:[%s273 + $0xd0] sm:$0x1f]
      %v306 = vld [vmem:[%s273 + $0xd8] sm:$0x1f]
      %v307 = vld [vmem:[%s1] sm:$0xff]
      %v308 = vld [vmem:[%s1 + $0x8] sm:$0xff]
      %v309 = vld [vmem:[%s1 + $0x10] sm:$0xff]
      %v310 = vld [vmem:[%s1 + $0x18] sm:$0xff]
      %v311 = vld [vmem:[%s1 + $0x20] sm:$0xff]
      %v312 = vld [vmem:[%s1 + $0x28] sm:$0xff]
      %v313 = vld [vmem:[%s1 + $0x30] sm:$0xff]
      %v314 = vld [vmem:[%s1 + $0x38] sm:$0xff]
      %v315 = vld [vmem:[%s1 + $0x40] sm:$0xff]
      %v316 = vld [vmem:[%s1 + $0x48] sm:$0xff]
      %v317 = vld [vmem:[%s1 + $0x50] sm:$0xff]
      %v318 = vld [vmem:[%s1 + $0x58] sm:$0xff]
      %v319 = vld [vmem:[%s1 + $0x60] sm:$0xff]
      %v320 = vld [vmem:[%s1 + $0x68] sm:$0xff]
      %v321 = vld [vmem:[%s1 + $0x70] sm:$0xff]
      %v322 = vld [vmem:[%s1 + $0x78] sm:$0xff]
      %v323 = vld [vmem:[%s1 + $0x80] sm:$0xff]
      %v324 = vld [vmem:[%s1 + $0x88] sm:$0xff]
      %v325 = vld [vmem:[%s1 + $0x90] sm:$0xff]
      %v326 = vld [vmem:[%s1 + $0x98] sm:$0xff]
      %v327 = vld [vmem:[%s1 + $0xa0] sm:$0xff]
      %v328 = vld [vmem:[%s1 + $0xa8] sm:$0xff]
      %v329 = vld [vmem:[%s1 + $0xb0] sm:$0xff]
      %v330 = vld [vmem:[%s1 + $0xb8] sm:$0xff]
      %v331 = vld [vmem:[%s1 + $0xc0] sm:$0xff]
      %v332 = vld [vmem:[%s1 + $0xc8] sm:$0xff]
      %v333 = vld [vmem:[%s1 + $0xd0] sm:$0xff]
      %v334 = vld [vmem:[%s1 + $0xd8] sm:$0xff]
      %v335 = vld [vmem:[%s1 + $0xe0] sm:$0xff]
      %v336 = vld [vmem:[%s1 + $0xe8] sm:$0xff]
      %v337 = vld [vmem:[%s1 + $0xf0] sm:$0xff]
      %v338 = vld [vmem:[%s1 + $0xf8] sm:$0xff]
      %v339 = vld [vmem:[%s273] sm:$0xfe]
      %v340 = vld [vmem:[%s273 + $0x8] sm:$0xfe]
      %v341 = vld [vmem:[%s273 + $0xd0] sm:$0x3f]
      %v342 = vld [vmem:[%s273 + $0xd8] sm:$0x3f]
      %s343 = scalar_lea.vmem %s1, 256
      %v344 = vld [vmem:[%s343] sm:$0xff]
      %v345 = vld [vmem:[%s343 + $0x8] sm:$0xff]
      %v346 = vld [vmem:[%s343 + $0x10] sm:$0xff]
      %v347 = vld [vmem:[%s343 + $0x18] sm:$0xff]
      %v348 = vld [vmem:[%s343 + $0x20] sm:$0xff]
      %v349 = vld [vmem:[%s343 + $0x28] sm:$0xff]
      %v350 = vld [vmem:[%s343 + $0x30] sm:$0xff]
      %v351 = vld [vmem:[%s343 + $0x38] sm:$0xff]
      %v352 = vld [vmem:[%s343 + $0x40] sm:$0xff]
      %v353 = vld [vmem:[%s343 + $0x48] sm:$0xff]
      %v354 = vld [vmem:[%s343 + $0x50] sm:$0xff]
      %v355 = vld [vmem:[%s343 + $0x58] sm:$0xff]
      %v356 = vld [vmem:[%s343 + $0x60] sm:$0xff]
      %v357 = vld [vmem:[%s343 + $0x68] sm:$0xff]
      %v358 = vld [vmem:[%s343 + $0x70] sm:$0xff]
      %v359 = vld [vmem:[%s343 + $0x78] sm:$0xff]
      %v360 = vld [vmem:[%s343 + $0x80] sm:$0xff]
      %v361 = vld [vmem:[%s343 + $0x88] sm:$0xff]
      %v362 = vld [vmem:[%s343 + $0x90] sm:$0xff]
      %v363 = vld [vmem:[%s343 + $0x98] sm:$0xff]
      %v364 = vld [vmem:[%s343 + $0xa0] sm:$0xff]
      %v365 = vld [vmem:[%s343 + $0xa8] sm:$0xff]
      %v366 = vld [vmem:[%s343 + $0xb0] sm:$0xff]
      %v367 = vld [vmem:[%s343 + $0xb8] sm:$0xff]
      %v368 = vld [vmem:[%s343 + $0xc0] sm:$0xff]
      %v369 = vld [vmem:[%s343 + $0xc8] sm:$0xff]
      %v370 = vld [vmem:[%s343 + $0xd0] sm:$0xff]
      %v371 = vld [vmem:[%s343 + $0xd8] sm:$0xff]
      %v372 = vld [vmem:[%s343 + $0xe0] sm:$0xff]
      %v373 = vld [vmem:[%s343 + $0xe8] sm:$0xff]
      %v374 = vld [vmem:[%s343 + $0xf0] sm:$0xff]
      %v375 = vld [vmem:[%s343 + $0xf8] sm:$0xff]
      %vm404 = vcmask 1046528
      %v405 = vrot.slane %v339, 1
      %v406 = vrot.slane %v281, 1
      %v407 = vsel %vm404, %v405, %v406
      %v408 = vrot.slane %v340, 1
      %v409 = vrot.slane %v282, 1
      %v410 = vsel %vm404, %v408, %v409
      %v411 = vrot.slane %v283, 1
      %v412 = vsel %vm404, %v406, %v411
      %v413 = vrot.slane %v284, 1
      %v414 = vsel %vm404, %v409, %v413
      %v415 = vrot.slane %v285, 1
      %v416 = vsel %vm404, %v411, %v415
      %v417 = vrot.slane %v286, 1
      %v418 = vsel %vm404, %v413, %v417
      %v419 = vrot.slane %v287, 1
      %v420 = vsel %vm404, %v415, %v419
      %v421 = vrot.slane %v288, 1
      %v422 = vsel %vm404, %v417, %v421
      %v423 = vrot.slane %v289, 1
      %v424 = vsel %vm404, %v419, %v423
      %v425 = vrot.slane %v290, 1
      %v426 = vsel %vm404, %v421, %v425
      %v427 = vrot.slane %v291, 1
      %v428 = vsel %vm404, %v423, %v427
      %v429 = vrot.slane %v292, 1
      %v430 = vsel %vm404, %v425, %v429
      %v431 = vrot.slane %v293, 1
      %v432 = vsel %vm404, %v427, %v431
      %v433 = vrot.slane %v294, 1
      %v434 = vsel %vm404, %v429, %v433
      %v435 = vrot.slane %v295, 1
      %v436 = vsel %vm404, %v431, %v435
      %v437 = vrot.slane %v296, 1
      %v438 = vsel %vm404, %v433, %v437
      %v439 = vrot.slane %v297, 1
      %v440 = vsel %vm404, %v435, %v439
      %v441 = vrot.slane %v298, 1
      %v442 = vsel %vm404, %v437, %v441
      %v443 = vrot.slane %v299, 1
      %v444 = vsel %vm404, %v439, %v443
      %v445 = vrot.slane %v300, 1
      %v446 = vsel %vm404, %v441, %v445
      %v447 = vrot.slane %v301, 1
      %v448 = vsel %vm404, %v443, %v447
      %v449 = vrot.slane %v302, 1
      %v450 = vsel %vm404, %v445, %v449
      %v451 = vrot.slane %v303, 1
      %v452 = vsel %vm404, %v447, %v451
      %v453 = vrot.slane %v304, 1
      %v454 = vsel %vm404, %v449, %v453
      %v455 = vrot.slane %v341, 1
      %v456 = vsel %vm404, %v451, %v455
      %v457 = vrot.slane %v342, 1
      %v458 = vsel %vm404, %v453, %v457
      %487 = vmatpush.msra.mxu0 %v359
      %488 = vmatpush.msra.mxu0 %v358
      %489 = vmatpush.msra.mxu0 %v357
      %490 = vmatpush.msra.mxu0 %v356
      %491 = vmatpush.msra.mxu0 %v355
      %492 = vmatpush.msra.mxu0 %v354
      %493 = vmatpush.msra.mxu0 %v353
      %494 = vmatpush.msra.mxu0 %v352
      %495 = vmatpush.msra.mxu0 %v351
      %496 = vmatpush.msra.mxu0 %v350
      %497 = vmatpush.msra.mxu0 %v349
      %498 = vmatpush.msra.mxu0 %v348
      %499 = vmatpush.msra.mxu0 %v347
      %500 = vmatpush.msra.mxu0 %v346
      %501 = vmatpush.msra.mxu0 %v345
      %502 = vmatpush.msra.mxu0 %v344
      %503 = vmatmul.f32.gmra.mxu0 %v407
      %v504 = vpop.f32.mrf.mxu0
      %v505 = vadd.f32 0.0, %v504
      %506 = vmatmul.f32.gmra.mxu0 %v412
      %v507 = vpop.f32.mrf.mxu0
      %v508 = vadd.f32 0.0, %v507
      %509 = vmatmul.f32.gmra.mxu0 %v416
      %v510 = vpop.f32.mrf.mxu0
      %v511 = vadd.f32 0.0, %v510
      %512 = vmatmul.f32.gmra.mxu0 %v420
      %v513 = vpop.f32.mrf.mxu0
      %v514 = vadd.f32 0.0, %v513
      %515 = vmatmul.f32.gmra.mxu0 %v424
      %v516 = vpop.f32.mrf.mxu0
      %v517 = vadd.f32 0.0, %v516
      %518 = vmatmul.f32.gmra.mxu0 %v428
      %v519 = vpop.f32.mrf.mxu0
      %v520 = vadd.f32 0.0, %v519
      %521 = vmatmul.f32.gmra.mxu0 %v432
      %v522 = vpop.f32.mrf.mxu0
      %v523 = vadd.f32 0.0, %v522
      %524 = vmatmul.f32.gmra.mxu0 %v436
      %v525 = vpop.f32.mrf.mxu0
      %v526 = vadd.f32 0.0, %v525
      %527 = vmatmul.f32.gmra.mxu0 %v440
      %v528 = vpop.f32.mrf.mxu0
      %v529 = vadd.f32 0.0, %v528
      %530 = vmatmul.f32.gmra.mxu0 %v444
      %v531 = vpop.f32.mrf.mxu0
      %v532 = vadd.f32 0.0, %v531
      %533 = vmatmul.f32.gmra.mxu0 %v448
      %v534 = vpop.f32.mrf.mxu0
      %v535 = vadd.f32 0.0, %v534
      %536 = vmatmul.f32.gmra.mxu0 %v452
      %v537 = vpop.f32.mrf.mxu0
      %v538 = vadd.f32 0.0, %v537
      %539 = vmatmul.f32.gmra.mxu0 %v456
      %v540 = vpop.f32.mrf.mxu0
      %v541 = vadd.f32 0.0, %v540
      %542 = vmatmul.f32.gmra.mxu0 %v455
      %v543 = vpop.f32.mrf.mxu0
      %v544 = vadd.f32 0.0, %v543
      %545 = vdwg.mxu0
      %546 = vmatpush.msra.mxu0 %v375
      %547 = vmatpush.msra.mxu0 %v374
      %548 = vmatpush.msra.mxu0 %v373
      %549 = vmatpush.msra.mxu0 %v372
      %550 = vmatpush.msra.mxu0 %v371
      %551 = vmatpush.msra.mxu0 %v370
      %552 = vmatpush.msra.mxu0 %v369
      %553 = vmatpush.msra.mxu0 %v368
      %554 = vmatpush.msra.mxu0 %v367
      %555 = vmatpush.msra.mxu0 %v366
      %556 = vmatpush.msra.mxu0 %v365
      %557 = vmatpush.msra.mxu0 %v364
      %558 = vmatpush.msra.mxu0 %v363
      %559 = vmatpush.msra.mxu0 %v362
      %560 = vmatpush.msra.mxu0 %v361
      %561 = vmatpush.msra.mxu0 %v360
      %562 = vmatmul.f32.gmra.mxu0 %v410
      %v563 = vpop.f32.mrf.mxu0
      %v564 = vadd.f32 %v505, %v563
      %565 = vmatmul.f32.gmra.mxu0 %v414
      %v566 = vpop.f32.mrf.mxu0
      %v567 = vadd.f32 %v508, %v566
      %568 = vmatmul.f32.gmra.mxu0 %v418
      %v569 = vpop.f32.mrf.mxu0
      %v570 = vadd.f32 %v511, %v569
      %571 = vmatmul.f32.gmra.mxu0 %v422
      %v572 = vpop.f32.mrf.mxu0
      %v573 = vadd.f32 %v514, %v572
      %574 = vmatmul.f32.gmra.mxu0 %v426
      %v575 = vpop.f32.mrf.mxu0
      %v576 = vadd.f32 %v517, %v575
      %577 = vmatmul.f32.gmra.mxu0 %v430
      %v578 = vpop.f32.mrf.mxu0
      %v579 = vadd.f32 %v520, %v578
      %580 = vmatmul.f32.gmra.mxu0 %v434
      %v581 = vpop.f32.mrf.mxu0
      %v582 = vadd.f32 %v523, %v581
      %583 = vmatmul.f32.gmra.mxu0 %v438
      %v584 = vpop.f32.mrf.mxu0
      %v585 = vadd.f32 %v526, %v584
      %586 = vmatmul.f32.gmra.mxu0 %v442
      %v587 = vpop.f32.mrf.mxu0
      %v588 = vadd.f32 %v529, %v587
      %589 = vmatmul.f32.gmra.mxu0 %v446
      %v590 = vpop.f32.mrf.mxu0
      %v591 = vadd.f32 %v532, %v590
      %592 = vmatmul.f32.gmra.mxu0 %v450
      %v593 = vpop.f32.mrf.mxu0
      %v594 = vadd.f32 %v535, %v593
      %595 = vmatmul.f32.gmra.mxu0 %v454
      %v596 = vpop.f32.mrf.mxu0
      %v597 = vadd.f32 %v538, %v596
      %598 = vmatmul.f32.gmra.mxu0 %v458
      %v599 = vpop.f32.mrf.mxu0
      %v600 = vadd.f32 %v541, %v599
      %601 = vmatmul.f32.gmra.mxu0 %v457
      %v602 = vpop.f32.mrf.mxu0
      %v603 = vadd.f32 %v544, %v602
      %604 = vdwg.mxu0
      %605 = vmatpush.msra.mxu0 %v322
      %606 = vmatpush.msra.mxu0 %v321
      %607 = vmatpush.msra.mxu0 %v320
      %608 = vmatpush.msra.mxu0 %v319
      %609 = vmatpush.msra.mxu0 %v318
      %610 = vmatpush.msra.mxu0 %v317
      %611 = vmatpush.msra.mxu0 %v316
      %612 = vmatpush.msra.mxu0 %v315
      %613 = vmatpush.msra.mxu0 %v314
      %614 = vmatpush.msra.mxu0 %v313
      %615 = vmatpush.msra.mxu0 %v312
      %616 = vmatpush.msra.mxu0 %v311
      %617 = vmatpush.msra.mxu0 %v310
      %618 = vmatpush.msra.mxu0 %v309
      %619 = vmatpush.msra.mxu0 %v308
      %620 = vmatpush.msra.mxu0 %v307
      %621 = vmatmul.f32.gmra.mxu0 %v279
      %v622 = vpop.f32.mrf.mxu0
      %v623 = vadd.f32 %v564, %v622
      %624 = vmatmul.f32.gmra.mxu0 %v281
      %v625 = vpop.f32.mrf.mxu0
      %v626 = vadd.f32 %v567, %v625
      %627 = vmatmul.f32.gmra.mxu0 %v283
      %v628 = vpop.f32.mrf.mxu0
      %v629 = vadd.f32 %v570, %v628
      %630 = vmatmul.f32.gmra.mxu0 %v285
      %v631 = vpop.f32.mrf.mxu0
      %v632 = vadd.f32 %v573, %v631
      %633 = vmatmul.f32.gmra.mxu0 %v287
      %v634 = vpop.f32.mrf.mxu0
      %v635 = vadd.f32 %v576, %v634
      %636 = vmatmul.f32.gmra.mxu0 %v289
      %v637 = vpop.f32.mrf.mxu0
      %v638 = vadd.f32 %v579, %v637
      %639 = vmatmul.f32.gmra.mxu0 %v291
      %v640 = vpop.f32.mrf.mxu0
      %v641 = vadd.f32 %v582, %v640
      %642 = vmatmul.f32.gmra.mxu0 %v293
      %v643 = vpop.f32.mrf.mxu0
      %v644 = vadd.f32 %v585, %v643
      %645 = vmatmul.f32.gmra.mxu0 %v295
      %v646 = vpop.f32.mrf.mxu0
      %v647 = vadd.f32 %v588, %v646
      %648 = vmatmul.f32.gmra.mxu0 %v297
      %v649 = vpop.f32.mrf.mxu0
      %v650 = vadd.f32 %v591, %v649
      %651 = vmatmul.f32.gmra.mxu0 %v299
      %v652 = vpop.f32.mrf.mxu0
      %v653 = vadd.f32 %v594, %v652
      %654 = vmatmul.f32.gmra.mxu0 %v301
      %v655 = vpop.f32.mrf.mxu0
      %v656 = vadd.f32 %v597, %v655
      %657 = vmatmul.f32.gmra.mxu0 %v303
      %v658 = vpop.f32.mrf.mxu0
      %v659 = vadd.f32 %v600, %v658
      %660 = vmatmul.f32.gmra.mxu0 %v305
      %v661 = vpop.f32.mrf.mxu0
      %v662 = vadd.f32 %v603, %v661
      %663 = vdwg.mxu0
      %664 = vmatpush.msra.mxu0 %v338
      %665 = vmatpush.msra.mxu0 %v337
      %666 = vmatpush.msra.mxu0 %v336
      %667 = vmatpush.msra.mxu0 %v335
      %668 = vmatpush.msra.mxu0 %v334
      %669 = vmatpush.msra.mxu0 %v333
      %670 = vmatpush.msra.mxu0 %v332
      %671 = vmatpush.msra.mxu0 %v331
      %672 = vmatpush.msra.mxu0 %v330
      %673 = vmatpush.msra.mxu0 %v329
      %674 = vmatpush.msra.mxu0 %v328
      %675 = vmatpush.msra.mxu0 %v327
      %676 = vmatpush.msra.mxu0 %v326
      %677 = vmatpush.msra.mxu0 %v325
      %678 = vmatpush.msra.mxu0 %v324
      %679 = vmatpush.msra.mxu0 %v323
      %680 = vmatmul.f32.gmra.mxu0 %v280
      %v681 = vpop.f32.mrf.mxu0
      %v682 = vadd.f32 %v623, %v681
      %683 = vmatmul.f32.gmra.mxu0 %v282
      %v684 = vpop.f32.mrf.mxu0
      %v685 = vadd.f32 %v626, %v684
      %686 = vmatmul.f32.gmra.mxu0 %v284
      %v687 = vpop.f32.mrf.mxu0
      %v688 = vadd.f32 %v629, %v687
      %689 = vmatmul.f32.gmra.mxu0 %v286
      %v690 = vpop.f32.mrf.mxu0
      %v691 = vadd.f32 %v632, %v690
      %692 = vmatmul.f32.gmra.mxu0 %v288
      %v693 = vpop.f32.mrf.mxu0
      %v694 = vadd.f32 %v635, %v693
      %695 = vmatmul.f32.gmra.mxu0 %v290
      %v696 = vpop.f32.mrf.mxu0
      %v697 = vadd.f32 %v638, %v696
      %698 = vmatmul.f32.gmra.mxu0 %v292
      %v699 = vpop.f32.mrf.mxu0
      %v700 = vadd.f32 %v641, %v699
      %701 = vmatmul.f32.gmra.mxu0 %v294
      %v702 = vpop.f32.mrf.mxu0
      %v703 = vadd.f32 %v644, %v702
      %704 = vmatmul.f32.gmra.mxu0 %v296
      %v705 = vpop.f32.mrf.mxu0
      %v706 = vadd.f32 %v647, %v705
      %707 = vmatmul.f32.gmra.mxu0 %v298
      %v708 = vpop.f32.mrf.mxu0
      %v709 = vadd.f32 %v650, %v708
      %710 = vmatmul.f32.gmra.mxu0 %v300
      %v711 = vpop.f32.mrf.mxu0
      %v712 = vadd.f32 %v653, %v711
      %713 = vmatmul.f32.gmra.mxu0 %v302
      %v714 = vpop.f32.mrf.mxu0
      %v715 = vadd.f32 %v656, %v714
      %716 = vmatmul.f32.gmra.mxu0 %v304
      %v717 = vpop.f32.mrf.mxu0
      %v718 = vadd.f32 %v659, %v717
      %719 = vmatmul.f32.gmra.mxu0 %v306
      %v720 = vpop.f32.mrf.mxu0
      %v721 = vadd.f32 %v662, %v720
      %722 = vdwg.mxu0
      %v723 = vld [vmem:[%s273 + $0x10] sm:$0xf8]
      %v724 = vld [vmem:[%s273 + $0x18] sm:$0xf8]
      %v725 = vld [vmem:[%s273 + $0x20] sm:$0xff]
      %v726 = vld [vmem:[%s273 + $0x28] sm:$0xff]
      %v727 = vld [vmem:[%s273 + $0x30] sm:$0xff]
      %v728 = vld [vmem:[%s273 + $0x38] sm:$0xff]
      %v729 = vld [vmem:[%s273 + $0x40] sm:$0xff]
      %v730 = vld [vmem:[%s273 + $0x48] sm:$0xff]
      %v731 = vld [vmem:[%s273 + $0x50] sm:$0xff]
      %v732 = vld [vmem:[%s273 + $0x58] sm:$0xff]
      %v733 = vld [vmem:[%s273 + $0x60] sm:$0xff]
      %v734 = vld [vmem:[%s273 + $0x68] sm:$0xff]
      %v735 = vld [vmem:[%s273 + $0x70] sm:$0xff]
      %v736 = vld [vmem:[%s273 + $0x78] sm:$0xff]
      %v737 = vld [vmem:[%s273 + $0x80] sm:$0xff]
      %v738 = vld [vmem:[%s273 + $0x88] sm:$0xff]
      %v739 = vld [vmem:[%s273 + $0x90] sm:$0xff]
      %v740 = vld [vmem:[%s273 + $0x98] sm:$0xff]
      %v741 = vld [vmem:[%s273 + $0xa0] sm:$0xff]
      %v742 = vld [vmem:[%s273 + $0xa8] sm:$0xff]
      %v743 = vld [vmem:[%s273 + $0xb0] sm:$0xff]
      %v744 = vld [vmem:[%s273 + $0xb8] sm:$0xff]
      %v745 = vld [vmem:[%s273 + $0xc0] sm:$0xff]
      %v746 = vld [vmem:[%s273 + $0xc8] sm:$0xff]
      %v747 = vld [vmem:[%s273 + $0xd0] sm:$0xff]
      %v748 = vld [vmem:[%s273 + $0xd8] sm:$0xff]
      %v749 = vld [vmem:[%s273 + $0xe0] sm:$0xff]
      %v750 = vld [vmem:[%s273 + $0xe8] sm:$0xff]
      %s751 = scalar_lea.vmem %s1, 512
      %v752 = vld [vmem:[%s751] sm:$0xff]
      %v753 = vld [vmem:[%s751 + $0x8] sm:$0xff]
      %v754 = vld [vmem:[%s751 + $0x10] sm:$0xff]
      %v755 = vld [vmem:[%s751 + $0x18] sm:$0xff]
      %v756 = vld [vmem:[%s751 + $0x20] sm:$0xff]
      %v757 = vld [vmem:[%s751 + $0x28] sm:$0xff]
      %v758 = vld [vmem:[%s751 + $0x30] sm:$0xff]
      %v759 = vld [vmem:[%s751 + $0x38] sm:$0xff]
      %v760 = vld [vmem:[%s751 + $0x40] sm:$0xff]
      %v761 = vld [vmem:[%s751 + $0x48] sm:$0xff]
      %v762 = vld [vmem:[%s751 + $0x50] sm:$0xff]
      %v763 = vld [vmem:[%s751 + $0x58] sm:$0xff]
      %v764 = vld [vmem:[%s751 + $0x60] sm:$0xff]
      %v765 = vld [vmem:[%s751 + $0x68] sm:$0xff]
      %v766 = vld [vmem:[%s751 + $0x70] sm:$0xff]
      %v767 = vld [vmem:[%s751 + $0x78] sm:$0xff]
      %v768 = vld [vmem:[%s751 + $0x80] sm:$0xff]
      %v769 = vld [vmem:[%s751 + $0x88] sm:$0xff]
      %v770 = vld [vmem:[%s751 + $0x90] sm:$0xff]
      %v771 = vld [vmem:[%s751 + $0x98] sm:$0xff]
      %v772 = vld [vmem:[%s751 + $0xa0] sm:$0xff]
      %v773 = vld [vmem:[%s751 + $0xa8] sm:$0xff]
      %v774 = vld [vmem:[%s751 + $0xb0] sm:$0xff]
      %v775 = vld [vmem:[%s751 + $0xb8] sm:$0xff]
      %v776 = vld [vmem:[%s751 + $0xc0] sm:$0xff]
      %v777 = vld [vmem:[%s751 + $0xc8] sm:$0xff]
      %v778 = vld [vmem:[%s751 + $0xd0] sm:$0xff]
      %v779 = vld [vmem:[%s751 + $0xd8] sm:$0xff]
      %v780 = vld [vmem:[%s751 + $0xe0] sm:$0xff]
      %v781 = vld [vmem:[%s751 + $0xe8] sm:$0xff]
      %v782 = vld [vmem:[%s751 + $0xf0] sm:$0xff]
      %v783 = vld [vmem:[%s751 + $0xf8] sm:$0xff]
      %vm812 = vcmask 1044480
      %v813 = vrot.slane %v723, 3
      %v814 = vrot.slane %v725, 3
      %v815 = vsel %vm812, %v813, %v814
      %v816 = vrot.slane %v724, 3
      %v817 = vrot.slane %v726, 3
      %v818 = vsel %vm812, %v816, %v817
      %v819 = vrot.slane %v727, 3
      %v820 = vsel %vm812, %v814, %v819
      %v821 = vrot.slane %v728, 3
      %v822 = vsel %vm812, %v817, %v821
      %v823 = vrot.slane %v729, 3
      %v824 = vsel %vm812, %v819, %v823
      %v825 = vrot.slane %v730, 3
      %v826 = vsel %vm812, %v821, %v825
      %v827 = vrot.slane %v731, 3
      %v828 = vsel %vm812, %v823, %v827
      %v829 = vrot.slane %v732, 3
      %v830 = vsel %vm812, %v825, %v829
      %v831 = vrot.slane %v733, 3
      %v832 = vsel %vm812, %v827, %v831
      %v833 = vrot.slane %v734, 3
      %v834 = vsel %vm812, %v829, %v833
      %v835 = vrot.slane %v735, 3
      %v836 = vsel %vm812, %v831, %v835
      %v837 = vrot.slane %v736, 3
      %v838 = vsel %vm812, %v833, %v837
      %v839 = vrot.slane %v737, 3
      %v840 = vsel %vm812, %v835, %v839
      %v841 = vrot.slane %v738, 3
      %v842 = vsel %vm812, %v837, %v841
      %v843 = vrot.slane %v739, 3
      %v844 = vsel %vm812, %v839, %v843
      %v845 = vrot.slane %v740, 3
      %v846 = vsel %vm812, %v841, %v845
      %v847 = vrot.slane %v741, 3
      %v848 = vsel %vm812, %v843, %v847
      %v849 = vrot.slane %v742, 3
      %v850 = vsel %vm812, %v845, %v849
      %v851 = vrot.slane %v743, 3
      %v852 = vsel %vm812, %v847, %v851
      %v853 = vrot.slane %v744, 3
      %v854 = vsel %vm812, %v849, %v853
      %v855 = vrot.slane %v745, 3
      %v856 = vsel %vm812, %v851, %v855
      %v857 = vrot.slane %v746, 3
      %v858 = vsel %vm812, %v853, %v857
      %v859 = vrot.slane %v747, 3
      %v860 = vsel %vm812, %v855, %v859
      %v861 = vrot.slane %v748, 3
      %v862 = vsel %vm812, %v857, %v861
      %v863 = vrot.slane %v749, 3
      %v864 = vsel %vm812, %v859, %v863
      %v865 = vrot.slane %v750, 3
      %v866 = vsel %vm812, %v861, %v865
      %895 = vmatpush.msra.mxu0 %v767
      %896 = vmatpush.msra.mxu0 %v766
      %897 = vmatpush.msra.mxu0 %v765
      %898 = vmatpush.msra.mxu0 %v764
      %899 = vmatpush.msra.mxu0 %v763
      %900 = vmatpush.msra.mxu0 %v762
      %901 = vmatpush.msra.mxu0 %v761
      %902 = vmatpush.msra.mxu0 %v760
      %903 = vmatpush.msra.mxu0 %v759
      %904 = vmatpush.msra.mxu0 %v758
      %905 = vmatpush.msra.mxu0 %v757
      %906 = vmatpush.msra.mxu0 %v756
      %907 = vmatpush.msra.mxu0 %v755
      %908 = vmatpush.msra.mxu0 %v754
      %909 = vmatpush.msra.mxu0 %v753
      %910 = vmatpush.msra.mxu0 %v752
      %911 = vmatmul.f32.gmra.mxu0 %v815
      %v912 = vpop.f32.mrf.mxu0
      %v913 = vadd.f32 0.0, %v912
      %914 = vmatmul.f32.gmra.mxu0 %v820
      %v915 = vpop.f32.mrf.mxu0
      %v916 = vadd.f32 0.0, %v915
      %917 = vmatmul.f32.gmra.mxu0 %v824
      %v918 = vpop.f32.mrf.mxu0
      %v919 = vadd.f32 0.0, %v918
      %920 = vmatmul.f32.gmra.mxu0 %v828
      %v921 = vpop.f32.mrf.mxu0
      %v922 = vadd.f32 0.0, %v921
      %923 = vmatmul.f32.gmra.mxu0 %v832
      %v924 = vpop.f32.mrf.mxu0
      %v925 = vadd.f32 0.0, %v924
      %926 = vmatmul.f32.gmra.mxu0 %v836
      %v927 = vpop.f32.mrf.mxu0
      %v928 = vadd.f32 0.0, %v927
      %929 = vmatmul.f32.gmra.mxu0 %v840
      %v930 = vpop.f32.mrf.mxu0
      %v931 = vadd.f32 0.0, %v930
      %932 = vmatmul.f32.gmra.mxu0 %v844
      %v933 = vpop.f32.mrf.mxu0
      %v934 = vadd.f32 0.0, %v933
      %935 = vmatmul.f32.gmra.mxu0 %v848
      %v936 = vpop.f32.mrf.mxu0
      %v937 = vadd.f32 0.0, %v936
      %938 = vmatmul.f32.gmra.mxu0 %v852
      %v939 = vpop.f32.mrf.mxu0
      %v940 = vadd.f32 0.0, %v939
      %941 = vmatmul.f32.gmra.mxu0 %v856
      %v942 = vpop.f32.mrf.mxu0
      %v943 = vadd.f32 0.0, %v942
      %944 = vmatmul.f32.gmra.mxu0 %v860
      %v945 = vpop.f32.mrf.mxu0
      %v946 = vadd.f32 0.0, %v945
      %947 = vmatmul.f32.gmra.mxu0 %v864
      %v948 = vpop.f32.mrf.mxu0
      %v949 = vadd.f32 0.0, %v948
      %950 = vmatmul.f32.gmra.mxu0 %v863
      %v951 = vpop.f32.mrf.mxu0
      %v952 = vadd.f32 0.0, %v951
      %953 = vdwg.mxu0
      %954 = vmatpush.msra.mxu0 %v783
      %955 = vmatpush.msra.mxu0 %v782
      %956 = vmatpush.msra.mxu0 %v781
      %957 = vmatpush.msra.mxu0 %v780
      %958 = vmatpush.msra.mxu0 %v779
      %959 = vmatpush.msra.mxu0 %v778
      %960 = vmatpush.msra.mxu0 %v777
      %961 = vmatpush.msra.mxu0 %v776
      %962 = vmatpush.msra.mxu0 %v775
      %963 = vmatpush.msra.mxu0 %v774
      %964 = vmatpush.msra.mxu0 %v773
      %965 = vmatpush.msra.mxu0 %v772
      %966 = vmatpush.msra.mxu0 %v771
      %967 = vmatpush.msra.mxu0 %v770
      %968 = vmatpush.msra.mxu0 %v769
      %969 = vmatpush.msra.mxu0 %v768
      %970 = vmatmul.f32.gmra.mxu0 %v818
      %v971 = vpop.f32.mrf.mxu0
      %v972 = vadd.f32 %v913, %v971
      %973 = vmatmul.f32.gmra.mxu0 %v822
      %v974 = vpop.f32.mrf.mxu0
      %v975 = vadd.f32 %v916, %v974
      %976 = vmatmul.f32.gmra.mxu0 %v826
      %v977 = vpop.f32.mrf.mxu0
      %v978 = vadd.f32 %v919, %v977
      %979 = vmatmul.f32.gmra.mxu0 %v830
      %v980 = vpop.f32.mrf.mxu0
      %v981 = vadd.f32 %v922, %v980
      %982 = vmatmul.f32.gmra.mxu0 %v834
      %v983 = vpop.f32.mrf.mxu0
      %v984 = vadd.f32 %v925, %v983
      %985 = vmatmul.f32.gmra.mxu0 %v838
      %v986 = vpop.f32.mrf.mxu0
      %v987 = vadd.f32 %v928, %v986
      %988 = vmatmul.f32.gmra.mxu0 %v842
      %v989 = vpop.f32.mrf.mxu0
      %v990 = vadd.f32 %v931, %v989
      %991 = vmatmul.f32.gmra.mxu0 %v846
      %v992 = vpop.f32.mrf.mxu0
      %v993 = vadd.f32 %v934, %v992
      %994 = vmatmul.f32.gmra.mxu0 %v850
      %v995 = vpop.f32.mrf.mxu0
      %v996 = vadd.f32 %v937, %v995
      %997 = vmatmul.f32.gmra.mxu0 %v854
      %v998 = vpop.f32.mrf.mxu0
      %v999 = vadd.f32 %v940, %v998
      %1000 = vmatmul.f32.gmra.mxu0 %v858
      %v1001 = vpop.f32.mrf.mxu0
      %v1002 = vadd.f32 %v943, %v1001
      %1003 = vmatmul.f32.gmra.mxu0 %v862
      %v1004 = vpop.f32.mrf.mxu0
      %v1005 = vadd.f32 %v946, %v1004
      %1006 = vmatmul.f32.gmra.mxu0 %v866
      %v1007 = vpop.f32.mrf.mxu0
      %v1008 = vadd.f32 %v949, %v1007
      %1009 = vmatmul.f32.gmra.mxu0 %v865
      %v1010 = vpop.f32.mrf.mxu0
      %v1011 = vadd.f32 %v952, %v1010
      %1012 = vdwg.mxu0
      %v1013 = vadd.f32 %v682, %v972
      %v1014 = vadd.f32 %v685, %v975
      %v1015 = vadd.f32 %v688, %v978
      %v1016 = vadd.f32 %v691, %v981
      %v1017 = vadd.f32 %v694, %v984
      %v1018 = vadd.f32 %v697, %v987
      %v1019 = vadd.f32 %v700, %v990
      %v1020 = vadd.f32 %v703, %v993
      %v1021 = vadd.f32 %v706, %v996
      %v1022 = vadd.f32 %v709, %v999
      %v1023 = vadd.f32 %v712, %v1002
      %v1024 = vadd.f32 %v715, %v1005
      %v1025 = vadd.f32 %v718, %v1008
      %v1026 = vadd.f32 %v721, %v1011
      %v1027 = vld [vmem:[%s273 + $0x10] sm:$0xf0]
      %v1028 = vld [vmem:[%s273 + $0x18] sm:$0xf0]
      %v1029 = vld [vmem:[%s273 + $0x20] sm:$0xff]
      %v1030 = vld [vmem:[%s273 + $0x28] sm:$0xff]
      %v1031 = vld [vmem:[%s273 + $0x30] sm:$0xff]
      %v1032 = vld [vmem:[%s273 + $0x38] sm:$0xff]
      %v1033 = vld [vmem:[%s273 + $0x40] sm:$0xff]
      %v1034 = vld [vmem:[%s273 + $0x48] sm:$0xff]
      %v1035 = vld [vmem:[%s273 + $0x50] sm:$0xff]
      %v1036 = vld [vmem:[%s273 + $0x58] sm:$0xff]
      %v1037 = vld [vmem:[%s273 + $0x60] sm:$0xff]
      %v1038 = vld [vmem:[%s273 + $0x68] sm:$0xff]
      %v1039 = vld [vmem:[%s273 + $0x70] sm:$0xff]
      %v1040 = vld [vmem:[%s273 + $0x78] sm:$0xff]
      %v1041 = vld [vmem:[%s273 + $0x80] sm:$0xff]
      %v1042 = vld [vmem:[%s273 + $0x88] sm:$0xff]
      %v1043 = vld [vmem:[%s273 + $0x90] sm:$0xff]
      %v1044 = vld [vmem:[%s273 + $0x98] sm:$0xff]
      %v1045 = vld [vmem:[%s273 + $0xa0] sm:$0xff]
      %v1046 = vld [vmem:[%s273 + $0xa8] sm:$0xff]
      %v1047 = vld [vmem:[%s273 + $0xb0] sm:$0xff]
      %v1048 = vld [vmem:[%s273 + $0xb8] sm:$0xff]
      %v1049 = vld [vmem:[%s273 + $0xc0] sm:$0xff]
      %v1050 = vld [vmem:[%s273 + $0xc8] sm:$0xff]
      %v1051 = vld [vmem:[%s273 + $0xd0] sm:$0xff]
      %v1052 = vld [vmem:[%s273 + $0xd8] sm:$0xff]
      %v1053 = vld [vmem:[%s273 + $0xe0] sm:$0xff]
      %v1054 = vld [vmem:[%s273 + $0xe8] sm:$0xff]
      %v1055 = vld [vmem:[%s273 + $0xf0] sm:$0x1]
      %v1056 = vld [vmem:[%s273 + $0xf8] sm:$0x1]
      %s1057 = scalar_lea.vmem %s1, 768
      %v1058 = vld [vmem:[%s1057] sm:$0xff]
      %v1059 = vld [vmem:[%s1057 + $0x8] sm:$0xff]
      %v1060 = vld [vmem:[%s1057 + $0x10] sm:$0xff]
      %v1061 = vld [vmem:[%s1057 + $0x18] sm:$0xff]
      %v1062 = vld [vmem:[%s1057 + $0x20] sm:$0xff]
      %v1063 = vld [vmem:[%s1057 + $0x28] sm:$0xff]
      %v1064 = vld [vmem:[%s1057 + $0x30] sm:$0xff]
      %v1065 = vld [vmem:[%s1057 + $0x38] sm:$0xff]
      %v1066 = vld [vmem:[%s1057 + $0x40] sm:$0xff]
      %v1067 = vld [vmem:[%s1057 + $0x48] sm:$0xff]
      %v1068 = vld [vmem:[%s1057 + $0x50] sm:$0xff]
      %v1069 = vld [vmem:[%s1057 + $0x58] sm:$0xff]
      %v1070 = vld [vmem:[%s1057 + $0x60] sm:$0xff]
      %v1071 = vld [vmem:[%s1057 + $0x68] sm:$0xff]
      %v1072 = vld [vmem:[%s1057 + $0x70] sm:$0xff]
      %v1073 = vld [vmem:[%s1057 + $0x78] sm:$0xff]
      %v1074 = vld [vmem:[%s1057 + $0x80] sm:$0xff]
      %v1075 = vld [vmem:[%s1057 + $0x88] sm:$0xff]
      %v1076 = vld [vmem:[%s1057 + $0x90] sm:$0xff]
      %v1077 = vld [vmem:[%s1057 + $0x98] sm:$0xff]
      %v1078 = vld [vmem:[%s1057 + $0xa0] sm:$0xff]
      %v1079 = vld [vmem:[%s1057 + $0xa8] sm:$0xff]
      %v1080 = vld [vmem:[%s1057 + $0xb0] sm:$0xff]
      %v1081 = vld [vmem:[%s1057 + $0xb8] sm:$0xff]
      %v1082 = vld [vmem:[%s1057 + $0xc0] sm:$0xff]
      %v1083 = vld [vmem:[%s1057 + $0xc8] sm:$0xff]
      %v1084 = vld [vmem:[%s1057 + $0xd0] sm:$0xff]
      %v1085 = vld [vmem:[%s1057 + $0xd8] sm:$0xff]
      %v1086 = vld [vmem:[%s1057 + $0xe0] sm:$0xff]
      %v1087 = vld [vmem:[%s1057 + $0xe8] sm:$0xff]
      %v1088 = vld [vmem:[%s1057 + $0xf0] sm:$0xff]
      %v1089 = vld [vmem:[%s1057 + $0xf8] sm:$0xff]
      %vm1120 = vcmask 1043456
      %v1121 = vrot.slane %v1027, 4
      %v1122 = vrot.slane %v1029, 4
      %v1123 = vsel %vm1120, %v1121, %v1122
      %v1124 = vrot.slane %v1028, 4
      %v1125 = vrot.slane %v1030, 4
      %v1126 = vsel %vm1120, %v1124, %v1125
      %v1127 = vrot.slane %v1031, 4
      %v1128 = vsel %vm1120, %v1122, %v1127
      %v1129 = vrot.slane %v1032, 4
      %v1130 = vsel %vm1120, %v1125, %v1129
      %v1131 = vrot.slane %v1033, 4
      %v1132 = vsel %vm1120, %v1127, %v1131
      %v1133 = vrot.slane %v1034, 4
      %v1134 = vsel %vm1120, %v1129, %v1133
      %v1135 = vrot.slane %v1035, 4
      %v1136 = vsel %vm1120, %v1131, %v1135
      %v1137 = vrot.slane %v1036, 4
      %v1138 = vsel %vm1120, %v1133, %v1137
      %v1139 = vrot.slane %v1037, 4
      %v1140 = vsel %vm1120, %v1135, %v1139
      %v1141 = vrot.slane %v1038, 4
      %v1142 = vsel %vm1120, %v1137, %v1141
      %v1143 = vrot.slane %v1039, 4
      %v1144 = vsel %vm1120, %v1139, %v1143
      %v1145 = vrot.slane %v1040, 4
      %v1146 = vsel %vm1120, %v1141, %v1145
      %v1147 = vrot.slane %v1041, 4
      %v1148 = vsel %vm1120, %v1143, %v1147
      %v1149 = vrot.slane %v1042, 4
      %v1150 = vsel %vm1120, %v1145, %v1149
      %v1151 = vrot.slane %v1043, 4
      %v1152 = vsel %vm1120, %v1147, %v1151
      %v1153 = vrot.slane %v1044, 4
      %v1154 = vsel %vm1120, %v1149, %v1153
      %v1155 = vrot.slane %v1045, 4
      %v1156 = vsel %vm1120, %v1151, %v1155
      %v1157 = vrot.slane %v1046, 4
      %v1158 = vsel %vm1120, %v1153, %v1157
      %v1159 = vrot.slane %v1047, 4
      %v1160 = vsel %vm1120, %v1155, %v1159
      %v1161 = vrot.slane %v1048, 4
      %v1162 = vsel %vm1120, %v1157, %v1161
      %v1163 = vrot.slane %v1049, 4
      %v1164 = vsel %vm1120, %v1159, %v1163
      %v1165 = vrot.slane %v1050, 4
      %v1166 = vsel %vm1120, %v1161, %v1165
      %v1167 = vrot.slane %v1051, 4
      %v1168 = vsel %vm1120, %v1163, %v1167
      %v1169 = vrot.slane %v1052, 4
      %v1170 = vsel %vm1120, %v1165, %v1169
      %v1171 = vrot.slane %v1053, 4
      %v1172 = vsel %vm1120, %v1167, %v1171
      %v1173 = vrot.slane %v1054, 4
      %v1174 = vsel %vm1120, %v1169, %v1173
      %v1175 = vrot.slane %v1055, 4
      %v1176 = vsel %vm1120, %v1171, %v1175
      %v1177 = vrot.slane %v1056, 4
      %v1178 = vsel %vm1120, %v1173, %v1177
      %1207 = vmatpush.msra.mxu0 %v1073
      %1208 = vmatpush.msra.mxu0 %v1072
      %1209 = vmatpush.msra.mxu0 %v1071
      %1210 = vmatpush.msra.mxu0 %v1070
      %1211 = vmatpush.msra.mxu0 %v1069
      %1212 = vmatpush.msra.mxu0 %v1068
      %1213 = vmatpush.msra.mxu0 %v1067
      %1214 = vmatpush.msra.mxu0 %v1066
      %1215 = vmatpush.msra.mxu0 %v1065
      %1216 = vmatpush.msra.mxu0 %v1064
      %1217 = vmatpush.msra.mxu0 %v1063
      %1218 = vmatpush.msra.mxu0 %v1062
      %1219 = vmatpush.msra.mxu0 %v1061
      %1220 = vmatpush.msra.mxu0 %v1060
      %1221 = vmatpush.msra.mxu0 %v1059
      %1222 = vmatpush.msra.mxu0 %v1058
      %1223 = vmatmul.f32.gmra.mxu0 %v1123
      %v1224 = vpop.f32.mrf.mxu0
      %v1225 = vadd.f32 0.0, %v1224
      %1226 = vmatmul.f32.gmra.mxu0 %v1128
      %v1227 = vpop.f32.mrf.mxu0
      %v1228 = vadd.f32 0.0, %v1227
      %1229 = vmatmul.f32.gmra.mxu0 %v1132
      %v1230 = vpop.f32.mrf.mxu0
      %v1231 = vadd.f32 0.0, %v1230
      %1232 = vmatmul.f32.gmra.mxu0 %v1136
      %v1233 = vpop.f32.mrf.mxu0
      %v1234 = vadd.f32 0.0, %v1233
      %1235 = vmatmul.f32.gmra.mxu0 %v1140
      %v1236 = vpop.f32.mrf.mxu0
      %v1237 = vadd.f32 0.0, %v1236
      %1238 = vmatmul.f32.gmra.mxu0 %v1144
      %v1239 = vpop.f32.mrf.mxu0
      %v1240 = vadd.f32 0.0, %v1239
      %1241 = vmatmul.f32.gmra.mxu0 %v1148
      %v1242 = vpop.f32.mrf.mxu0
      %v1243 = vadd.f32 0.0, %v1242
      %1244 = vmatmul.f32.gmra.mxu0 %v1152
      %v1245 = vpop.f32.mrf.mxu0
      %v1246 = vadd.f32 0.0, %v1245
      %1247 = vmatmul.f32.gmra.mxu0 %v1156
      %v1248 = vpop.f32.mrf.mxu0
      %v1249 = vadd.f32 0.0, %v1248
      %1250 = vmatmul.f32.gmra.mxu0 %v1160
      %v1251 = vpop.f32.mrf.mxu0
      %v1252 = vadd.f32 0.0, %v1251
      %1253 = vmatmul.f32.gmra.mxu0 %v1164
      %v1254 = vpop.f32.mrf.mxu0
      %v1255 = vadd.f32 0.0, %v1254
      %1256 = vmatmul.f32.gmra.mxu0 %v1168
      %v1257 = vpop.f32.mrf.mxu0
      %v1258 = vadd.f32 0.0, %v1257
      %1259 = vmatmul.f32.gmra.mxu0 %v1172
      %v1260 = vpop.f32.mrf.mxu0
      %v1261 = vadd.f32 0.0, %v1260
      %1262 = vmatmul.f32.gmra.mxu0 %v1176
      %v1263 = vpop.f32.mrf.mxu0
      %v1264 = vadd.f32 0.0, %v1263
      %1265 = vdwg.mxu0
      %1266 = vmatpush.msra.mxu0 %v1089
      %1267 = vmatpush.msra.mxu0 %v1088
      %1268 = vmatpush.msra.mxu0 %v1087
      %1269 = vmatpush.msra.mxu0 %v1086
      %1270 = vmatpush.msra.mxu0 %v1085
      %1271 = vmatpush.msra.mxu0 %v1084
      %1272 = vmatpush.msra.mxu0 %v1083
      %1273 = vmatpush.msra.mxu0 %v1082
      %1274 = vmatpush.msra.mxu0 %v1081
      %1275 = vmatpush.msra.mxu0 %v1080
      %1276 = vmatpush.msra.mxu0 %v1079
      %1277 = vmatpush.msra.mxu0 %v1078
      %1278 = vmatpush.msra.mxu0 %v1077
      %1279 = vmatpush.msra.mxu0 %v1076
      %1280 = vmatpush.msra.mxu0 %v1075
      %1281 = vmatpush.msra.mxu0 %v1074
      %1282 = vmatmul.f32.gmra.mxu0 %v1126
      %v1283 = vpop.f32.mrf.mxu0
      %v1284 = vadd.f32 %v1225, %v1283
      %1285 = vmatmul.f32.gmra.mxu0 %v1130
      %v1286 = vpop.f32.mrf.mxu0
      %v1287 = vadd.f32 %v1228, %v1286
      %1288 = vmatmul.f32.gmra.mxu0 %v1134
      %v1289 = vpop.f32.mrf.mxu0
      %v1290 = vadd.f32 %v1231, %v1289
      %1291 = vmatmul.f32.gmra.mxu0 %v1138
      %v1292 = vpop.f32.mrf.mxu0
      %v1293 = vadd.f32 %v1234, %v1292
      %1294 = vmatmul.f32.gmra.mxu0 %v1142
      %v1295 = vpop.f32.mrf.mxu0
      %v1296 = vadd.f32 %v1237, %v1295
      %1297 = vmatmul.f32.gmra.mxu0 %v1146
      %v1298 = vpop.f32.mrf.mxu0
      %v1299 = vadd.f32 %v1240, %v1298
      %1300 = vmatmul.f32.gmra.mxu0 %v1150
      %v1301 = vpop.f32.mrf.mxu0
      %v1302 = vadd.f32 %v1243, %v1301
      %1303 = vmatmul.f32.gmra.mxu0 %v1154
      %v1304 = vpop.f32.mrf.mxu0
      %v1305 = vadd.f32 %v1246, %v1304
      %1306 = vmatmul.f32.gmra.mxu0 %v1158
      %v1307 = vpop.f32.mrf.mxu0
      %v1308 = vadd.f32 %v1249, %v1307
      %1309 = vmatmul.f32.gmra.mxu0 %v1162
      %v1310 = vpop.f32.mrf.mxu0
      %v1311 = vadd.f32 %v1252, %v1310
      %1312 = vmatmul.f32.gmra.mxu0 %v1166
      %v1313 = vpop.f32.mrf.mxu0
      %v1314 = vadd.f32 %v1255, %v1313
      %1315 = vmatmul.f32.gmra.mxu0 %v1170
      %v1316 = vpop.f32.mrf.mxu0
      %v1317 = vadd.f32 %v1258, %v1316
      %1318 = vmatmul.f32.gmra.mxu0 %v1174
      %v1319 = vpop.f32.mrf.mxu0
      %v1320 = vadd.f32 %v1261, %v1319
      %1321 = vmatmul.f32.gmra.mxu0 %v1178
      %v1322 = vpop.f32.mrf.mxu0
      %v1323 = vadd.f32 %v1264, %v1322
      %1324 = vdwg.mxu0
      %v1325 = vadd.f32 %v1013, %v1284
      %v1326 = vadd.f32 %v1014, %v1287
      %v1327 = vadd.f32 %v1015, %v1290
      %v1328 = vadd.f32 %v1016, %v1293
      %v1329 = vadd.f32 %v1017, %v1296
      %v1330 = vadd.f32 %v1018, %v1299
      %v1331 = vadd.f32 %v1019, %v1302
      %v1332 = vadd.f32 %v1020, %v1305
      %v1333 = vadd.f32 %v1021, %v1308
      %v1334 = vadd.f32 %v1022, %v1311
      %v1335 = vadd.f32 %v1023, %v1314
      %v1336 = vadd.f32 %v1024, %v1317
      %v1337 = vadd.f32 %v1025, %v1320
      %v1338 = vadd.f32 %v1026, %v1323
      %v1339 = vld [vmem:[%s2] sm:$0x1]
      %v1341 = vperm.slane %v1339, 0
      %v1343 = vadd.f32 %v1325, %v1341
      %v1344 = vadd.f32 %v1326, %v1341
      %v1345 = vadd.f32 %v1327, %v1341
      %v1346 = vadd.f32 %v1328, %v1341
      %v1347 = vadd.f32 %v1329, %v1341
      %v1348 = vadd.f32 %v1330, %v1341
      %v1349 = vadd.f32 %v1331, %v1341
      %v1350 = vadd.f32 %v1332, %v1341
      %v1351 = vadd.f32 %v1333, %v1341
      %v1352 = vadd.f32 %v1334, %v1341
      %v1353 = vadd.f32 %v1335, %v1341
      %v1354 = vadd.f32 %v1336, %v1341
      %v1355 = vadd.f32 %v1337, %v1341
      %v1356 = vadd.f32 %v1338, %v1341
      %v1357 = vmax.f32 %v1343, 0.0
      %v1358 = vmax.f32 %v1344, 0.0
      %v1359 = vmax.f32 %v1345, 0.0
      %v1360 = vmax.f32 %v1346, 0.0
      %v1361 = vmax.f32 %v1347, 0.0
      %v1362 = vmax.f32 %v1348, 0.0
      %v1363 = vmax.f32 %v1349, 0.0
      %v1364 = vmax.f32 %v1350, 0.0
      %v1365 = vmax.f32 %v1351, 0.0
      %v1366 = vmax.f32 %v1352, 0.0
      %v1367 = vmax.f32 %v1353, 0.0
      %v1368 = vmax.f32 %v1354, 0.0
      %v1369 = vmax.f32 %v1355, 0.0
      %v1370 = vmax.f32 %v1356, 0.0
      %v1371 = vld [vmem:[%s3] sm:$0xff]
      %v1372 = vld [vmem:[%s3 + $0x8] sm:$0xff]
      %v1373 = vld [vmem:[%s3 + $0x10] sm:$0xff]
      %v1374 = vld [vmem:[%s3 + $0x18] sm:$0xff]
      %v1375 = vld [vmem:[%s3 + $0x20] sm:$0xff]
      %v1376 = vld [vmem:[%s3 + $0x28] sm:$0xff]
      %v1377 = vld [vmem:[%s3 + $0x30] sm:$0xff]
      %v1378 = vld [vmem:[%s3 + $0x38] sm:$0xff]
      %v1379 = vld [vmem:[%s3 + $0x40] sm:$0xff]
      %v1380 = vld [vmem:[%s3 + $0x48] sm:$0xff]
      %v1381 = vld [vmem:[%s3 + $0x50] sm:$0xff]
      %v1382 = vld [vmem:[%s3 + $0x58] sm:$0xff]
      %v1383 = vld [vmem:[%s3 + $0x60] sm:$0xff]
      %v1384 = vld [vmem:[%s3 + $0x68] sm:$0xff]
      %v1385 = vld [vmem:[%s3 + $0x70] sm:$0xff]
      %v1386 = vld [vmem:[%s3 + $0x78] sm:$0xff]
      %s1387 = scalar_lea.vmem %s3, 128
      %v1388 = vld [vmem:[%s1387] sm:$0xff]
      %v1389 = vld [vmem:[%s1387 + $0x8] sm:$0xff]
      %v1390 = vld [vmem:[%s1387 + $0x10] sm:$0xff]
      %v1391 = vld [vmem:[%s1387 + $0x18] sm:$0xff]
      %v1392 = vld [vmem:[%s1387 + $0x20] sm:$0xff]
      %v1393 = vld [vmem:[%s1387 + $0x28] sm:$0xff]
      %v1394 = vld [vmem:[%s1387 + $0x30] sm:$0xff]
      %v1395 = vld [vmem:[%s1387 + $0x38] sm:$0xff]
      %v1396 = vld [vmem:[%s1387 + $0x40] sm:$0xff]
      %v1397 = vld [vmem:[%s1387 + $0x48] sm:$0xff]
      %v1398 = vld [vmem:[%s1387 + $0x50] sm:$0xff]
      %v1399 = vld [vmem:[%s1387 + $0x58] sm:$0xff]
      %v1400 = vld [vmem:[%s1387 + $0x60] sm:$0xff]
      %v1401 = vld [vmem:[%s1387 + $0x68] sm:$0xff]
      %v1402 = vld [vmem:[%s1387 + $0x70] sm:$0xff]
      %v1403 = vld [vmem:[%s1387 + $0x78] sm:$0xff]
      %v1417 = vrot.slane %v1357, 1
      %v1418 = vrot.slane %v1358, 1
      %v1419 = vsel %vm404, %v1417, %v1418
      %v1420 = vrot.slane %v1359, 1
      %v1421 = vsel %vm404, %v1418, %v1420
      %v1422 = vrot.slane %v1360, 1
      %v1423 = vsel %vm404, %v1420, %v1422
      %v1424 = vrot.slane %v1361, 1
      %v1425 = vsel %vm404, %v1422, %v1424
      %v1426 = vrot.slane %v1362, 1
      %v1427 = vsel %vm404, %v1424, %v1426
      %v1428 = vrot.slane %v1363, 1
      %v1429 = vsel %vm404, %v1426, %v1428
      %v1430 = vrot.slane %v1364, 1
      %v1431 = vsel %vm404, %v1428, %v1430
      %v1432 = vrot.slane %v1365, 1
      %v1433 = vsel %vm404, %v1430, %v1432
      %v1434 = vrot.slane %v1366, 1
      %v1435 = vsel %vm404, %v1432, %v1434
      %v1436 = vrot.slane %v1367, 1
      %v1437 = vsel %vm404, %v1434, %v1436
      %v1438 = vrot.slane %v1368, 1
      %v1439 = vsel %vm404, %v1436, %v1438
      %v1440 = vrot.slane %v1369, 1
      %v1441 = vsel %vm404, %v1438, %v1440
      %1455 = vmatpush.msra.mxu0 %v1403
      %1456 = vmatpush.msra.mxu0 %v1402
      %1457 = vmatpush.msra.mxu0 %v1401
      %1458 = vmatpush.msra.mxu0 %v1400
      %1459 = vmatpush.msra.mxu0 %v1399
      %1460 = vmatpush.msra.mxu0 %v1398
      %1461 = vmatpush.msra.mxu0 %v1397
      %1462 = vmatpush.msra.mxu0 %v1396
      %1463 = vmatpush.msra.mxu0 %v1395
      %1464 = vmatpush.msra.mxu0 %v1394
      %1465 = vmatpush.msra.mxu0 %v1393
      %1466 = vmatpush.msra.mxu0 %v1392
      %1467 = vmatpush.msra.mxu0 %v1391
      %1468 = vmatpush.msra.mxu0 %v1390
      %1469 = vmatpush.msra.mxu0 %v1389
      %1470 = vmatpush.msra.mxu0 %v1388
      %1471 = vmatmul.f32.gmra.mxu0 %v1419
      %v1472 = vpop.f32.mrf.mxu0
      %v1473 = vadd.f32 0.0, %v1472
      %1474 = vmatmul.f32.gmra.mxu0 %v1421
      %v1475 = vpop.f32.mrf.mxu0
      %v1476 = vadd.f32 0.0, %v1475
      %1477 = vmatmul.f32.gmra.mxu0 %v1423
      %v1478 = vpop.f32.mrf.mxu0
      %v1479 = vadd.f32 0.0, %v1478
      %1480 = vmatmul.f32.gmra.mxu0 %v1425
      %v1481 = vpop.f32.mrf.mxu0
      %v1482 = vadd.f32 0.0, %v1481
      %1483 = vmatmul.f32.gmra.mxu0 %v1427
      %v1484 = vpop.f32.mrf.mxu0
      %v1485 = vadd.f32 0.0, %v1484
      %1486 = vmatmul.f32.gmra.mxu0 %v1429
      %v1487 = vpop.f32.mrf.mxu0
      %v1488 = vadd.f32 0.0, %v1487
      %1489 = vmatmul.f32.gmra.mxu0 %v1431
      %v1490 = vpop.f32.mrf.mxu0
      %v1491 = vadd.f32 0.0, %v1490
      %1492 = vmatmul.f32.gmra.mxu0 %v1433
      %v1493 = vpop.f32.mrf.mxu0
      %v1494 = vadd.f32 0.0, %v1493
      %1495 = vmatmul.f32.gmra.mxu0 %v1435
      %v1496 = vpop.f32.mrf.mxu0
      %v1497 = vadd.f32 0.0, %v1496
      %1498 = vmatmul.f32.gmra.mxu0 %v1437
      %v1499 = vpop.f32.mrf.mxu0
      %v1500 = vadd.f32 0.0, %v1499
      %1501 = vmatmul.f32.gmra.mxu0 %v1439
      %v1502 = vpop.f32.mrf.mxu0
      %v1503 = vadd.f32 0.0, %v1502
      %1504 = vmatmul.f32.gmra.mxu0 %v1441
      %v1505 = vpop.f32.mrf.mxu0
      %v1506 = vadd.f32 0.0, %v1505
      %1507 = vmatmul.f32.gmra.mxu0 %v1440
      %v1508 = vpop.f32.mrf.mxu0
      %v1509 = vadd.f32 0.0, %v1508
      %1510 = vdwg.mxu0
      %1511 = vmatpush.msra.mxu0 %v1386
      %1512 = vmatpush.msra.mxu0 %v1385
      %1513 = vmatpush.msra.mxu0 %v1384
      %1514 = vmatpush.msra.mxu0 %v1383
      %1515 = vmatpush.msra.mxu0 %v1382
      %1516 = vmatpush.msra.mxu0 %v1381
      %1517 = vmatpush.msra.mxu0 %v1380
      %1518 = vmatpush.msra.mxu0 %v1379
      %1519 = vmatpush.msra.mxu0 %v1378
      %1520 = vmatpush.msra.mxu0 %v1377
      %1521 = vmatpush.msra.mxu0 %v1376
      %1522 = vmatpush.msra.mxu0 %v1375
      %1523 = vmatpush.msra.mxu0 %v1374
      %1524 = vmatpush.msra.mxu0 %v1373
      %1525 = vmatpush.msra.mxu0 %v1372
      %1526 = vmatpush.msra.mxu0 %v1371
      %1527 = vmatmul.f32.gmra.mxu0 %v1357
      %v1528 = vpop.f32.mrf.mxu0
      %v1529 = vadd.f32 %v1473, %v1528
      %1530 = vmatmul.f32.gmra.mxu0 %v1358
      %v1531 = vpop.f32.mrf.mxu0
      %v1532 = vadd.f32 %v1476, %v1531
      %1533 = vmatmul.f32.gmra.mxu0 %v1359
      %v1534 = vpop.f32.mrf.mxu0
      %v1535 = vadd.f32 %v1479, %v1534
      %1536 = vmatmul.f32.gmra.mxu0 %v1360
      %v1537 = vpop.f32.mrf.mxu0
      %v1538 = vadd.f32 %v1482, %v1537
      %1539 = vmatmul.f32.gmra.mxu0 %v1361
      %v1540 = vpop.f32.mrf.mxu0
      %v1541 = vadd.f32 %v1485, %v1540
      %1542 = vmatmul.f32.gmra.mxu0 %v1362
      %v1543 = vpop.f32.mrf.mxu0
      %v1544 = vadd.f32 %v1488, %v1543
      %1545 = vmatmul.f32.gmra.mxu0 %v1363
      %v1546 = vpop.f32.mrf.mxu0
      %v1547 = vadd.f32 %v1491, %v1546
      %1548 = vmatmul.f32.gmra.mxu0 %v1364
      %v1549 = vpop.f32.mrf.mxu0
      %v1550 = vadd.f32 %v1494, %v1549
      %1551 = vmatmul.f32.gmra.mxu0 %v1365
      %v1552 = vpop.f32.mrf.mxu0
      %v1553 = vadd.f32 %v1497, %v1552
      %1554 = vmatmul.f32.gmra.mxu0 %v1366
      %v1555 = vpop.f32.mrf.mxu0
      %v1556 = vadd.f32 %v1500, %v1555
      %1557 = vmatmul.f32.gmra.mxu0 %v1367
      %v1558 = vpop.f32.mrf.mxu0
      %v1559 = vadd.f32 %v1503, %v1558
      %1560 = vmatmul.f32.gmra.mxu0 %v1368
      %v1561 = vpop.f32.mrf.mxu0
      %v1562 = vadd.f32 %v1506, %v1561
      %1563 = vmatmul.f32.gmra.mxu0 %v1369
      %v1564 = vpop.f32.mrf.mxu0
      %v1565 = vadd.f32 %v1509, %v1564
      %1566 = vdwg.mxu0
      %s1567 = scalar_lea.vmem %s3, 256
      %v1568 = vld [vmem:[%s1567] sm:$0xff]
      %v1569 = vld [vmem:[%s1567 + $0x8] sm:$0xff]
      %v1570 = vld [vmem:[%s1567 + $0x10] sm:$0xff]
      %v1571 = vld [vmem:[%s1567 + $0x18] sm:$0xff]
      %v1572 = vld [vmem:[%s1567 + $0x20] sm:$0xff]
      %v1573 = vld [vmem:[%s1567 + $0x28] sm:$0xff]
      %v1574 = vld [vmem:[%s1567 + $0x30] sm:$0xff]
      %v1575 = vld [vmem:[%s1567 + $0x38] sm:$0xff]
      %v1576 = vld [vmem:[%s1567 + $0x40] sm:$0xff]
      %v1577 = vld [vmem:[%s1567 + $0x48] sm:$0xff]
      %v1578 = vld [vmem:[%s1567 + $0x50] sm:$0xff]
      %v1579 = vld [vmem:[%s1567 + $0x58] sm:$0xff]
      %v1580 = vld [vmem:[%s1567 + $0x60] sm:$0xff]
      %v1581 = vld [vmem:[%s1567 + $0x68] sm:$0xff]
      %v1582 = vld [vmem:[%s1567 + $0x70] sm:$0xff]
      %v1583 = vld [vmem:[%s1567 + $0x78] sm:$0xff]
      %v1585 = vrot.slane %v1358, 3
      %v1586 = vrot.slane %v1359, 3
      %v1587 = vsel %vm812, %v1585, %v1586
      %v1588 = vrot.slane %v1360, 3
      %v1589 = vsel %vm812, %v1586, %v1588
      %v1590 = vrot.slane %v1361, 3
      %v1591 = vsel %vm812, %v1588, %v1590
      %v1592 = vrot.slane %v1362, 3
      %v1593 = vsel %vm812, %v1590, %v1592
      %v1594 = vrot.slane %v1363, 3
      %v1595 = vsel %vm812, %v1592, %v1594
      %v1596 = vrot.slane %v1364, 3
      %v1597 = vsel %vm812, %v1594, %v1596
      %v1598 = vrot.slane %v1365, 3
      %v1599 = vsel %vm812, %v1596, %v1598
      %v1600 = vrot.slane %v1366, 3
      %v1601 = vsel %vm812, %v1598, %v1600
      %v1602 = vrot.slane %v1367, 3
      %v1603 = vsel %vm812, %v1600, %v1602
      %v1604 = vrot.slane %v1368, 3
      %v1605 = vsel %vm812, %v1602, %v1604
      %v1606 = vrot.slane %v1369, 3
      %v1607 = vsel %vm812, %v1604, %v1606
      %v1608 = vrot.slane %v1370, 3
      %v1609 = vsel %vm812, %v1606, %v1608
      %1623 = vmatpush.msra.mxu0 %v1583
      %1624 = vmatpush.msra.mxu0 %v1582
      %1625 = vmatpush.msra.mxu0 %v1581
      %1626 = vmatpush.msra.mxu0 %v1580
      %1627 = vmatpush.msra.mxu0 %v1579
      %1628 = vmatpush.msra.mxu0 %v1578
      %1629 = vmatpush.msra.mxu0 %v1577
      %1630 = vmatpush.msra.mxu0 %v1576
      %1631 = vmatpush.msra.mxu0 %v1575
      %1632 = vmatpush.msra.mxu0 %v1574
      %1633 = vmatpush.msra.mxu0 %v1573
      %1634 = vmatpush.msra.mxu0 %v1572
      %1635 = vmatpush.msra.mxu0 %v1571
      %1636 = vmatpush.msra.mxu0 %v1570
      %1637 = vmatpush.msra.mxu0 %v1569
      %1638 = vmatpush.msra.mxu0 %v1568
      %1639 = vmatmul.f32.gmra.mxu0 %v1587
      %v1640 = vpop.f32.mrf.mxu0
      %v1641 = vadd.f32 0.0, %v1640
      %1642 = vmatmul.f32.gmra.mxu0 %v1589
      %v1643 = vpop.f32.mrf.mxu0
      %v1644 = vadd.f32 0.0, %v1643
      %1645 = vmatmul.f32.gmra.mxu0 %v1591
      %v1646 = vpop.f32.mrf.mxu0
      %v1647 = vadd.f32 0.0, %v1646
      %1648 = vmatmul.f32.gmra.mxu0 %v1593
      %v1649 = vpop.f32.mrf.mxu0
      %v1650 = vadd.f32 0.0, %v1649
      %1651 = vmatmul.f32.gmra.mxu0 %v1595
      %v1652 = vpop.f32.mrf.mxu0
      %v1653 = vadd.f32 0.0, %v1652
      %1654 = vmatmul.f32.gmra.mxu0 %v1597
      %v1655 = vpop.f32.mrf.mxu0
      %v1656 = vadd.f32 0.0, %v1655
      %1657 = vmatmul.f32.gmra.mxu0 %v1599
      %v1658 = vpop.f32.mrf.mxu0
      %v1659 = vadd.f32 0.0, %v1658
      %1660 = vmatmul.f32.gmra.mxu0 %v1601
      %v1661 = vpop.f32.mrf.mxu0
      %v1662 = vadd.f32 0.0, %v1661
      %1663 = vmatmul.f32.gmra.mxu0 %v1603
      %v1664 = vpop.f32.mrf.mxu0
      %v1665 = vadd.f32 0.0, %v1664
      %1666 = vmatmul.f32.gmra.mxu0 %v1605
      %v1667 = vpop.f32.mrf.mxu0
      %v1668 = vadd.f32 0.0, %v1667
      %1669 = vmatmul.f32.gmra.mxu0 %v1607
      %v1670 = vpop.f32.mrf.mxu0
      %v1671 = vadd.f32 0.0, %v1670
      %1672 = vmatmul.f32.gmra.mxu0 %v1609
      %v1673 = vpop.f32.mrf.mxu0
      %v1674 = vadd.f32 0.0, %v1673
      %1675 = vmatmul.f32.gmra.mxu0 %v1608
      %v1676 = vpop.f32.mrf.mxu0
      %v1677 = vadd.f32 0.0, %v1676
      %1678 = vdwg.mxu0
      %v1679 = vadd.f32 %v1529, %v1641
      %v1680 = vadd.f32 %v1532, %v1644
      %v1681 = vadd.f32 %v1535, %v1647
      %v1682 = vadd.f32 %v1538, %v1650
      %v1683 = vadd.f32 %v1541, %v1653
      %v1684 = vadd.f32 %v1544, %v1656
      %v1685 = vadd.f32 %v1547, %v1659
      %v1686 = vadd.f32 %v1550, %v1662
      %v1687 = vadd.f32 %v1553, %v1665
      %v1688 = vadd.f32 %v1556, %v1668
      %v1689 = vadd.f32 %v1559, %v1671
      %v1690 = vadd.f32 %v1562, %v1674
      %v1691 = vadd.f32 %v1565, %v1677
      %s1692 = scalar_lea.vmem %s3, 384
      %v1693 = vld [vmem:[%s1692] sm:$0xff]
      %v1694 = vld [vmem:[%s1692 + $0x8] sm:$0xff]
      %v1695 = vld [vmem:[%s1692 + $0x10] sm:$0xff]
      %v1696 = vld [vmem:[%s1692 + $0x18] sm:$0xff]
      %v1697 = vld [vmem:[%s1692 + $0x20] sm:$0xff]
      %v1698 = vld [vmem:[%s1692 + $0x28] sm:$0xff]
      %v1699 = vld [vmem:[%s1692 + $0x30] sm:$0xff]
      %v1700 = vld [vmem:[%s1692 + $0x38] sm:$0xff]
      %v1701 = vld [vmem:[%s1692 + $0x40] sm:$0xff]
      %v1702 = vld [vmem:[%s1692 + $0x48] sm:$0xff]
      %v1703 = vld [vmem:[%s1692 + $0x50] sm:$0xff]
      %v1704 = vld [vmem:[%s1692 + $0x58] sm:$0xff]
      %v1705 = vld [vmem:[%s1692 + $0x60] sm:$0xff]
      %v1706 = vld [vmem:[%s1692 + $0x68] sm:$0xff]
      %v1707 = vld [vmem:[%s1692 + $0x70] sm:$0xff]
      %v1708 = vld [vmem:[%s1692 + $0x78] sm:$0xff]
      %v1709 = vrot.slane %v1358, 4
      %v1710 = vrot.slane %v1359, 4
      %v1711 = vsel %vm1120, %v1709, %v1710
      %v1712 = vrot.slane %v1360, 4
      %v1713 = vsel %vm1120, %v1710, %v1712
      %v1714 = vrot.slane %v1361, 4
      %v1715 = vsel %vm1120, %v1712, %v1714
      %v1716 = vrot.slane %v1362, 4
      %v1717 = vsel %vm1120, %v1714, %v1716
      %v1718 = vrot.slane %v1363, 4
      %v1719 = vsel %vm1120, %v1716, %v1718
      %v1720 = vrot.slane %v1364, 4
      %v1721 = vsel %vm1120, %v1718, %v1720
      %v1722 = vrot.slane %v1365, 4
      %v1723 = vsel %vm1120, %v1720, %v1722
      %v1724 = vrot.slane %v1366, 4
      %v1725 = vsel %vm1120, %v1722, %v1724
      %v1726 = vrot.slane %v1367, 4
      %v1727 = vsel %vm1120, %v1724, %v1726
      %v1728 = vrot.slane %v1368, 4
      %v1729 = vsel %vm1120, %v1726, %v1728
      %v1730 = vrot.slane %v1369, 4
      %v1731 = vsel %vm1120, %v1728, %v1730
      %v1732 = vrot.slane %v1370, 4
      %v1733 = vsel %vm1120, %v1730, %v1732
      %1747 = vmatpush.msra.mxu0 %v1708
      %1748 = vmatpush.msra.mxu0 %v1707
      %1749 = vmatpush.msra.mxu0 %v1706
      %1750 = vmatpush.msra.mxu0 %v1705
      %1751 = vmatpush.msra.mxu0 %v1704
      %1752 = vmatpush.msra.mxu0 %v1703
      %1753 = vmatpush.msra.mxu0 %v1702
      %1754 = vmatpush.msra.mxu0 %v1701
      %1755 = vmatpush.msra.mxu0 %v1700
      %1756 = vmatpush.msra.mxu0 %v1699
      %1757 = vmatpush.msra.mxu0 %v1698
      %1758 = vmatpush.msra.mxu0 %v1697
      %1759 = vmatpush.msra.mxu0 %v1696
      %1760 = vmatpush.msra.mxu0 %v1695
      %1761 = vmatpush.msra.mxu0 %v1694
      %1762 = vmatpush.msra.mxu0 %v1693
      %1763 = vmatmul.f32.gmra.mxu0 %v1711
      %v1764 = vpop.f32.mrf.mxu0
      %v1765 = vadd.f32 0.0, %v1764
      %1766 = vmatmul.f32.gmra.mxu0 %v1713
      %v1767 = vpop.f32.mrf.mxu0
      %v1768 = vadd.f32 0.0, %v1767
      %1769 = vmatmul.f32.gmra.mxu0 %v1715
      %v1770 = vpop.f32.mrf.mxu0
      %v1771 = vadd.f32 0.0, %v1770
      %1772 = vmatmul.f32.gmra.mxu0 %v1717
      %v1773 = vpop.f32.mrf.mxu0
      %v1774 = vadd.f32 0.0, %v1773
      %1775 = vmatmul.f32.gmra.mxu0 %v1719
      %v1776 = vpop.f32.mrf.mxu0
      %v1777 = vadd.f32 0.0, %v1776
      %1778 = vmatmul.f32.gmra.mxu0 %v1721
      %v1779 = vpop.f32.mrf.mxu0
      %v1780 = vadd.f32 0.0, %v1779
      %1781 = vmatmul.f32.gmra.mxu0 %v1723
      %v1782 = vpop.f32.mrf.mxu0
      %v1783 = vadd.f32 0.0, %v1782
      %1784 = vmatmul.f32.gmra.mxu0 %v1725
      %v1785 = vpop.f32.mrf.mxu0
      %v1786 = vadd.f32 0.0, %v1785
      %1787 = vmatmul.f32.gmra.mxu0 %v1727
      %v1788 = vpop.f32.mrf.mxu0
      %v1789 = vadd.f32 0.0, %v1788
      %1790 = vmatmul.f32.gmra.mxu0 %v1729
      %v1791 = vpop.f32.mrf.mxu0
      %v1792 = vadd.f32 0.0, %v1791
      %1793 = vmatmul.f32.gmra.mxu0 %v1731
      %v1794 = vpop.f32.mrf.mxu0
      %v1795 = vadd.f32 0.0, %v1794
      %1796 = vmatmul.f32.gmra.mxu0 %v1733
      %v1797 = vpop.f32.mrf.mxu0
      %v1798 = vadd.f32 0.0, %v1797
      %1799 = vmatmul.f32.gmra.mxu0 %v1732
      %v1800 = vpop.f32.mrf.mxu0
      %v1801 = vadd.f32 0.0, %v1800
      %1802 = vdwg.mxu0
      %v1803 = vadd.f32 %v1679, %v1765
      %v1804 = vadd.f32 %v1680, %v1768
      %v1805 = vadd.f32 %v1681, %v1771
      %v1806 = vadd.f32 %v1682, %v1774
      %v1807 = vadd.f32 %v1683, %v1777
      %v1808 = vadd.f32 %v1684, %v1780
      %v1809 = vadd.f32 %v1685, %v1783
      %v1810 = vadd.f32 %v1686, %v1786
      %v1811 = vadd.f32 %v1687, %v1789
      %v1812 = vadd.f32 %v1688, %v1792
      %v1813 = vadd.f32 %v1689, %v1795
      %v1814 = vadd.f32 %v1690, %v1798
      %v1815 = vadd.f32 %v1691, %v1801
      %v1816 = vld [vmem:[%s4] sm:$0x1]
      %v1818 = vperm.slane %v1816, 0
      %v1820 = vadd.f32 %v1803, %v1818
      %v1821 = vadd.f32 %v1804, %v1818
      %v1822 = vadd.f32 %v1805, %v1818
      %v1823 = vadd.f32 %v1806, %v1818
      %v1824 = vadd.f32 %v1807, %v1818
      %v1825 = vadd.f32 %v1808, %v1818
      %v1826 = vadd.f32 %v1809, %v1818
      %v1827 = vadd.f32 %v1810, %v1818
      %v1828 = vadd.f32 %v1811, %v1818
      %v1829 = vadd.f32 %v1812, %v1818
      %v1830 = vadd.f32 %v1813, %v1818
      %v1831 = vadd.f32 %v1814, %v1818
      %v1832 = vadd.f32 %v1815, %v1818
      %v1833 = vmax.f32 %v1820, 0.0
      %v1834 = vmax.f32 %v1821, 0.0
      %v1835 = vmax.f32 %v1822, 0.0
      %v1836 = vmax.f32 %v1823, 0.0
      %v1837 = vmax.f32 %v1824, 0.0
      %v1838 = vmax.f32 %v1825, 0.0
      %v1839 = vmax.f32 %v1826, 0.0
      %v1840 = vmax.f32 %v1827, 0.0
      %v1841 = vmax.f32 %v1828, 0.0
      %v1842 = vmax.f32 %v1829, 0.0
      %v1843 = vmax.f32 %v1830, 0.0
      %v1844 = vmax.f32 %v1831, 0.0
      %v1845 = vmax.f32 %v1832, 0.0
      %v1846 = vld [vmem:[%s5] sm:$0xff]
      %v1847 = vld [vmem:[%s5 + $0x8] sm:$0xff]
      %v1848 = vld [vmem:[%s5 + $0x10] sm:$0xff]
      %v1849 = vld [vmem:[%s5 + $0x18] sm:$0xff]
      %v1850 = vld [vmem:[%s5 + $0x20] sm:$0xff]
      %v1851 = vld [vmem:[%s5 + $0x28] sm:$0xff]
      %v1852 = vld [vmem:[%s5 + $0x30] sm:$0xff]
      %v1853 = vld [vmem:[%s5 + $0x38] sm:$0xff]
      %v1854 = vld [vmem:[%s5 + $0x40] sm:$0xff]
      %v1855 = vld [vmem:[%s5 + $0x48] sm:$0xff]
      %v1856 = vld [vmem:[%s5 + $0x50] sm:$0xff]
      %v1857 = vld [vmem:[%s5 + $0x58] sm:$0xff]
      %v1858 = vld [vmem:[%s5 + $0x60] sm:$0xff]
      %v1859 = vld [vmem:[%s5 + $0x68] sm:$0xff]
      %v1860 = vld [vmem:[%s5 + $0x70] sm:$0xff]
      %v1861 = vld [vmem:[%s5 + $0x78] sm:$0xff]
      %s1862 = scalar_lea.vmem %s5, 128
      %v1863 = vld [vmem:[%s1862] sm:$0xff]
      %v1864 = vld [vmem:[%s1862 + $0x8] sm:$0xff]
      %v1865 = vld [vmem:[%s1862 + $0x10] sm:$0xff]
      %v1866 = vld [vmem:[%s1862 + $0x18] sm:$0xff]
      %v1867 = vld [vmem:[%s1862 + $0x20] sm:$0xff]
      %v1868 = vld [vmem:[%s1862 + $0x28] sm:$0xff]
      %v1869 = vld [vmem:[%s1862 + $0x30] sm:$0xff]
      %v1870 = vld [vmem:[%s1862 + $0x38] sm:$0xff]
      %v1871 = vld [vmem:[%s1862 + $0x40] sm:$0xff]
      %v1872 = vld [vmem:[%s1862 + $0x48] sm:$0xff]
      %v1873 = vld [vmem:[%s1862 + $0x50] sm:$0xff]
      %v1874 = vld [vmem:[%s1862 + $0x58] sm:$0xff]
      %v1875 = vld [vmem:[%s1862 + $0x60] sm:$0xff]
      %v1876 = vld [vmem:[%s1862 + $0x68] sm:$0xff]
      %v1877 = vld [vmem:[%s1862 + $0x70] sm:$0xff]
      %v1878 = vld [vmem:[%s1862 + $0x78] sm:$0xff]
      %v1889 = vrot.slane %v1833, 1
      %v1890 = vrot.slane %v1834, 1
      %v1891 = vsel %vm404, %v1889, %v1890
      %v1892 = vrot.slane %v1835, 1
      %v1893 = vsel %vm404, %v1890, %v1892
      %v1894 = vrot.slane %v1836, 1
      %v1895 = vsel %vm404, %v1892, %v1894
      %v1896 = vrot.slane %v1837, 1
      %v1897 = vsel %vm404, %v1894, %v1896
      %v1898 = vrot.slane %v1838, 1
      %v1899 = vsel %vm404, %v1896, %v1898
      %v1900 = vrot.slane %v1839, 1
      %v1901 = vsel %vm404, %v1898, %v1900
      %v1902 = vrot.slane %v1840, 1
      %v1903 = vsel %vm404, %v1900, %v1902
      %v1904 = vrot.slane %v1841, 1
      %v1905 = vsel %vm404, %v1902, %v1904
      %v1906 = vrot.slane %v1842, 1
      %v1907 = vsel %vm404, %v1904, %v1906
      %1918 = vmatpush.msra.mxu0 %v1878
      %1919 = vmatpush.msra.mxu0 %v1877
      %1920 = vmatpush.msra.mxu0 %v1876
      %1921 = vmatpush.msra.mxu0 %v1875
      %1922 = vmatpush.msra.mxu0 %v1874
      %1923 = vmatpush.msra.mxu0 %v1873
      %1924 = vmatpush.msra.mxu0 %v1872
      %1925 = vmatpush.msra.mxu0 %v1871
      %1926 = vmatpush.msra.mxu0 %v1870
      %1927 = vmatpush.msra.mxu0 %v1869
      %1928 = vmatpush.msra.mxu0 %v1868
      %1929 = vmatpush.msra.mxu0 %v1867
      %1930 = vmatpush.msra.mxu0 %v1866
      %1931 = vmatpush.msra.mxu0 %v1865
      %1932 = vmatpush.msra.mxu0 %v1864
      %1933 = vmatpush.msra.mxu0 %v1863
      %1934 = vmatmul.f32.gmra.mxu0 %v1891
      %v1935 = vpop.f32.mrf.mxu0
      %v1936 = vadd.f32 0.0, %v1935
      %1937 = vmatmul.f32.gmra.mxu0 %v1893
      %v1938 = vpop.f32.mrf.mxu0
      %v1939 = vadd.f32 0.0, %v1938
      %1940 = vmatmul.f32.gmra.mxu0 %v1895
      %v1941 = vpop.f32.mrf.mxu0
      %v1942 = vadd.f32 0.0, %v1941
      %1943 = vmatmul.f32.gmra.mxu0 %v1897
      %v1944 = vpop.f32.mrf.mxu0
      %v1945 = vadd.f32 0.0, %v1944
      %1946 = vmatmul.f32.gmra.mxu0 %v1899
      %v1947 = vpop.f32.mrf.mxu0
      %v1948 = vadd.f32 0.0, %v1947
      %1949 = vmatmul.f32.gmra.mxu0 %v1901
      %v1950 = vpop.f32.mrf.mxu0
      %v1951 = vadd.f32 0.0, %v1950
      %1952 = vmatmul.f32.gmra.mxu0 %v1903
      %v1953 = vpop.f32.mrf.mxu0
      %v1954 = vadd.f32 0.0, %v1953
      %1955 = vmatmul.f32.gmra.mxu0 %v1905
      %v1956 = vpop.f32.mrf.mxu0
      %v1957 = vadd.f32 0.0, %v1956
      %1958 = vmatmul.f32.gmra.mxu0 %v1907
      %v1959 = vpop.f32.mrf.mxu0
      %v1960 = vadd.f32 0.0, %v1959
      %1961 = vmatmul.f32.gmra.mxu0 %v1906
      %v1962 = vpop.f32.mrf.mxu0
      %v1963 = vadd.f32 0.0, %v1962
      %1964 = vdwg.mxu0
      %1965 = vmatpush.msra.mxu0 %v1861
      %1966 = vmatpush.msra.mxu0 %v1860
      %1967 = vmatpush.msra.mxu0 %v1859
      %1968 = vmatpush.msra.mxu0 %v1858
      %1969 = vmatpush.msra.mxu0 %v1857
      %1970 = vmatpush.msra.mxu0 %v1856
      %1971 = vmatpush.msra.mxu0 %v1855
      %1972 = vmatpush.msra.mxu0 %v1854
      %1973 = vmatpush.msra.mxu0 %v1853
      %1974 = vmatpush.msra.mxu0 %v1852
      %1975 = vmatpush.msra.mxu0 %v1851
      %1976 = vmatpush.msra.mxu0 %v1850
      %1977 = vmatpush.msra.mxu0 %v1849
      %1978 = vmatpush.msra.mxu0 %v1848
      %1979 = vmatpush.msra.mxu0 %v1847
      %1980 = vmatpush.msra.mxu0 %v1846
      %1981 = vmatmul.f32.gmra.mxu0 %v1833
      %v1982 = vpop.f32.mrf.mxu0
      %v1983 = vadd.f32 %v1936, %v1982
      %1984 = vmatmul.f32.gmra.mxu0 %v1834
      %v1985 = vpop.f32.mrf.mxu0
      %v1986 = vadd.f32 %v1939, %v1985
      %1987 = vmatmul.f32.gmra.mxu0 %v1835
      %v1988 = vpop.f32.mrf.mxu0
      %v1989 = vadd.f32 %v1942, %v1988
      %1990 = vmatmul.f32.gmra.mxu0 %v1836
      %v1991 = vpop.f32.mrf.mxu0
      %v1992 = vadd.f32 %v1945, %v1991
      %1993 = vmatmul.f32.gmra.mxu0 %v1837
      %v1994 = vpop.f32.mrf.mxu0
      %v1995 = vadd.f32 %v1948, %v1994
      %1996 = vmatmul.f32.gmra.mxu0 %v1838
      %v1997 = vpop.f32.mrf.mxu0
      %v1998 = vadd.f32 %v1951, %v1997
      %1999 = vmatmul.f32.gmra.mxu0 %v1839
      %v2000 = vpop.f32.mrf.mxu0
      %v2001 = vadd.f32 %v1954, %v2000
      %2002 = vmatmul.f32.gmra.mxu0 %v1840
      %v2003 = vpop.f32.mrf.mxu0
      %v2004 = vadd.f32 %v1957, %v2003
      %2005 = vmatmul.f32.gmra.mxu0 %v1841
      %v2006 = vpop.f32.mrf.mxu0
      %v2007 = vadd.f32 %v1960, %v2006
      %2008 = vmatmul.f32.gmra.mxu0 %v1842
      %v2009 = vpop.f32.mrf.mxu0
      %v2010 = vadd.f32 %v1963, %v2009
      %2011 = vdwg.mxu0
      %s2012 = scalar_lea.vmem %s5, 256
      %v2013 = vld [vmem:[%s2012] sm:$0xff]
      %v2014 = vld [vmem:[%s2012 + $0x8] sm:$0xff]
      %v2015 = vld [vmem:[%s2012 + $0x10] sm:$0xff]
      %v2016 = vld [vmem:[%s2012 + $0x18] sm:$0xff]
      %v2017 = vld [vmem:[%s2012 + $0x20] sm:$0xff]
      %v2018 = vld [vmem:[%s2012 + $0x28] sm:$0xff]
      %v2019 = vld [vmem:[%s2012 + $0x30] sm:$0xff]
      %v2020 = vld [vmem:[%s2012 + $0x38] sm:$0xff]
      %v2021 = vld [vmem:[%s2012 + $0x40] sm:$0xff]
      %v2022 = vld [vmem:[%s2012 + $0x48] sm:$0xff]
      %v2023 = vld [vmem:[%s2012 + $0x50] sm:$0xff]
      %v2024 = vld [vmem:[%s2012 + $0x58] sm:$0xff]
      %v2025 = vld [vmem:[%s2012 + $0x60] sm:$0xff]
      %v2026 = vld [vmem:[%s2012 + $0x68] sm:$0xff]
      %v2027 = vld [vmem:[%s2012 + $0x70] sm:$0xff]
      %v2028 = vld [vmem:[%s2012 + $0x78] sm:$0xff]
      %vm2029 = vcmask 1045504
      %v2030 = vrot.slane %v1833, 2
      %v2031 = vrot.slane %v1834, 2
      %v2032 = vsel %vm2029, %v2030, %v2031
      %v2033 = vrot.slane %v1835, 2
      %v2034 = vsel %vm2029, %v2031, %v2033
      %v2035 = vrot.slane %v1836, 2
      %v2036 = vsel %vm2029, %v2033, %v2035
      %v2037 = vrot.slane %v1837, 2
      %v2038 = vsel %vm2029, %v2035, %v2037
      %v2039 = vrot.slane %v1838, 2
      %v2040 = vsel %vm2029, %v2037, %v2039
      %v2041 = vrot.slane %v1839, 2
      %v2042 = vsel %vm2029, %v2039, %v2041
      %v2043 = vrot.slane %v1840, 2
      %v2044 = vsel %vm2029, %v2041, %v2043
      %v2045 = vrot.slane %v1841, 2
      %v2046 = vsel %vm2029, %v2043, %v2045
      %v2047 = vrot.slane %v1842, 2
      %v2048 = vsel %vm2029, %v2045, %v2047
      %2059 = vmatpush.msra.mxu0 %v2028
      %2060 = vmatpush.msra.mxu0 %v2027
      %2061 = vmatpush.msra.mxu0 %v2026
      %2062 = vmatpush.msra.mxu0 %v2025
      %2063 = vmatpush.msra.mxu0 %v2024
      %2064 = vmatpush.msra.mxu0 %v2023
      %2065 = vmatpush.msra.mxu0 %v2022
      %2066 = vmatpush.msra.mxu0 %v2021
      %2067 = vmatpush.msra.mxu0 %v2020
      %2068 = vmatpush.msra.mxu0 %v2019
      %2069 = vmatpush.msra.mxu0 %v2018
      %2070 = vmatpush.msra.mxu0 %v2017
      %2071 = vmatpush.msra.mxu0 %v2016
      %2072 = vmatpush.msra.mxu0 %v2015
      %2073 = vmatpush.msra.mxu0 %v2014
      %2074 = vmatpush.msra.mxu0 %v2013
      %2075 = vmatmul.f32.gmra.mxu0 %v2032
      %v2076 = vpop.f32.mrf.mxu0
      %v2077 = vadd.f32 0.0, %v2076
      %2078 = vmatmul.f32.gmra.mxu0 %v2034
      %v2079 = vpop.f32.mrf.mxu0
      %v2080 = vadd.f32 0.0, %v2079
      %2081 = vmatmul.f32.gmra.mxu0 %v2036
      %v2082 = vpop.f32.mrf.mxu0
      %v2083 = vadd.f32 0.0, %v2082
      %2084 = vmatmul.f32.gmra.mxu0 %v2038
      %v2085 = vpop.f32.mrf.mxu0
      %v2086 = vadd.f32 0.0, %v2085
      %2087 = vmatmul.f32.gmra.mxu0 %v2040
      %v2088 = vpop.f32.mrf.mxu0
      %v2089 = vadd.f32 0.0, %v2088
      %2090 = vmatmul.f32.gmra.mxu0 %v2042
      %v2091 = vpop.f32.mrf.mxu0
      %v2092 = vadd.f32 0.0, %v2091
      %2093 = vmatmul.f32.gmra.mxu0 %v2044
      %v2094 = vpop.f32.mrf.mxu0
      %v2095 = vadd.f32 0.0, %v2094
      %2096 = vmatmul.f32.gmra.mxu0 %v2046
      %v2097 = vpop.f32.mrf.mxu0
      %v2098 = vadd.f32 0.0, %v2097
      %2099 = vmatmul.f32.gmra.mxu0 %v2048
      %v2100 = vpop.f32.mrf.mxu0
      %v2101 = vadd.f32 0.0, %v2100
      %2102 = vmatmul.f32.gmra.mxu0 %v2047
      %v2103 = vpop.f32.mrf.mxu0
      %v2104 = vadd.f32 0.0, %v2103
      %2105 = vdwg.mxu0
      %v2106 = vadd.f32 %v1983, %v2077
      %v2107 = vadd.f32 %v1986, %v2080
      %v2108 = vadd.f32 %v1989, %v2083
      %v2109 = vadd.f32 %v1992, %v2086
      %v2110 = vadd.f32 %v1995, %v2089
      %v2111 = vadd.f32 %v1998, %v2092
      %v2112 = vadd.f32 %v2001, %v2095
      %v2113 = vadd.f32 %v2004, %v2098
      %v2114 = vadd.f32 %v2007, %v2101
      %v2115 = vadd.f32 %v2010, %v2104
      %s2116 = scalar_lea.vmem %s5, 384
      %v2117 = vld [vmem:[%s2116] sm:$0xff]
      %v2118 = vld [vmem:[%s2116 + $0x8] sm:$0xff]
      %v2119 = vld [vmem:[%s2116 + $0x10] sm:$0xff]
      %v2120 = vld [vmem:[%s2116 + $0x18] sm:$0xff]
      %v2121 = vld [vmem:[%s2116 + $0x20] sm:$0xff]
      %v2122 = vld [vmem:[%s2116 + $0x28] sm:$0xff]
      %v2123 = vld [vmem:[%s2116 + $0x30] sm:$0xff]
      %v2124 = vld [vmem:[%s2116 + $0x38] sm:$0xff]
      %v2125 = vld [vmem:[%s2116 + $0x40] sm:$0xff]
      %v2126 = vld [vmem:[%s2116 + $0x48] sm:$0xff]
      %v2127 = vld [vmem:[%s2116 + $0x50] sm:$0xff]
      %v2128 = vld [vmem:[%s2116 + $0x58] sm:$0xff]
      %v2129 = vld [vmem:[%s2116 + $0x60] sm:$0xff]
      %v2130 = vld [vmem:[%s2116 + $0x68] sm:$0xff]
      %v2131 = vld [vmem:[%s2116 + $0x70] sm:$0xff]
      %v2132 = vld [vmem:[%s2116 + $0x78] sm:$0xff]
      %v2134 = vrot.slane %v1834, 3
      %v2135 = vrot.slane %v1835, 3
      %v2136 = vsel %vm812, %v2134, %v2135
      %v2137 = vrot.slane %v1836, 3
      %v2138 = vsel %vm812, %v2135, %v2137
      %v2139 = vrot.slane %v1837, 3
      %v2140 = vsel %vm812, %v2137, %v2139
      %v2141 = vrot.slane %v1838, 3
      %v2142 = vsel %vm812, %v2139, %v2141
      %v2143 = vrot.slane %v1839, 3
      %v2144 = vsel %vm812, %v2141, %v2143
      %v2145 = vrot.slane %v1840, 3
      %v2146 = vsel %vm812, %v2143, %v2145
      %v2147 = vrot.slane %v1841, 3
      %v2148 = vsel %vm812, %v2145, %v2147
      %v2149 = vrot.slane %v1842, 3
      %v2150 = vsel %vm812, %v2147, %v2149
      %v2151 = vrot.slane %v1843, 3
      %v2152 = vsel %vm812, %v2149, %v2151
      %2163 = vmatpush.msra.mxu0 %v2132
      %2164 = vmatpush.msra.mxu0 %v2131
      %2165 = vmatpush.msra.mxu0 %v2130
      %2166 = vmatpush.msra.mxu0 %v2129
      %2167 = vmatpush.msra.mxu0 %v2128
      %2168 = vmatpush.msra.mxu0 %v2127
      %2169 = vmatpush.msra.mxu0 %v2126
      %2170 = vmatpush.msra.mxu0 %v2125
      %2171 = vmatpush.msra.mxu0 %v2124
      %2172 = vmatpush.msra.mxu0 %v2123
      %2173 = vmatpush.msra.mxu0 %v2122
      %2174 = vmatpush.msra.mxu0 %v2121
      %2175 = vmatpush.msra.mxu0 %v2120
      %2176 = vmatpush.msra.mxu0 %v2119
      %2177 = vmatpush.msra.mxu0 %v2118
      %2178 = vmatpush.msra.mxu0 %v2117
      %2179 = vmatmul.f32.gmra.mxu0 %v2136
      %v2180 = vpop.f32.mrf.mxu0
      %v2181 = vadd.f32 0.0, %v2180
      %2182 = vmatmul.f32.gmra.mxu0 %v2138
      %v2183 = vpop.f32.mrf.mxu0
      %v2184 = vadd.f32 0.0, %v2183
      %2185 = vmatmul.f32.gmra.mxu0 %v2140
      %v2186 = vpop.f32.mrf.mxu0
      %v2187 = vadd.f32 0.0, %v2186
      %2188 = vmatmul.f32.gmra.mxu0 %v2142
      %v2189 = vpop.f32.mrf.mxu0
      %v2190 = vadd.f32 0.0, %v2189
      %2191 = vmatmul.f32.gmra.mxu0 %v2144
      %v2192 = vpop.f32.mrf.mxu0
      %v2193 = vadd.f32 0.0, %v2192
      %2194 = vmatmul.f32.gmra.mxu0 %v2146
      %v2195 = vpop.f32.mrf.mxu0
      %v2196 = vadd.f32 0.0, %v2195
      %2197 = vmatmul.f32.gmra.mxu0 %v2148
      %v2198 = vpop.f32.mrf.mxu0
      %v2199 = vadd.f32 0.0, %v2198
      %2200 = vmatmul.f32.gmra.mxu0 %v2150
      %v2201 = vpop.f32.mrf.mxu0
      %v2202 = vadd.f32 0.0, %v2201
      %2203 = vmatmul.f32.gmra.mxu0 %v2152
      %v2204 = vpop.f32.mrf.mxu0
      %v2205 = vadd.f32 0.0, %v2204
      %2206 = vmatmul.f32.gmra.mxu0 %v2151
      %v2207 = vpop.f32.mrf.mxu0
      %v2208 = vadd.f32 0.0, %v2207
      %2209 = vdwg.mxu0
      %v2210 = vadd.f32 %v2106, %v2181
      %v2211 = vadd.f32 %v2107, %v2184
      %v2212 = vadd.f32 %v2108, %v2187
      %v2213 = vadd.f32 %v2109, %v2190
      %v2214 = vadd.f32 %v2110, %v2193
      %v2215 = vadd.f32 %v2111, %v2196
      %v2216 = vadd.f32 %v2112, %v2199
      %v2217 = vadd.f32 %v2113, %v2202
      %v2218 = vadd.f32 %v2114, %v2205
      %v2219 = vadd.f32 %v2115, %v2208
      %s2220 = scalar_lea.vmem %s5, 512
      %v2221 = vld [vmem:[%s2220] sm:$0xff]
      %v2222 = vld [vmem:[%s2220 + $0x8] sm:$0xff]
      %v2223 = vld [vmem:[%s2220 + $0x10] sm:$0xff]
      %v2224 = vld [vmem:[%s2220 + $0x18] sm:$0xff]
      %v2225 = vld [vmem:[%s2220 + $0x20] sm:$0xff]
      %v2226 = vld [vmem:[%s2220 + $0x28] sm:$0xff]
      %v2227 = vld [vmem:[%s2220 + $0x30] sm:$0xff]
      %v2228 = vld [vmem:[%s2220 + $0x38] sm:$0xff]
      %v2229 = vld [vmem:[%s2220 + $0x40] sm:$0xff]
      %v2230 = vld [vmem:[%s2220 + $0x48] sm:$0xff]
      %v2231 = vld [vmem:[%s2220 + $0x50] sm:$0xff]
      %v2232 = vld [vmem:[%s2220 + $0x58] sm:$0xff]
      %v2233 = vld [vmem:[%s2220 + $0x60] sm:$0xff]
      %v2234 = vld [vmem:[%s2220 + $0x68] sm:$0xff]
      %v2235 = vld [vmem:[%s2220 + $0x70] sm:$0xff]
      %v2236 = vld [vmem:[%s2220 + $0x78] sm:$0xff]
      %v2237 = vrot.slane %v1834, 4
      %v2238 = vrot.slane %v1835, 4
      %v2239 = vsel %vm1120, %v2237, %v2238
      %v2240 = vrot.slane %v1836, 4
      %v2241 = vsel %vm1120, %v2238, %v2240
      %v2242 = vrot.slane %v1837, 4
      %v2243 = vsel %vm1120, %v2240, %v2242
      %v2244 = vrot.slane %v1838, 4
      %v2245 = vsel %vm1120, %v2242, %v2244
      %v2246 = vrot.slane %v1839, 4
      %v2247 = vsel %vm1120, %v2244, %v2246
      %v2248 = vrot.slane %v1840, 4
      %v2249 = vsel %vm1120, %v2246, %v2248
      %v2250 = vrot.slane %v1841, 4
      %v2251 = vsel %vm1120, %v2248, %v2250
      %v2252 = vrot.slane %v1842, 4
      %v2253 = vsel %vm1120, %v2250, %v2252
      %v2254 = vrot.slane %v1843, 4
      %v2255 = vsel %vm1120, %v2252, %v2254
      %2266 = vmatpush.msra.mxu0 %v2236
      %2267 = vmatpush.msra.mxu0 %v2235
      %2268 = vmatpush.msra.mxu0 %v2234
      %2269 = vmatpush.msra.mxu0 %v2233
      %2270 = vmatpush.msra.mxu0 %v2232
      %2271 = vmatpush.msra.mxu0 %v2231
      %2272 = vmatpush.msra.mxu0 %v2230
      %2273 = vmatpush.msra.mxu0 %v2229
      %2274 = vmatpush.msra.mxu0 %v2228
      %2275 = vmatpush.msra.mxu0 %v2227
      %2276 = vmatpush.msra.mxu0 %v2226
      %2277 = vmatpush.msra.mxu0 %v2225
      %2278 = vmatpush.msra.mxu0 %v2224
      %2279 = vmatpush.msra.mxu0 %v2223
      %2280 = vmatpush.msra.mxu0 %v2222
      %2281 = vmatpush.msra.mxu0 %v2221
      %2282 = vmatmul.f32.gmra.mxu0 %v2239
      %v2283 = vpop.f32.mrf.mxu0
      %v2284 = vadd.f32 0.0, %v2283
      %2285 = vmatmul.f32.gmra.mxu0 %v2241
      %v2286 = vpop.f32.mrf.mxu0
      %v2287 = vadd.f32 0.0, %v2286
      %2288 = vmatmul.f32.gmra.mxu0 %v2243
      %v2289 = vpop.f32.mrf.mxu0
      %v2290 = vadd.f32 0.0, %v2289
      %2291 = vmatmul.f32.gmra.mxu0 %v2245
      %v2292 = vpop.f32.mrf.mxu0
      %v2293 = vadd.f32 0.0, %v2292
      %2294 = vmatmul.f32.gmra.mxu0 %v2247
      %v2295 = vpop.f32.mrf.mxu0
      %v2296 = vadd.f32 0.0, %v2295
      %2297 = vmatmul.f32.gmra.mxu0 %v2249
      %v2298 = vpop.f32.mrf.mxu0
      %v2299 = vadd.f32 0.0, %v2298
      %2300 = vmatmul.f32.gmra.mxu0 %v2251
      %v2301 = vpop.f32.mrf.mxu0
      %v2302 = vadd.f32 0.0, %v2301
      %2303 = vmatmul.f32.gmra.mxu0 %v2253
      %v2304 = vpop.f32.mrf.mxu0
      %v2305 = vadd.f32 0.0, %v2304
      %2306 = vmatmul.f32.gmra.mxu0 %v2255
      %v2307 = vpop.f32.mrf.mxu0
      %v2308 = vadd.f32 0.0, %v2307
      %2309 = vmatmul.f32.gmra.mxu0 %v2254
      %v2310 = vpop.f32.mrf.mxu0
      %v2311 = vadd.f32 0.0, %v2310
      %2312 = vdwg.mxu0
      %v2313 = vadd.f32 %v2210, %v2284
      %v2314 = vadd.f32 %v2211, %v2287
      %v2315 = vadd.f32 %v2212, %v2290
      %v2316 = vadd.f32 %v2213, %v2293
      %v2317 = vadd.f32 %v2214, %v2296
      %v2318 = vadd.f32 %v2215, %v2299
      %v2319 = vadd.f32 %v2216, %v2302
      %v2320 = vadd.f32 %v2217, %v2305
      %v2321 = vadd.f32 %v2218, %v2308
      %v2322 = vadd.f32 %v2219, %v2311
      %s2323 = scalar_lea.vmem %s5, 640
      %v2324 = vld [vmem:[%s2323] sm:$0xff]
      %v2325 = vld [vmem:[%s2323 + $0x8] sm:$0xff]
      %v2326 = vld [vmem:[%s2323 + $0x10] sm:$0xff]
      %v2327 = vld [vmem:[%s2323 + $0x18] sm:$0xff]
      %v2328 = vld [vmem:[%s2323 + $0x20] sm:$0xff]
      %v2329 = vld [vmem:[%s2323 + $0x28] sm:$0xff]
      %v2330 = vld [vmem:[%s2323 + $0x30] sm:$0xff]
      %v2331 = vld [vmem:[%s2323 + $0x38] sm:$0xff]
      %v2332 = vld [vmem:[%s2323 + $0x40] sm:$0xff]
      %v2333 = vld [vmem:[%s2323 + $0x48] sm:$0xff]
      %v2334 = vld [vmem:[%s2323 + $0x50] sm:$0xff]
      %v2335 = vld [vmem:[%s2323 + $0x58] sm:$0xff]
      %v2336 = vld [vmem:[%s2323 + $0x60] sm:$0xff]
      %v2337 = vld [vmem:[%s2323 + $0x68] sm:$0xff]
      %v2338 = vld [vmem:[%s2323 + $0x70] sm:$0xff]
      %v2339 = vld [vmem:[%s2323 + $0x78] sm:$0xff]
      %vm2340 = vcmask 1042432
      %v2341 = vrot.slane %v1834, 5
      %v2342 = vrot.slane %v1835, 5
      %v2343 = vsel %vm2340, %v2341, %v2342
      %v2344 = vrot.slane %v1836, 5
      %v2345 = vsel %vm2340, %v2342, %v2344
      %v2346 = vrot.slane %v1837, 5
      %v2347 = vsel %vm2340, %v2344, %v2346
      %v2348 = vrot.slane %v1838, 5
      %v2349 = vsel %vm2340, %v2346, %v2348
      %v2350 = vrot.slane %v1839, 5
      %v2351 = vsel %vm2340, %v2348, %v2350
      %v2352 = vrot.slane %v1840, 5
      %v2353 = vsel %vm2340, %v2350, %v2352
      %v2354 = vrot.slane %v1841, 5
      %v2355 = vsel %vm2340, %v2352, %v2354
      %v2356 = vrot.slane %v1842, 5
      %v2357 = vsel %vm2340, %v2354, %v2356
      %v2358 = vrot.slane %v1843, 5
      %v2359 = vsel %vm2340, %v2356, %v2358
      %2370 = vmatpush.msra.mxu0 %v2339
      %2371 = vmatpush.msra.mxu0 %v2338
      %2372 = vmatpush.msra.mxu0 %v2337
      %2373 = vmatpush.msra.mxu0 %v2336
      %2374 = vmatpush.msra.mxu0 %v2335
      %2375 = vmatpush.msra.mxu0 %v2334
      %2376 = vmatpush.msra.mxu0 %v2333
      %2377 = vmatpush.msra.mxu0 %v2332
      %2378 = vmatpush.msra.mxu0 %v2331
      %2379 = vmatpush.msra.mxu0 %v2330
      %2380 = vmatpush.msra.mxu0 %v2329
      %2381 = vmatpush.msra.mxu0 %v2328
      %2382 = vmatpush.msra.mxu0 %v2327
      %2383 = vmatpush.msra.mxu0 %v2326
      %2384 = vmatpush.msra.mxu0 %v2325
      %2385 = vmatpush.msra.mxu0 %v2324
      %2386 = vmatmul.f32.gmra.mxu0 %v2343
      %v2387 = vpop.f32.mrf.mxu0
      %v2388 = vadd.f32 0.0, %v2387
      %2389 = vmatmul.f32.gmra.mxu0 %v2345
      %v2390 = vpop.f32.mrf.mxu0
      %v2391 = vadd.f32 0.0, %v2390
      %2392 = vmatmul.f32.gmra.mxu0 %v2347
      %v2393 = vpop.f32.mrf.mxu0
      %v2394 = vadd.f32 0.0, %v2393
      %2395 = vmatmul.f32.gmra.mxu0 %v2349
      %v2396 = vpop.f32.mrf.mxu0
      %v2397 = vadd.f32 0.0, %v2396
      %2398 = vmatmul.f32.gmra.mxu0 %v2351
      %v2399 = vpop.f32.mrf.mxu0
      %v2400 = vadd.f32 0.0, %v2399
      %2401 = vmatmul.f32.gmra.mxu0 %v2353
      %v2402 = vpop.f32.mrf.mxu0
      %v2403 = vadd.f32 0.0, %v2402
      %2404 = vmatmul.f32.gmra.mxu0 %v2355
      %v2405 = vpop.f32.mrf.mxu0
      %v2406 = vadd.f32 0.0, %v2405
      %2407 = vmatmul.f32.gmra.mxu0 %v2357
      %v2408 = vpop.f32.mrf.mxu0
      %v2409 = vadd.f32 0.0, %v2408
      %2410 = vmatmul.f32.gmra.mxu0 %v2359
      %v2411 = vpop.f32.mrf.mxu0
      %v2412 = vadd.f32 0.0, %v2411
      %2413 = vmatmul.f32.gmra.mxu0 %v2358
      %v2414 = vpop.f32.mrf.mxu0
      %v2415 = vadd.f32 0.0, %v2414
      %2416 = vdwg.mxu0
      %v2417 = vadd.f32 %v2313, %v2388
      %v2418 = vadd.f32 %v2314, %v2391
      %v2419 = vadd.f32 %v2315, %v2394
      %v2420 = vadd.f32 %v2316, %v2397
      %v2421 = vadd.f32 %v2317, %v2400
      %v2422 = vadd.f32 %v2318, %v2403
      %v2423 = vadd.f32 %v2319, %v2406
      %v2424 = vadd.f32 %v2320, %v2409
      %v2425 = vadd.f32 %v2321, %v2412
      %v2426 = vadd.f32 %v2322, %v2415
      %s2427 = scalar_lea.vmem %s5, 768
      %v2428 = vld [vmem:[%s2427] sm:$0xff]
      %v2429 = vld [vmem:[%s2427 + $0x8] sm:$0xff]
      %v2430 = vld [vmem:[%s2427 + $0x10] sm:$0xff]
      %v2431 = vld [vmem:[%s2427 + $0x18] sm:$0xff]
      %v2432 = vld [vmem:[%s2427 + $0x20] sm:$0xff]
      %v2433 = vld [vmem:[%s2427 + $0x28] sm:$0xff]
      %v2434 = vld [vmem:[%s2427 + $0x30] sm:$0xff]
      %v2435 = vld [vmem:[%s2427 + $0x38] sm:$0xff]
      %v2436 = vld [vmem:[%s2427 + $0x40] sm:$0xff]
      %v2437 = vld [vmem:[%s2427 + $0x48] sm:$0xff]
      %v2438 = vld [vmem:[%s2427 + $0x50] sm:$0xff]
      %v2439 = vld [vmem:[%s2427 + $0x58] sm:$0xff]
      %v2440 = vld [vmem:[%s2427 + $0x60] sm:$0xff]
      %v2441 = vld [vmem:[%s2427 + $0x68] sm:$0xff]
      %v2442 = vld [vmem:[%s2427 + $0x70] sm:$0xff]
      %v2443 = vld [vmem:[%s2427 + $0x78] sm:$0xff]
      %vm2445 = vcmask 1041408
      %v2446 = vrot.slane %v1835, 6
      %v2447 = vrot.slane %v1836, 6
      %v2448 = vsel %vm2445, %v2446, %v2447
      %v2449 = vrot.slane %v1837, 6
      %v2450 = vsel %vm2445, %v2447, %v2449
      %v2451 = vrot.slane %v1838, 6
      %v2452 = vsel %vm2445, %v2449, %v2451
      %v2453 = vrot.slane %v1839, 6
      %v2454 = vsel %vm2445, %v2451, %v2453
      %v2455 = vrot.slane %v1840, 6
      %v2456 = vsel %vm2445, %v2453, %v2455
      %v2457 = vrot.slane %v1841, 6
      %v2458 = vsel %vm2445, %v2455, %v2457
      %v2459 = vrot.slane %v1842, 6
      %v2460 = vsel %vm2445, %v2457, %v2459
      %v2461 = vrot.slane %v1843, 6
      %v2462 = vsel %vm2445, %v2459, %v2461
      %v2463 = vrot.slane %v1844, 6
      %v2464 = vsel %vm2445, %v2461, %v2463
      %2475 = vmatpush.msra.mxu0 %v2443
      %2476 = vmatpush.msra.mxu0 %v2442
      %2477 = vmatpush.msra.mxu0 %v2441
      %2478 = vmatpush.msra.mxu0 %v2440
      %2479 = vmatpush.msra.mxu0 %v2439
      %2480 = vmatpush.msra.mxu0 %v2438
      %2481 = vmatpush.msra.mxu0 %v2437
      %2482 = vmatpush.msra.mxu0 %v2436
      %2483 = vmatpush.msra.mxu0 %v2435
      %2484 = vmatpush.msra.mxu0 %v2434
      %2485 = vmatpush.msra.mxu0 %v2433
      %2486 = vmatpush.msra.mxu0 %v2432
      %2487 = vmatpush.msra.mxu0 %v2431
      %2488 = vmatpush.msra.mxu0 %v2430
      %2489 = vmatpush.msra.mxu0 %v2429
      %2490 = vmatpush.msra.mxu0 %v2428
      %2491 = vmatmul.f32.gmra.mxu0 %v2448
      %v2492 = vpop.f32.mrf.mxu0
      %v2493 = vadd.f32 0.0, %v2492
      %2494 = vmatmul.f32.gmra.mxu0 %v2450
      %v2495 = vpop.f32.mrf.mxu0
      %v2496 = vadd.f32 0.0, %v2495
      %2497 = vmatmul.f32.gmra.mxu0 %v2452
      %v2498 = vpop.f32.mrf.mxu0
      %v2499 = vadd.f32 0.0, %v2498
      %2500 = vmatmul.f32.gmra.mxu0 %v2454
      %v2501 = vpop.f32.mrf.mxu0
      %v2502 = vadd.f32 0.0, %v2501
      %2503 = vmatmul.f32.gmra.mxu0 %v2456
      %v2504 = vpop.f32.mrf.mxu0
      %v2505 = vadd.f32 0.0, %v2504
      %2506 = vmatmul.f32.gmra.mxu0 %v2458
      %v2507 = vpop.f32.mrf.mxu0
      %v2508 = vadd.f32 0.0, %v2507
      %2509 = vmatmul.f32.gmra.mxu0 %v2460
      %v2510 = vpop.f32.mrf.mxu0
      %v2511 = vadd.f32 0.0, %v2510
      %2512 = vmatmul.f32.gmra.mxu0 %v2462
      %v2513 = vpop.f32.mrf.mxu0
      %v2514 = vadd.f32 0.0, %v2513
      %2515 = vmatmul.f32.gmra.mxu0 %v2464
      %v2516 = vpop.f32.mrf.mxu0
      %v2517 = vadd.f32 0.0, %v2516
      %2518 = vmatmul.f32.gmra.mxu0 %v2463
      %v2519 = vpop.f32.mrf.mxu0
      %v2520 = vadd.f32 0.0, %v2519
      %2521 = vdwg.mxu0
      %v2522 = vadd.f32 %v2417, %v2493
      %v2523 = vadd.f32 %v2418, %v2496
      %v2524 = vadd.f32 %v2419, %v2499
      %v2525 = vadd.f32 %v2420, %v2502
      %v2526 = vadd.f32 %v2421, %v2505
      %v2527 = vadd.f32 %v2422, %v2508
      %v2528 = vadd.f32 %v2423, %v2511
      %v2529 = vadd.f32 %v2424, %v2514
      %v2530 = vadd.f32 %v2425, %v2517
      %v2531 = vadd.f32 %v2426, %v2520
      %s2532 = scalar_lea.vmem %s5, 896
      %v2533 = vld [vmem:[%s2532] sm:$0xff]
      %v2534 = vld [vmem:[%s2532 + $0x8] sm:$0xff]
      %v2535 = vld [vmem:[%s2532 + $0x10] sm:$0xff]
      %v2536 = vld [vmem:[%s2532 + $0x18] sm:$0xff]
      %v2537 = vld [vmem:[%s2532 + $0x20] sm:$0xff]
      %v2538 = vld [vmem:[%s2532 + $0x28] sm:$0xff]
      %v2539 = vld [vmem:[%s2532 + $0x30] sm:$0xff]
      %v2540 = vld [vmem:[%s2532 + $0x38] sm:$0xff]
      %v2541 = vld [vmem:[%s2532 + $0x40] sm:$0xff]
      %v2542 = vld [vmem:[%s2532 + $0x48] sm:$0xff]
      %v2543 = vld [vmem:[%s2532 + $0x50] sm:$0xff]
      %v2544 = vld [vmem:[%s2532 + $0x58] sm:$0xff]
      %v2545 = vld [vmem:[%s2532 + $0x60] sm:$0xff]
      %v2546 = vld [vmem:[%s2532 + $0x68] sm:$0xff]
      %v2547 = vld [vmem:[%s2532 + $0x70] sm:$0xff]
      %v2548 = vld [vmem:[%s2532 + $0x78] sm:$0xff]
      %vm2549 = vcmask 1040384
      %v2550 = vrot.slane %v1835, 7
      %v2551 = vrot.slane %v1836, 7
      %v2552 = vsel %vm2549, %v2550, %v2551
      %v2553 = vrot.slane %v1837, 7
      %v2554 = vsel %vm2549, %v2551, %v2553
      %v2555 = vrot.slane %v1838, 7
      %v2556 = vsel %vm2549, %v2553, %v2555
      %v2557 = vrot.slane %v1839, 7
      %v2558 = vsel %vm2549, %v2555, %v2557
      %v2559 = vrot.slane %v1840, 7
      %v2560 = vsel %vm2549, %v2557, %v2559
      %v2561 = vrot.slane %v1841, 7
      %v2562 = vsel %vm2549, %v2559, %v2561
      %v2563 = vrot.slane %v1842, 7
      %v2564 = vsel %vm2549, %v2561, %v2563
      %v2565 = vrot.slane %v1843, 7
      %v2566 = vsel %vm2549, %v2563, %v2565
      %v2567 = vrot.slane %v1844, 7
      %v2568 = vsel %vm2549, %v2565, %v2567
      %2579 = vmatpush.msra.mxu0 %v2548
      %2580 = vmatpush.msra.mxu0 %v2547
      %2581 = vmatpush.msra.mxu0 %v2546
      %2582 = vmatpush.msra.mxu0 %v2545
      %2583 = vmatpush.msra.mxu0 %v2544
      %2584 = vmatpush.msra.mxu0 %v2543
      %2585 = vmatpush.msra.mxu0 %v2542
      %2586 = vmatpush.msra.mxu0 %v2541
      %2587 = vmatpush.msra.mxu0 %v2540
      %2588 = vmatpush.msra.mxu0 %v2539
      %2589 = vmatpush.msra.mxu0 %v2538
      %2590 = vmatpush.msra.mxu0 %v2537
      %2591 = vmatpush.msra.mxu0 %v2536
      %2592 = vmatpush.msra.mxu0 %v2535
      %2593 = vmatpush.msra.mxu0 %v2534
      %2594 = vmatpush.msra.mxu0 %v2533
      %2595 = vmatmul.f32.gmra.mxu0 %v2552
      %v2596 = vpop.f32.mrf.mxu0
      %v2597 = vadd.f32 0.0, %v2596
      %2598 = vmatmul.f32.gmra.mxu0 %v2554
      %v2599 = vpop.f32.mrf.mxu0
      %v2600 = vadd.f32 0.0, %v2599
      %2601 = vmatmul.f32.gmra.mxu0 %v2556
      %v2602 = vpop.f32.mrf.mxu0
      %v2603 = vadd.f32 0.0, %v2602
      %2604 = vmatmul.f32.gmra.mxu0 %v2558
      %v2605 = vpop.f32.mrf.mxu0
      %v2606 = vadd.f32 0.0, %v2605
      %2607 = vmatmul.f32.gmra.mxu0 %v2560
      %v2608 = vpop.f32.mrf.mxu0
      %v2609 = vadd.f32 0.0, %v2608
      %2610 = vmatmul.f32.gmra.mxu0 %v2562
      %v2611 = vpop.f32.mrf.mxu0
      %v2612 = vadd.f32 0.0, %v2611
      %2613 = vmatmul.f32.gmra.mxu0 %v2564
      %v2614 = vpop.f32.mrf.mxu0
      %v2615 = vadd.f32 0.0, %v2614
      %2616 = vmatmul.f32.gmra.mxu0 %v2566
      %v2617 = vpop.f32.mrf.mxu0
      %v2618 = vadd.f32 0.0, %v2617
      %2619 = vmatmul.f32.gmra.mxu0 %v2568
      %v2620 = vpop.f32.mrf.mxu0
      %v2621 = vadd.f32 0.0, %v2620
      %2622 = vmatmul.f32.gmra.mxu0 %v2567
      %v2623 = vpop.f32.mrf.mxu0
      %v2624 = vadd.f32 0.0, %v2623
      %2625 = vdwg.mxu0
      %v2626 = vadd.f32 %v2522, %v2597
      %v2627 = vadd.f32 %v2523, %v2600
      %v2628 = vadd.f32 %v2524, %v2603
      %v2629 = vadd.f32 %v2525, %v2606
      %v2630 = vadd.f32 %v2526, %v2609
      %v2631 = vadd.f32 %v2527, %v2612
      %v2632 = vadd.f32 %v2528, %v2615
      %v2633 = vadd.f32 %v2529, %v2618
      %v2634 = vadd.f32 %v2530, %v2621
      %v2635 = vadd.f32 %v2531, %v2624
      %s2636 = scalar_lea.vmem %s5, 1024
      %v2637 = vld [vmem:[%s2636] sm:$0xff]
      %v2638 = vld [vmem:[%s2636 + $0x8] sm:$0xff]
      %v2639 = vld [vmem:[%s2636 + $0x10] sm:$0xff]
      %v2640 = vld [vmem:[%s2636 + $0x18] sm:$0xff]
      %v2641 = vld [vmem:[%s2636 + $0x20] sm:$0xff]
      %v2642 = vld [vmem:[%s2636 + $0x28] sm:$0xff]
      %v2643 = vld [vmem:[%s2636 + $0x30] sm:$0xff]
      %v2644 = vld [vmem:[%s2636 + $0x38] sm:$0xff]
      %v2645 = vld [vmem:[%s2636 + $0x40] sm:$0xff]
      %v2646 = vld [vmem:[%s2636 + $0x48] sm:$0xff]
      %v2647 = vld [vmem:[%s2636 + $0x50] sm:$0xff]
      %v2648 = vld [vmem:[%s2636 + $0x58] sm:$0xff]
      %v2649 = vld [vmem:[%s2636 + $0x60] sm:$0xff]
      %v2650 = vld [vmem:[%s2636 + $0x68] sm:$0xff]
      %v2651 = vld [vmem:[%s2636 + $0x70] sm:$0xff]
      %v2652 = vld [vmem:[%s2636 + $0x78] sm:$0xff]
      %2653 = vmatpush.msra.mxu0 %v2652
      %2654 = vmatpush.msra.mxu0 %v2651
      %2655 = vmatpush.msra.mxu0 %v2650
      %2656 = vmatpush.msra.mxu0 %v2649
      %2657 = vmatpush.msra.mxu0 %v2648
      %2658 = vmatpush.msra.mxu0 %v2647
      %2659 = vmatpush.msra.mxu0 %v2646
      %2660 = vmatpush.msra.mxu0 %v2645
      %2661 = vmatpush.msra.mxu0 %v2644
      %2662 = vmatpush.msra.mxu0 %v2643
      %2663 = vmatpush.msra.mxu0 %v2642
      %2664 = vmatpush.msra.mxu0 %v2641
      %2665 = vmatpush.msra.mxu0 %v2640
      %2666 = vmatpush.msra.mxu0 %v2639
      %2667 = vmatpush.msra.mxu0 %v2638
      %2668 = vmatpush.msra.mxu0 %v2637
      %2669 = vmatmul.f32.gmra.mxu0 %v1836
      %v2670 = vpop.f32.mrf.mxu0
      %v2671 = vadd.f32 0.0, %v2670
      %2672 = vmatmul.f32.gmra.mxu0 %v1837
      %v2673 = vpop.f32.mrf.mxu0
      %v2674 = vadd.f32 0.0, %v2673
      %2675 = vmatmul.f32.gmra.mxu0 %v1838
      %v2676 = vpop.f32.mrf.mxu0
      %v2677 = vadd.f32 0.0, %v2676
      %2678 = vmatmul.f32.gmra.mxu0 %v1839
      %v2679 = vpop.f32.mrf.mxu0
      %v2680 = vadd.f32 0.0, %v2679
      %2681 = vmatmul.f32.gmra.mxu0 %v1840
      %v2682 = vpop.f32.mrf.mxu0
      %v2683 = vadd.f32 0.0, %v2682
      %2684 = vmatmul.f32.gmra.mxu0 %v1841
      %v2685 = vpop.f32.mrf.mxu0
      %v2686 = vadd.f32 0.0, %v2685
      %2687 = vmatmul.f32.gmra.mxu0 %v1842
      %v2688 = vpop.f32.mrf.mxu0
      %v2689 = vadd.f32 0.0, %v2688
      %2690 = vmatmul.f32.gmra.mxu0 %v1843
      %v2691 = vpop.f32.mrf.mxu0
      %v2692 = vadd.f32 0.0, %v2691
      %2693 = vmatmul.f32.gmra.mxu0 %v1844
      %v2694 = vpop.f32.mrf.mxu0
      %v2695 = vadd.f32 0.0, %v2694
      %2696 = vmatmul.f32.gmra.mxu0 %v1845
      %v2697 = vpop.f32.mrf.mxu0
      %v2698 = vadd.f32 0.0, %v2697
      %2699 = vdwg.mxu0
      %v2700 = vadd.f32 %v2626, %v2671
      %v2701 = vadd.f32 %v2627, %v2674
      %v2702 = vadd.f32 %v2628, %v2677
      %v2703 = vadd.f32 %v2629, %v2680
      %v2704 = vadd.f32 %v2630, %v2683
      %v2705 = vadd.f32 %v2631, %v2686
      %v2706 = vadd.f32 %v2632, %v2689
      %v2707 = vadd.f32 %v2633, %v2692
      %v2708 = vadd.f32 %v2634, %v2695
      %v2709 = vadd.f32 %v2635, %v2698
      %v2710 = vld [vmem:[%s6] sm:$0x1]
      %v2712 = vperm.slane %v2710, 0
      %v2714 = vadd.f32 %v2700, %v2712
      %v2715 = vadd.f32 %v2701, %v2712
      %v2716 = vadd.f32 %v2702, %v2712
      %v2717 = vadd.f32 %v2703, %v2712
      %v2718 = vadd.f32 %v2704, %v2712
      %v2719 = vadd.f32 %v2705, %v2712
      %v2720 = vadd.f32 %v2706, %v2712
      %v2721 = vadd.f32 %v2707, %v2712
      %v2722 = vadd.f32 %v2708, %v2712
      %v2723 = vadd.f32 %v2709, %v2712
      %v2724 = vmax.f32 %v2714, 0.0
      %v2725 = vmax.f32 %v2715, 0.0
      %v2726 = vmax.f32 %v2716, 0.0
      %v2727 = vmax.f32 %v2717, 0.0
      %v2728 = vmax.f32 %v2718, 0.0
      %v2729 = vmax.f32 %v2719, 0.0
      %v2730 = vmax.f32 %v2720, 0.0
      %v2731 = vmax.f32 %v2721, 0.0
      %v2732 = vmax.f32 %v2722, 0.0
      %v2733 = vmax.f32 %v2723, 0.0
      %2734 = vst [vmem:[%s278] sm:$0x7f] %v2724
      %2735 = vst [vmem:[%s278 + $0x4] sm:$0xf8] %v2725
      %2736 = vst [vmem:[%s278 + $0xc] sm:$0x3] %v2726
      %2737 = vst [vmem:[%s278 + $0x8] sm:$0xc0] %v2726
      %2738 = vst [vmem:[%s278 + $0x10] sm:$0x1f] %v2727
      %2739 = vst [vmem:[%s278 + $0x14] sm:$0xfe] %v2728
      %2740 = vst [vmem:[%s278 + $0x18] sm:$0xf0] %v2729
      %2741 = vst [vmem:[%s278 + $0x20] sm:$0x7] %v2730
      %2742 = vst [vmem:[%s278 + $0x1c] sm:$0x80] %v2730
      %2743 = vst [vmem:[%s278 + $0x24] sm:$0x3f] %v2731
      %2744 = vst [vmem:[%s278 + $0x28] sm:$0xfc] %v2732
      %2745 = vst [vmem:[%s278 + $0x30] sm:$0x1] %v2733
      %p2746 = scmp.lt.s32.totalorder %s18, 1
      %s2747 = scalar_select %p2746, %s18, 1
      %s2748 = smul.addr %s2747, 7
      %s2749 = smul.addr %s2748, 8
      %s2750 = scalar_lea.vmem %s7, %s2749
      // Predicated region
      $region49: #{deepmind_forward.2} parent=47 // pred_check
        %p2751 = pneg %p188
      $region50: #{deepmind_forward.2} parent=47 // pred_check_branch
        %2753 = sbr.rel (%p2751) target = $region52
      $region51: #{deepmind_forward.2} parent=47 // pred_region
        _
      $region52: #{deepmind_forward.2} parent=47 // pred_fallthru
        _
    $region48: #{deepmind_forward.2} parent=5 // pred_fallthru
      _
    %p2754 = scmp.le.s32.totalorder 2, %s13
    // Predicated region
    $region53: #{deepmind_forward.2} parent=5 // pred_check
      %p2755 = pneg %p2754
    $region54: #{deepmind_forward.2} parent=5 // pred_check_branch
      %2757 = sbr.rel (%p2755) target = $region56
    $region55: #{deepmind_forward.2} parent=5 // pred_region
      %s2758 = ssub.s32 %s13, 2
      // Predicated region
      $region57: #{deepmind_forward.2} parent=55 // pred_check
        %p2759 = pneg %p194
      $region58: #{deepmind_forward.2} parent=55 // pred_check_branch
        %2761 = sbr.rel (%p2759) target = $region60
      $region59: #{deepmind_forward.2} parent=55 // pred_region
        %p2762 = scmp.lt.s32.totalorder %s19, 1
        %s2763 = scalar_select %p2762, %s19, 1
        %s2764 = smul.addr %s2763, 7
        %s2765 = smul.addr %s2764, 8
        %s2766 = scalar_lea.vmem %s7, %s2765
      $region60: #{deepmind_forward.2} parent=55 // pred_fallthru
        _
    $region56: #{deepmind_forward.2} parent=5 // pred_fallthru
      _
  $region6: #{deepmind_forward.2} parent=0 // loop_footer
    %s17 = sadd.s32 1, %s13
  $region7: #{deepmind_forward.2} parent=0 // loop_footer_branch
    %12 = sbr.rel target = $region3
  $region8: #{deepmind_forward.2} parent=0 // loop_exit
    _

// kernel: deepmind_forward.3
$region0: #{deepmind_forward.3}
  #allocation0 [shape = 'u32[]', space=smem, size = 0x4, offset = 0x4, fixed_abs, tag = 'smem constant byte address 0x4 - core index']
  #allocation1 [shape = 'u32[72,128]{1,0:T(1,128)}', space=vmem, size = 0x9000, scoped, tag = 'internal scratch']
  %s0 = inlined_call_operand.vmem [shape: f32[2,1568], index: 0, kind: input, shape index: {}]
  %s1 = inlined_call_operand.vmem [shape: f32[1568,512], index: 1, kind: input, shape index: {}]
  %s2 = inlined_call_operand.vmem [shape: f32[1,512], index: 2, kind: input, shape index: {}]
  %s3 = inlined_call_operand.hbm [shape: f32[2,512], index: 3, kind: output, shape index: {}]
  %s4 = sld [smem:[#allocation0]]
  $region68: #{deepmind_forward.3} parent=0
    _
  %s6 = ssub.s32 1, %s4
  %s7 = scalar_select 0, %s6, %s4
  $region1: #{deepmind_forward.3} parent=0
    #allocation2 [shape = 'u8[3211264]{0}', space=vmem, size = 0x310000, scoped, tag = 'input window, operand 1']
    #allocation3 [shape = 'u8[4096]{0}', space=vmem, size = 0x1000, scoped, tag = 'output window, operand 0']
    #allocation4 [shape = 's32[2]{0}', space=sflag, size = 0x8, scoped, tag = 'scoped memory for deepmind_forward.3']
    %8 = vsyncpa [#allocation4], 0
    %s9 = scalar_lea.sflag [#allocation4], 1
    %10 = vsyncpa %s9, 0
    loop: start=0, step=1, limit=4
    $region2: #{deepmind_forward.3} parent=1 // loop_pre_header
      _
    $region3: #{deepmind_forward.3} parent=1 // loop_header
      %s12 = sphi 0, %s16
      %p13 = scmp.ge.s32.totalorder %s12, 4
      %s19 = sphi 0, %s31
      %s20 = sphi 0, %s27
      %s21 = sphi 0, %s19
      %s22 = sphi 0, %s20
      %s23 = sphi 0, %s21
      %s24 = sphi 0, %s22
      %s34 = sphi 0, %s36
      %s37 = sphi 0, %s34
      %s38 = sphi 0, %s37
      %s54 = sphi 0, %s38
      %s60 = sphi 0, %s62
      %s63 = sphi 0, %s60
      %s64 = sphi 0, %s63
      %s80 = sphi 0, %s64
      %s86 = sphi 0, %s88
      %s89 = sphi 0, %s86
      %s90 = sphi 0, %s89
      %s106 = sphi 0, %s90
      %s114 = sphi 0, %s116
      %s117 = sphi 0, %s114
      %s118 = sphi 0, %s117
      %s134 = sphi 0, %s118
    $region4: #{deepmind_forward.3} parent=1 // loop_header_branch
      %15 = sbr.rel (%p13) target = $region8
    $region5: #{deepmind_forward.3} parent=1 // loop_body
      %s17 = ssub.s32 %s12, 1
      %s18 = ssub.s32 %s12, 2
      %s25 = sadd.s32 1, %s20
      %p26 = scmp.ge.s32.totalorder %s25, 2
      %s27 = scalar_select %p26, 0, %s25
      %s28 = sadd.s32 1, %s19
      %s29 = scalar_select %p26, %s28, %s19
      %p30 = scmp.ge.s32.totalorder %s29, 1
      %s31 = scalar_select %p30, 0, %s29
      %s32 = ssub.s32 %s19, %s31
      %p33 = scmp.eq.s32.totalorder %s32, 0
      %s35 = sadd.s32 %s34, 1
      %s36 = scalar_select %p33, %s34, %s35
      %p39 = pneg %p33
      %p40 = scmp.eq.s32.totalorder %s12, 1
      %p41 = por %p39, %p40
      %p42 = scmp.ne.s32.totalorder %s34, %s37
      %p43 = scmp.eq.s32.totalorder %s12, 0
      %p44 = por %p42, %p43
      %p45 = scmp.ne.s32.totalorder %s34, %s37
      %p46 = scmp.eq.s32.totalorder %s17, 1
      %p47 = por %p45, %p46
      %p48 = scmp.ne.s32.totalorder %s37, %s38
      %p49 = scmp.eq.s32.totalorder %s17, 0
      %p50 = por %p48, %p49
      %p51 = scmp.ne.s32.totalorder %s37, %s38
      %p52 = scmp.eq.s32.totalorder %s18, 1
      %p53 = por %p51, %p52
      %p55 = scmp.ne.s32.totalorder %s38, %s54
      %p56 = scmp.eq.s32.totalorder %s18, 0
      %p57 = por %p55, %p56
      %s58 = ssub.s32 %s20, %s27
      %p59 = scmp.eq.s32.totalorder %s58, 0
      %s61 = sadd.s32 %s60, 1
      %s62 = scalar_select %p59, %s60, %s61
      %p65 = pneg %p59
      %p66 = scmp.eq.s32.totalorder %s12, 1
      %p67 = por %p65, %p66
      %p68 = scmp.ne.s32.totalorder %s60, %s63
      %p69 = scmp.eq.s32.totalorder %s12, 0
      %p70 = por %p68, %p69
      %p71 = scmp.ne.s32.totalorder %s60, %s63
      %p72 = scmp.eq.s32.totalorder %s17, 1
      %p73 = por %p71, %p72
      %p74 = scmp.ne.s32.totalorder %s63, %s64
      %p75 = scmp.eq.s32.totalorder %s17, 0
      %p76 = por %p74, %p75
      %p77 = scmp.ne.s32.totalorder %s63, %s64
      %p78 = scmp.eq.s32.totalorder %s18, 1
      %p79 = por %p77, %p78
      %p81 = scmp.ne.s32.totalorder %s64, %s80
      %p82 = scmp.eq.s32.totalorder %s18, 0
      %p83 = por %p81, %p82
      %s84 = ssub.s32 %s20, %s27
      %p85 = scmp.eq.s32.totalorder %s84, 0
      %s87 = sadd.s32 %s86, 1
      %s88 = scalar_select %p85, %s86, %s87
      %p91 = pneg %p85
      %p92 = scmp.eq.s32.totalorder %s12, 1
      %p93 = por %p91, %p92
      %p94 = scmp.ne.s32.totalorder %s86, %s89
      %p95 = scmp.eq.s32.totalorder %s12, 0
      %p96 = por %p94, %p95
      %p97 = scmp.ne.s32.totalorder %s86, %s89
      %p98 = scmp.eq.s32.totalorder %s17, 1
      %p99 = por %p97, %p98
      %p100 = scmp.ne.s32.totalorder %s89, %s90
      %p101 = scmp.eq.s32.totalorder %s17, 0
      %p102 = por %p100, %p101
      %p103 = scmp.ne.s32.totalorder %s89, %s90
      %p104 = scmp.eq.s32.totalorder %s18, 1
      %p105 = por %p103, %p104
      %p107 = scmp.ne.s32.totalorder %s90, %s106
      %p108 = scmp.eq.s32.totalorder %s18, 0
      %p109 = por %p107, %p108
      %s110 = ssub.s32 %s19, %s31
      %s111 = ssub.s32 %s20, %s27
      %s112 = sor.u32 %s110, %s111
      %p113 = scmp.eq.s32.totalorder %s112, 0
      %s115 = sadd.s32 %s114, 1
      %s116 = scalar_select %p113, %s114, %s115
      %p119 = pneg %p113
      %p120 = scmp.eq.s32.totalorder %s12, 1
      %p121 = por %p119, %p120
      %p122 = scmp.ne.s32.totalorder %s114, %s117
      %p123 = scmp.eq.s32.totalorder %s12, 0
      %p124 = por %p122, %p123
      %p125 = scmp.ne.s32.totalorder %s114, %s117
      %p126 = scmp.eq.s32.totalorder %s17, 1
      %p127 = por %p125, %p126
      %p128 = scmp.ne.s32.totalorder %s117, %s118
      %p129 = scmp.eq.s32.totalorder %s17, 0
      %p130 = por %p128, %p129
      %p131 = scmp.ne.s32.totalorder %s117, %s118
      %p132 = scmp.eq.s32.totalorder %s18, 1
      %p133 = por %p131, %p132
      %p135 = scmp.ne.s32.totalorder %s118, %s134
      %p136 = scmp.eq.s32.totalorder %s18, 0
      %p137 = por %p135, %p136
      %p138 = scmp.le.s32.totalorder 1, %s12
      %p139 = scmp.lt.s32.totalorder %s12, 3
      %p140 = pnand %p138, %p139
      %p141 = pneg %p140
      // Predicated region
      $region9: #{deepmind_forward.3} parent=5 // pred_check
        _
      $region10: #{deepmind_forward.3} parent=5 // pred_check_branch
        %143 = sbr.rel (%p140) target = $region12
      $region11: #{deepmind_forward.3} parent=5 // pred_region
        %s144 = ssub.s32 %s12, 1
        // Predicated region
        $region13: #{deepmind_forward.3} parent=11 // pred_check
          %p145 = pneg %p50
        $region14: #{deepmind_forward.3} parent=11 // pred_check_branch
          %147 = sbr.rel (%p145) target = $region16
        $region15: #{deepmind_forward.3} parent=11 // pred_region
          %p148 = scmp.lt.s32.totalorder %s21, 0
          %s149 = scalar_select %p148, %s21, 0
          %s150 = smul.addr %s149, 13
          %s151 = smul.addr %s150, 2
          %s152 = scalar_lea.vmem %s0, %s151
        $region16: #{deepmind_forward.3} parent=11 // pred_fallthru
          _
      $region12: #{deepmind_forward.3} parent=5 // pred_fallthru
        _
      %p153 = scmp.lt.s32.totalorder %s12, 2
      // Predicated region
      $region17: #{deepmind_forward.3} parent=5 // pred_check
        %p154 = pneg %p153
      $region18: #{deepmind_forward.3} parent=5 // pred_check_branch
        %156 = sbr.rel (%p154) target = $region20
      $region19: #{deepmind_forward.3} parent=5 // pred_region
        // Predicated region
        $region21: #{deepmind_forward.3} parent=19 // pred_check
          %p157 = pneg %p70
        $region22: #{deepmind_forward.3} parent=19 // pred_check_branch
          %159 = sbr.rel (%p157) target = $region24
        $region23: #{deepmind_forward.3} parent=19 // pred_region
          %s160 = sand.u32 %s60, 1
          %s161 = sand.u32 %s60, 1
          %s162 = smul.addr %s161, 3136
          %s163 = scalar_lea.vmem [#allocation2], %s162
          %s164 = smul.u32 2, %s20
          %s165 = smul.addr %s164, 8
          %s166 = scalar_lea.vmem %s1, %s165
          // Predicated region
          $region25: #{deepmind_forward.3} parent=23 // pred_check
            _
          $region26: #{deepmind_forward.3} parent=23 // pred_check_branch
            %168 = sbr.rel (0) target = $region28
          $region27: #{deepmind_forward.3} parent=23 // pred_region
            // Predicated region
            $region29: #{deepmind_forward.3} parent=27 // pred_check
              _
            $region30: #{deepmind_forward.3} parent=27 // pred_check_branch
              %170 = sbr.rel (0) target = $region32
            $region31: #{deepmind_forward.3} parent=27 // pred_region
              loop: start=0, step=1, limit=1
              $region33: #{deepmind_forward.3} parent=31 // loop_pre_header
                _
              $region34: #{deepmind_forward.3} parent=31 // loop_header
                %s172 = sphi 0, %s176
                %p173 = scmp.ge.s32.totalorder %s172, 1
                %s177 = sphi %s166, %s166
                %s178 = sphi %s163, %s163
              $region35: #{deepmind_forward.3} parent=31 // loop_header_branch
                %175 = sbr.rel (%p173) target = $region39
              $region36: #{deepmind_forward.3} parent=31 // loop_body
                %v179 = vld [vmem:[%s177] sm:$0xff]
                %180 = vst [vmem:[%s178] sm:$0xff] %v179
                %v181 = vld [vmem:[%s177 + $0x8] sm:$0xff]
                %182 = vst [vmem:[%s178 + $0x8] sm:$0xff] %v181
                %v183 = vld [vmem:[%s177 + $0x20] sm:$0xff]
                %184 = vst [vmem:[%s178 + $0x10] sm:$0xff] %v183
                %v185 = vld [vmem:[%s177 + $0x28] sm:$0xff]
                %186 = vst [vmem:[%s178 + $0x18] sm:$0xff] %v185
                %v187 = vld [vmem:[%s177 + $0x40] sm:$0xff]
                %188 = vst [vmem:[%s178 + $0x20] sm:$0xff] %v187
                %v189 = vld [vmem:[%s177 + $0x48] sm:$0xff]
                %190 = vst [vmem:[%s178 + $0x28] sm:$0xff] %v189
                %v191 = vld [vmem:[%s177 + $0x60] sm:$0xff]
                %192 = vst [vmem:[%s178 + $0x30] sm:$0xff] %v191
                %v193 = vld [vmem:[%s177 + $0x68] sm:$0xff]
                %194 = vst [vmem:[%s178 + $0x38] sm:$0xff] %v193
                %v195 = vld [vmem:[%s177 + $0x80] sm:$0xff]
                %196 = vst [vmem:[%s178 + $0x40] sm:$0xff] %v195
                %v197 = vld [vmem:[%s177 + $0x88] sm:$0xff]
                %198 = vst [vmem:[%s178 + $0x48] sm:$0xff] %v197
                %v199 = vld [vmem:[%s177 + $0xa0] sm:$0xff]
                %200 = vst [vmem:[%s178 + $0x50] sm:$0xff] %v199
                %v201 = vld [vmem:[%s177 + $0xa8] sm:$0xff]
                %202 = vst [vmem:[%s178 + $0x58] sm:$0xff] %v201
                %v203 = vld [vmem:[%s177 + $0xc0] sm:$0xff]
                %204 = vst [vmem:[%s178 + $0x60] sm:$0xff] %v203
                %v205 = vld [vmem:[%s177 + $0xc8] sm:$0xff]
                %206 = vst [vmem:[%s178 + $0x68] sm:$0xff] %v205
                %v207 = vld [vmem:[%s177 + $0xe0] sm:$0xff]
                %208 = vst [vmem:[%s178 + $0x70] sm:$0xff] %v207
                %v209 = vld [vmem:[%s177 + $0xe8] sm:$0xff]
                %210 = vst [vmem:[%s178 + $0x78] sm:$0xff] %v209
                %v211 = vld [vmem:[%s177 + $0x100] sm:$0xff]
                %212 = vst [vmem:[%s178 + $0x80] sm:$0xff] %v211
                %v213 = vld [vmem:[%s177 + $0x108] sm:$0xff]
                %214 = vst [vmem:[%s178 + $0x88] sm:$0xff] %v213
                %v215 = vld [vmem:[%s177 + $0x120] sm:$0xff]
                %216 = vst [vmem:[%s178 + $0x90] sm:$0xff] %v215
                %v217 = vld [vmem:[%s177 + $0x128] sm:$0xff]
                %218 = vst [vmem:[%s178 + $0x98] sm:$0xff] %v217
                %v219 = vld [vmem:[%s177 + $0x140] sm:$0xff]
                %220 = vst [vmem:[%s178 + $0xa0] sm:$0xff] %v219
                %v221 = vld [vmem:[%s177 + $0x148] sm:$0xff]
                %222 = vst [vmem:[%s178 + $0xa8] sm:$0xff] %v221
                %v223 = vld [vmem:[%s177 + $0x160] sm:$0xff]
                %224 = vst [vmem:[%s178 + $0xb0] sm:$0xff] %v223
                %v225 = vld [vmem:[%s177 + $0x168] sm:$0xff]
                %226 = vst [vmem:[%s178 + $0xb8] sm:$0xff] %v225
                %v227 = vld [vmem:[%s177 + $0x180] sm:$0xff]
                %228 = vst [vmem:[%s178 + $0xc0] sm:$0xff] %v227
                %v229 = vld [vmem:[%s177 + $0x188] sm:$0xff]
                %230 = vst [vmem:[%s178 + $0xc8] sm:$0xff] %v229
                %v231 = vld [vmem:[%s177 + $0x1a0] sm:$0xff]
                %232 = vst [vmem:[%s178 + $0xd0] sm:$0xff] %v231
                %v233 = vld [vmem:[%s177 + $0x1a8] sm:$0xff]
                %234 = vst [vmem:[%s178 + $0xd8] sm:$0xff] %v233
                %v235 = vld [vmem:[%s177 + $0x1c0] sm:$0xff]
                %236 = vst [vmem:[%s178 + $0xe0] sm:$0xff] %v235
                %v237 = vld [vmem:[%s177 + $0x1c8] sm:$0xff]
                %238 = vst [vmem:[%s178 + $0xe8] sm:$0xff] %v237
                %v239 = vld [vmem:[%s177 + $0x1e0] sm:$0xff]
                %240 = vst [vmem:[%s178 + $0xf0] sm:$0xff] %v239
                %v241 = vld [vmem:[%s177 + $0x1e8] sm:$0xff]
                %242 = vst [vmem:[%s178 + $0xf8] sm:$0xff] %v241
                %v243 = vld [vmem:[%s177 + $0x200] sm:$0xff]
                %244 = vst [vmem:[%s178 + $0x100] sm:$0xff] %v243
                %v245 = vld [vmem:[%s177 + $0x208] sm:$0xff]
                %246 = vst [vmem:[%s178 + $0x108] sm:$0xff] %v245
                %v247 = vld [vmem:[%s177 + $0x220] sm:$0xff]
                %248 = vst [vmem:[%s178 + $0x110] sm:$0xff] %v247
                %v249 = vld [vmem:[%s177 + $0x228] sm:$0xff]
                %250 = vst [vmem:[%s178 + $0x118] sm:$0xff] %v249
                %v251 = vld [vmem:[%s177 + $0x240] sm:$0xff]
                %252 = vst [vmem:[%s178 + $0x120] sm:$0xff] %v251
                %v253 = vld [vmem:[%s177 + $0x248] sm:$0xff]
                %254 = vst [vmem:[%s178 + $0x128] sm:$0xff] %v253
                %v255 = vld [vmem:[%s177 + $0x260] sm:$0xff]
                %256 = vst [vmem:[%s178 + $0x130] sm:$0xff] %v255
                %v257 = vld [vmem:[%s177 + $0x268] sm:$0xff]
                %258 = vst [vmem:[%s178 + $0x138] sm:$0xff] %v257
                %v259 = vld [vmem:[%s177 + $0x280] sm:$0xff]
                %260 = vst [vmem:[%s178 + $0x140] sm:$0xff] %v259
                %v261 = vld [vmem:[%s177 + $0x288] sm:$0xff]
                %262 = vst [vmem:[%s178 + $0x148] sm:$0xff] %v261
                %v263 = vld [vmem:[%s177 + $0x2a0] sm:$0xff]
                %264 = vst [vmem:[%s178 + $0x150] sm:$0xff] %v263
                %v265 = vld [vmem:[%s177 + $0x2a8] sm:$0xff]
                %266 = vst [vmem:[%s178 + $0x158] sm:$0xff] %v265
                %v267 = vld [vmem:[%s177 + $0x2c0] sm:$0xff]
                %268 = vst [vmem:[%s178 + $0x160] sm:$0xff] %v267
                %v269 = vld [vmem:[%s177 + $0x2c8] sm:$0xff]
                %270 = vst [vmem:[%s178 + $0x168] sm:$0xff] %v269
                %v271 = vld [vmem:[%s177 + $0x2e0] sm:$0xff]
                %272 = vst [vmem:[%s178 + $0x170] sm:$0xff] %v271
                %v273 = vld [vmem:[%s177 + $0x2e8] sm:$0xff]
                %274 = vst [vmem:[%s178 + $0x178] sm:$0xff] %v273
                %v275 = vld [vmem:[%s177 + $0x300] sm:$0xff]
                %276 = vst [vmem:[%s178 + $0x180] sm:$0xff] %v275
                %v277 = vld [vmem:[%s177 + $0x308] sm:$0xff]
                %278 = vst [vmem:[%s178 + $0x188] sm:$0xff] %v277
                %v279 = vld [vmem:[%s177 + $0x320] sm:$0xff]
                %280 = vst [vmem:[%s178 + $0x190] sm:$0xff] %v279
                %v281 = vld [vmem:[%s177 + $0x328] sm:$0xff]
                %282 = vst [vmem:[%s178 + $0x198] sm:$0xff] %v281
                %v283 = vld [vmem:[%s177 + $0x340] sm:$0xff]
                %284 = vst [vmem:[%s178 + $0x1a0] sm:$0xff] %v283
                %v285 = vld [vmem:[%s177 + $0x348] sm:$0xff]
                %286 = vst [vmem:[%s178 + $0x1a8] sm:$0xff] %v285
                %v287 = vld [vmem:[%s177 + $0x360] sm:$0xff]
                %288 = vst [vmem:[%s178 + $0x1b0] sm:$0xff] %v287
                %v289 = vld [vmem:[%s177 + $0x368] sm:$0xff]
                %290 = vst [vmem:[%s178 + $0x1b8] sm:$0xff] %v289
                %v291 = vld [vmem:[%s177 + $0x380] sm:$0xff]
                %292 = vst [vmem:[%s178 + $0x1c0] sm:$0xff] %v291
                %v293 = vld [vmem:[%s177 + $0x388] sm:$0xff]
                %294 = vst [vmem:[%s178 + $0x1c8] sm:$0xff] %v293
                %v295 = vld [vmem:[%s177 + $0x3a0] sm:$0xff]
                %296 = vst [vmem:[%s178 + $0x1d0] sm:$0xff] %v295
                %v297 = vld [vmem:[%s177 + $0x3a8] sm:$0xff]
                %298 = vst [vmem:[%s178 + $0x1d8] sm:$0xff] %v297
                %v299 = vld [vmem:[%s177 + $0x3c0] sm:$0xff]
                %300 = vst [vmem:[%s178 + $0x1e0] sm:$0xff] %v299
                %v301 = vld [vmem:[%s177 + $0x3c8] sm:$0xff]
                %302 = vst [vmem:[%s178 + $0x1e8] sm:$0xff] %v301
                %v303 = vld [vmem:[%s177 + $0x3e0] sm:$0xff]
                %304 = vst [vmem:[%s178 + $0x1f0] sm:$0xff] %v303
                %v305 = vld [vmem:[%s177 + $0x3e8] sm:$0xff]
                %306 = vst [vmem:[%s178 + $0x1f8] sm:$0xff] %v305
                %v307 = vld [vmem:[%s177 + $0x400] sm:$0xff]
                %308 = vst [vmem:[%s178 + $0x200] sm:$0xff] %v307
                %v309 = vld [vmem:[%s177 + $0x408] sm:$0xff]
                %310 = vst [vmem:[%s178 + $0x208] sm:$0xff] %v309
                %v311 = vld [vmem:[%s177 + $0x420] sm:$0xff]
                %312 = vst [vmem:[%s178 + $0x210] sm:$0xff] %v311
                %v313 = vld [vmem:[%s177 + $0x428] sm:$0xff]
                %314 = vst [vmem:[%s178 + $0x218] sm:$0xff] %v313
                %v315 = vld [vmem:[%s177 + $0x440] sm:$0xff]
                %316 = vst [vmem:[%s178 + $0x220] sm:$0xff] %v315
                %v317 = vld [vmem:[%s177 + $0x448] sm:$0xff]
                %318 = vst [vmem:[%s178 + $0x228] sm:$0xff] %v317
                %v319 = vld [vmem:[%s177 + $0x460] sm:$0xff]
                %320 = vst [vmem:[%s178 + $0x230] sm:$0xff] %v319
                %v321 = vld [vmem:[%s177 + $0x468] sm:$0xff]
                %322 = vst [vmem:[%s178 + $0x238] sm:$0xff] %v321
                %v323 = vld [vmem:[%s177 + $0x480] sm:$0xff]
                %324 = vst [vmem:[%s178 + $0x240] sm:$0xff] %v323
                %v325 = vld [vmem:[%s177 + $0x488] sm:$0xff]
                %326 = vst [vmem:[%s178 + $0x248] sm:$0xff] %v325
                %v327 = vld [vmem:[%s177 + $0x4a0] sm:$0xff]
                %328 = vst [vmem:[%s178 + $0x250] sm:$0xff] %v327
                %v329 = vld [vmem:[%s177 + $0x4a8] sm:$0xff]
                %330 = vst [vmem:[%s178 + $0x258] sm:$0xff] %v329
                %v331 = vld [vmem:[%s177 + $0x4c0] sm:$0xff]
                %332 = vst [vmem:[%s178 + $0x260] sm:$0xff] %v331
                %v333 = vld [vmem:[%s177 + $0x4c8] sm:$0xff]
                %334 = vst [vmem:[%s178 + $0x268] sm:$0xff] %v333
                %v335 = vld [vmem:[%s177 + $0x4e0] sm:$0xff]
                %336 = vst [vmem:[%s178 + $0x270] sm:$0xff] %v335
                %v337 = vld [vmem:[%s177 + $0x4e8] sm:$0xff]
                %338 = vst [vmem:[%s178 + $0x278] sm:$0xff] %v337
                %v339 = vld [vmem:[%s177 + $0x500] sm:$0xff]
                %340 = vst [vmem:[%s178 + $0x280] sm:$0xff] %v339
                %v341 = vld [vmem:[%s177 + $0x508] sm:$0xff]
                %342 = vst [vmem:[%s178 + $0x288] sm:$0xff] %v341
                %v343 = vld [vmem:[%s177 + $0x520] sm:$0xff]
                %344 = vst [vmem:[%s178 + $0x290] sm:$0xff] %v343
                %v345 = vld [vmem:[%s177 + $0x528] sm:$0xff]
                %346 = vst [vmem:[%s178 + $0x298] sm:$0xff] %v345
                %v347 = vld [vmem:[%s177 + $0x540] sm:$0xff]
                %348 = vst [vmem:[%s178 + $0x2a0] sm:$0xff] %v347
                %v349 = vld [vmem:[%s177 + $0x548] sm:$0xff]
                %350 = vst [vmem:[%s178 + $0x2a8] sm:$0xff] %v349
                %v351 = vld [vmem:[%s177 + $0x560] sm:$0xff]
                %352 = vst [vmem:[%s178 + $0x2b0] sm:$0xff] %v351
                %v353 = vld [vmem:[%s177 + $0x568] sm:$0xff]
                %354 = vst [vmem:[%s178 + $0x2b8] sm:$0xff] %v353
                %v355 = vld [vmem:[%s177 + $0x580] sm:$0xff]
                %356 = vst [vmem:[%s178 + $0x2c0] sm:$0xff] %v355
                %v357 = vld [vmem:[%s177 + $0x588] sm:$0xff]
                %358 = vst [vmem:[%s178 + $0x2c8] sm:$0xff] %v357
                %v359 = vld [vmem:[%s177 + $0x5a0] sm:$0xff]
                %360 = vst [vmem:[%s178 + $0x2d0] sm:$0xff] %v359
                %v361 = vld [vmem:[%s177 + $0x5a8] sm:$0xff]
                %362 = vst [vmem:[%s178 + $0x2d8] sm:$0xff] %v361
                %v363 = vld [vmem:[%s177 + $0x5c0] sm:$0xff]
                %364 = vst [vmem:[%s178 + $0x2e0] sm:$0xff] %v363
                %v365 = vld [vmem:[%s177 + $0x5c8] sm:$0xff]
                %366 = vst [vmem:[%s178 + $0x2e8] sm:$0xff] %v365
                %v367 = vld [vmem:[%s177 + $0x5e0] sm:$0xff]
                %368 = vst [vmem:[%s178 + $0x2f0] sm:$0xff] %v367
                %v369 = vld [vmem:[%s177 + $0x5e8] sm:$0xff]
                %370 = vst [vmem:[%s178 + $0x2f8] sm:$0xff] %v369
                %v371 = vld [vmem:[%s177 + $0x600] sm:$0xff]
                %372 = vst [vmem:[%s178 + $0x300] sm:$0xff] %v371
                %v373 = vld [vmem:[%s177 + $0x608] sm:$0xff]
                %374 = vst [vmem:[%s178 + $0x308] sm:$0xff] %v373
                %v375 = vld [vmem:[%s177 + $0x620] sm:$0xff]
                %376 = vst [vmem:[%s178 + $0x310] sm:$0xff] %v375
                %v377 = vld [vmem:[%s177 + $0x628] sm:$0xff]
                %378 = vst [vmem:[%s178 + $0x318] sm:$0xff] %v377
                %v379 = vld [vmem:[%s177 + $0x640] sm:$0xff]
                %380 = vst [vmem:[%s178 + $0x320] sm:$0xff] %v379
                %v381 = vld [vmem:[%s177 + $0x648] sm:$0xff]
                %382 = vst [vmem:[%s178 + $0x328] sm:$0xff] %v381
                %v383 = vld [vmem:[%s177 + $0x660] sm:$0xff]
                %384 = vst [vmem:[%s178 + $0x330] sm:$0xff] %v383
                %v385 = vld [vmem:[%s177 + $0x668] sm:$0xff]
                %386 = vst [vmem:[%s178 + $0x338] sm:$0xff] %v385
                %v387 = vld [vmem:[%s177 + $0x680] sm:$0xff]
                %388 = vst [vmem:[%s178 + $0x340] sm:$0xff] %v387
                %v389 = vld [vmem:[%s177 + $0x688] sm:$0xff]
                %390 = vst [vmem:[%s178 + $0x348] sm:$0xff] %v389
                %v391 = vld [vmem:[%s177 + $0x6a0] sm:$0xff]
                %392 = vst [vmem:[%s178 + $0x350] sm:$0xff] %v391
                %v393 = vld [vmem:[%s177 + $0x6a8] sm:$0xff]
                %394 = vst [vmem:[%s178 + $0x358] sm:$0xff] %v393
                %v395 = vld [vmem:[%s177 + $0x6c0] sm:$0xff]
                %396 = vst [vmem:[%s178 + $0x360] sm:$0xff] %v395
                %v397 = vld [vmem:[%s177 + $0x6c8] sm:$0xff]
                %398 = vst [vmem:[%s178 + $0x368] sm:$0xff] %v397
                %v399 = vld [vmem:[%s177 + $0x6e0] sm:$0xff]
                %400 = vst [vmem:[%s178 + $0x370] sm:$0xff] %v399
                %v401 = vld [vmem:[%s177 + $0x6e8] sm:$0xff]
                %402 = vst [vmem:[%s178 + $0x378] sm:$0xff] %v401
                %v403 = vld [vmem:[%s177 + $0x700] sm:$0xff]
                %404 = vst [vmem:[%s178 + $0x380] sm:$0xff] %v403
                %v405 = vld [vmem:[%s177 + $0x708] sm:$0xff]
                %406 = vst [vmem:[%s178 + $0x388] sm:$0xff] %v405
                %v407 = vld [vmem:[%s177 + $0x720] sm:$0xff]
                %408 = vst [vmem:[%s178 + $0x390] sm:$0xff] %v407
                %v409 = vld [vmem:[%s177 + $0x728] sm:$0xff]
                %410 = vst [vmem:[%s178 + $0x398] sm:$0xff] %v409
                %v411 = vld [vmem:[%s177 + $0x740] sm:$0xff]
                %412 = vst [vmem:[%s178 + $0x3a0] sm:$0xff] %v411
                %v413 = vld [vmem:[%s177 + $0x748] sm:$0xff]
                %414 = vst [vmem:[%s178 + $0x3a8] sm:$0xff] %v413
                %v415 = vld [vmem:[%s177 + $0x760] sm:$0xff]
                %416 = vst [vmem:[%s178 + $0x3b0] sm:$0xff] %v415
                %v417 = vld [vmem:[%s177 + $0x768] sm:$0xff]
                %418 = vst [vmem:[%s178 + $0x3b8] sm:$0xff] %v417
                %v419 = vld [vmem:[%s177 + $0x780] sm:$0xff]
                %420 = vst [vmem:[%s178 + $0x3c0] sm:$0xff] %v419
                %v421 = vld [vmem:[%s177 + $0x788] sm:$0xff]
                %422 = vst [vmem:[%s178 + $0x3c8] sm:$0xff] %v421
                %v423 = vld [vmem:[%s177 + $0x7a0] sm:$0xff]
                %424 = vst [vmem:[%s178 + $0x3d0] sm:$0xff] %v423
                %v425 = vld [vmem:[%s177 + $0x7a8] sm:$0xff]
                %426 = vst [vmem:[%s178 + $0x3d8] sm:$0xff] %v425
                %v427 = vld [vmem:[%s177 + $0x7c0] sm:$0xff]
                %428 = vst [vmem:[%s178 + $0x3e0] sm:$0xff] %v427
                %v429 = vld [vmem:[%s177 + $0x7c8] sm:$0xff]
                %430 = vst [vmem:[%s178 + $0x3e8] sm:$0xff] %v429
                %v431 = vld [vmem:[%s177 + $0x7e0] sm:$0xff]
                %432 = vst [vmem:[%s178 + $0x3f0] sm:$0xff] %v431
                %v433 = vld [vmem:[%s177 + $0x7e8] sm:$0xff]
                %434 = vst [vmem:[%s178 + $0x3f8] sm:$0xff] %v433
                %v435 = vld [vmem:[%s177 + $0x800] sm:$0xff]
                %436 = vst [vmem:[%s178 + $0x400] sm:$0xff] %v435
                %v437 = vld [vmem:[%s177 + $0x808] sm:$0xff]
                %438 = vst [vmem:[%s178 + $0x408] sm:$0xff] %v437
                %v439 = vld [vmem:[%s177 + $0x820] sm:$0xff]
                %440 = vst [vmem:[%s178 + $0x410] sm:$0xff] %v439
                %v441 = vld [vmem:[%s177 + $0x828] sm:$0xff]
                %442 = vst [vmem:[%s178 + $0x418] sm:$0xff] %v441
                %v443 = vld [vmem:[%s177 + $0x840] sm:$0xff]
                %444 = vst [vmem:[%s178 + $0x420] sm:$0xff] %v443
                %v445 = vld [vmem:[%s177 + $0x848] sm:$0xff]
                %446 = vst [vmem:[%s178 + $0x428] sm:$0xff] %v445
                %v447 = vld [vmem:[%s177 + $0x860] sm:$0xff]
                %448 = vst [vmem:[%s178 + $0x430] sm:$0xff] %v447
                %v449 = vld [vmem:[%s177 + $0x868] sm:$0xff]
                %450 = vst [vmem:[%s178 + $0x438] sm:$0xff] %v449
                %v451 = vld [vmem:[%s177 + $0x880] sm:$0xff]
                %452 = vst [vmem:[%s178 + $0x440] sm:$0xff] %v451
                %v453 = vld [vmem:[%s177 + $0x888] sm:$0xff]
                %454 = vst [vmem:[%s178 + $0x448] sm:$0xff] %v453
                %v455 = vld [vmem:[%s177 + $0x8a0] sm:$0xff]
                %456 = vst [vmem:[%s178 + $0x450] sm:$0xff] %v455
                %v457 = vld [vmem:[%s177 + $0x8a8] sm:$0xff]
                %458 = vst [vmem:[%s178 + $0x458] sm:$0xff] %v457
                %v459 = vld [vmem:[%s177 + $0x8c0] sm:$0xff]
                %460 = vst [vmem:[%s178 + $0x460] sm:$0xff] %v459
                %v461 = vld [vmem:[%s177 + $0x8c8] sm:$0xff]
                %462 = vst [vmem:[%s178 + $0x468] sm:$0xff] %v461
                %v463 = vld [vmem:[%s177 + $0x8e0] sm:$0xff]
                %464 = vst [vmem:[%s178 + $0x470] sm:$0xff] %v463
                %v465 = vld [vmem:[%s177 + $0x8e8] sm:$0xff]
                %466 = vst [vmem:[%s178 + $0x478] sm:$0xff] %v465
                %v467 = vld [vmem:[%s177 + $0x900] sm:$0xff]
                %468 = vst [vmem:[%s178 + $0x480] sm:$0xff] %v467
                %v469 = vld [vmem:[%s177 + $0x908] sm:$0xff]
                %470 = vst [vmem:[%s178 + $0x488] sm:$0xff] %v469
                %v471 = vld [vmem:[%s177 + $0x920] sm:$0xff]
                %472 = vst [vmem:[%s178 + $0x490] sm:$0xff] %v471
                %v473 = vld [vmem:[%s177 + $0x928] sm:$0xff]
                %474 = vst [vmem:[%s178 + $0x498] sm:$0xff] %v473
                %v475 = vld [vmem:[%s177 + $0x940] sm:$0xff]
                %476 = vst [vmem:[%s178 + $0x4a0] sm:$0xff] %v475
                %v477 = vld [vmem:[%s177 + $0x948] sm:$0xff]
                %478 = vst [vmem:[%s178 + $0x4a8] sm:$0xff] %v477
                %v479 = vld [vmem:[%s177 + $0x960] sm:$0xff]
                %480 = vst [vmem:[%s178 + $0x4b0] sm:$0xff] %v479
                %v481 = vld [vmem:[%s177 + $0x968] sm:$0xff]
                %482 = vst [vmem:[%s178 + $0x4b8] sm:$0xff] %v481
                %v483 = vld [vmem:[%s177 + $0x980] sm:$0xff]
                %484 = vst [vmem:[%s178 + $0x4c0] sm:$0xff] %v483
                %v485 = vld [vmem:[%s177 + $0x988] sm:$0xff]
                %486 = vst [vmem:[%s178 + $0x4c8] sm:$0xff] %v485
                %v487 = vld [vmem:[%s177 + $0x9a0] sm:$0xff]
                %488 = vst [vmem:[%s178 + $0x4d0] sm:$0xff] %v487
                %v489 = vld [vmem:[%s177 + $0x9a8] sm:$0xff]
                %490 = vst [vmem:[%s178 + $0x4d8] sm:$0xff] %v489
                %v491 = vld [vmem:[%s177 + $0x9c0] sm:$0xff]
                %492 = vst [vmem:[%s178 + $0x4e0] sm:$0xff] %v491
                %v493 = vld [vmem:[%s177 + $0x9c8] sm:$0xff]
                %494 = vst [vmem:[%s178 + $0x4e8] sm:$0xff] %v493
                %v495 = vld [vmem:[%s177 + $0x9e0] sm:$0xff]
                %496 = vst [vmem:[%s178 + $0x4f0] sm:$0xff] %v495
                %v497 = vld [vmem:[%s177 + $0x9e8] sm:$0xff]
                %498 = vst [vmem:[%s178 + $0x4f8] sm:$0xff] %v497
                %v499 = vld [vmem:[%s177 + $0xa00] sm:$0xff]
                %500 = vst [vmem:[%s178 + $0x500] sm:$0xff] %v499
                %v501 = vld [vmem:[%s177 + $0xa08] sm:$0xff]
                %502 = vst [vmem:[%s178 + $0x508] sm:$0xff] %v501
                %v503 = vld [vmem:[%s177 + $0xa20] sm:$0xff]
                %504 = vst [vmem:[%s178 + $0x510] sm:$0xff] %v503
                %v505 = vld [vmem:[%s177 + $0xa28] sm:$0xff]
                %506 = vst [vmem:[%s178 + $0x518] sm:$0xff] %v505
                %v507 = vld [vmem:[%s177 + $0xa40] sm:$0xff]
                %508 = vst [vmem:[%s178 + $0x520] sm:$0xff] %v507
                %v509 = vld [vmem:[%s177 + $0xa48] sm:$0xff]
                %510 = vst [vmem:[%s178 + $0x528] sm:$0xff] %v509
                %v511 = vld [vmem:[%s177 + $0xa60] sm:$0xff]
                %512 = vst [vmem:[%s178 + $0x530] sm:$0xff] %v511
                %v513 = vld [vmem:[%s177 + $0xa68] sm:$0xff]
                %514 = vst [vmem:[%s178 + $0x538] sm:$0xff] %v513
                %v515 = vld [vmem:[%s177 + $0xa80] sm:$0xff]
                %516 = vst [vmem:[%s178 + $0x540] sm:$0xff] %v515
                %v517 = vld [vmem:[%s177 + $0xa88] sm:$0xff]
                %518 = vst [vmem:[%s178 + $0x548] sm:$0xff] %v517
                %v519 = vld [vmem:[%s177 + $0xaa0] sm:$0xff]
                %520 = vst [vmem:[%s178 + $0x550] sm:$0xff] %v519
                %v521 = vld [vmem:[%s177 + $0xaa8] sm:$0xff]
                %522 = vst [vmem:[%s178 + $0x558] sm:$0xff] %v521
                %v523 = vld [vmem:[%s177 + $0xac0] sm:$0xff]
                %524 = vst [vmem:[%s178 + $0x560] sm:$0xff] %v523
                %v525 = vld [vmem:[%s177 + $0xac8] sm:$0xff]
                %526 = vst [vmem:[%s178 + $0x568] sm:$0xff] %v525
                %v527 = vld [vmem:[%s177 + $0xae0] sm:$0xff]
                %528 = vst [vmem:[%s178 + $0x570] sm:$0xff] %v527
                %v529 = vld [vmem:[%s177 + $0xae8] sm:$0xff]
                %530 = vst [vmem:[%s178 + $0x578] sm:$0xff] %v529
                %v531 = vld [vmem:[%s177 + $0xb00] sm:$0xff]
                %532 = vst [vmem:[%s178 + $0x580] sm:$0xff] %v531
                %v533 = vld [vmem:[%s177 + $0xb08] sm:$0xff]
                %534 = vst [vmem:[%s178 + $0x588] sm:$0xff] %v533
                %v535 = vld [vmem:[%s177 + $0xb20] sm:$0xff]
                %536 = vst [vmem:[%s178 + $0x590] sm:$0xff] %v535
                %v537 = vld [vmem:[%s177 + $0xb28] sm:$0xff]
                %538 = vst [vmem:[%s178 + $0x598] sm:$0xff] %v537
                %v539 = vld [vmem:[%s177 + $0xb40] sm:$0xff]
                %540 = vst [vmem:[%s178 + $0x5a0] sm:$0xff] %v539
                %v541 = vld [vmem:[%s177 + $0xb48] sm:$0xff]
                %542 = vst [vmem:[%s178 + $0x5a8] sm:$0xff] %v541
                %v543 = vld [vmem:[%s177 + $0xb60] sm:$0xff]
                %544 = vst [vmem:[%s178 + $0x5b0] sm:$0xff] %v543
                %v545 = vld [vmem:[%s177 + $0xb68] sm:$0xff]
                %546 = vst [vmem:[%s178 + $0x5b8] sm:$0xff] %v545
                %v547 = vld [vmem:[%s177 + $0xb80] sm:$0xff]
                %548 = vst [vmem:[%s178 + $0x5c0] sm:$0xff] %v547
                %v549 = vld [vmem:[%s177 + $0xb88] sm:$0xff]
                %550 = vst [vmem:[%s178 + $0x5c8] sm:$0xff] %v549
                %v551 = vld [vmem:[%s177 + $0xba0] sm:$0xff]
                %552 = vst [vmem:[%s178 + $0x5d0] sm:$0xff] %v551
                %v553 = vld [vmem:[%s177 + $0xba8] sm:$0xff]
                %554 = vst [vmem:[%s178 + $0x5d8] sm:$0xff] %v553
                %v555 = vld [vmem:[%s177 + $0xbc0] sm:$0xff]
                %556 = vst [vmem:[%s178 + $0x5e0] sm:$0xff] %v555
                %v557 = vld [vmem:[%s177 + $0xbc8] sm:$0xff]
                %558 = vst [vmem:[%s178 + $0x5e8] sm:$0xff] %v557
                %v559 = vld [vmem:[%s177 + $0xbe0] sm:$0xff]
                %560 = vst [vmem:[%s178 + $0x5f0] sm:$0xff] %v559
                %v561 = vld [vmem:[%s177 + $0xbe8] sm:$0xff]
                %562 = vst [vmem:[%s178 + $0x5f8] sm:$0xff] %v561
                %v563 = vld [vmem:[%s177 + $0xc00] sm:$0xff]
                %564 = vst [vmem:[%s178 + $0x600] sm:$0xff] %v563
                %v565 = vld [vmem:[%s177 + $0xc08] sm:$0xff]
                %566 = vst [vmem:[%s178 + $0x608] sm:$0xff] %v565
                %v567 = vld [vmem:[%s177 + $0xc20] sm:$0xff]
                %568 = vst [vmem:[%s178 + $0x610] sm:$0xff] %v567
                %v569 = vld [vmem:[%s177 + $0xc28] sm:$0xff]
                %570 = vst [vmem:[%s178 + $0x618] sm:$0xff] %v569
                %v571 = vld [vmem:[%s177 + $0xc40] sm:$0xff]
                %572 = vst [vmem:[%s178 + $0x620] sm:$0xff] %v571
                %v573 = vld [vmem:[%s177 + $0xc48] sm:$0xff]
                %574 = vst [vmem:[%s178 + $0x628] sm:$0xff] %v573
                %v575 = vld [vmem:[%s177 + $0xc60] sm:$0xff]
                %576 = vst [vmem:[%s178 + $0x630] sm:$0xff] %v575
                %v577 = vld [vmem:[%s177 + $0xc68] sm:$0xff]
                %578 = vst [vmem:[%s178 + $0x638] sm:$0xff] %v577
                %v579 = vld [vmem:[%s177 + $0xc80] sm:$0xff]
                %580 = vst [vmem:[%s178 + $0x640] sm:$0xff] %v579
                %v581 = vld [vmem:[%s177 + $0xc88] sm:$0xff]
                %582 = vst [vmem:[%s178 + $0x648] sm:$0xff] %v581
                %v583 = vld [vmem:[%s177 + $0xca0] sm:$0xff]
                %584 = vst [vmem:[%s178 + $0x650] sm:$0xff] %v583
                %v585 = vld [vmem:[%s177 + $0xca8] sm:$0xff]
                %586 = vst [vmem:[%s178 + $0x658] sm:$0xff] %v585
                %v587 = vld [vmem:[%s177 + $0xcc0] sm:$0xff]
                %588 = vst [vmem:[%s178 + $0x660] sm:$0xff] %v587
                %v589 = vld [vmem:[%s177 + $0xcc8] sm:$0xff]
                %590 = vst [vmem:[%s178 + $0x668] sm:$0xff] %v589
                %v591 = vld [vmem:[%s177 + $0xce0] sm:$0xff]
                %592 = vst [vmem:[%s178 + $0x670] sm:$0xff] %v591
                %v593 = vld [vmem:[%s177 + $0xce8] sm:$0xff]
                %594 = vst [vmem:[%s178 + $0x678] sm:$0xff] %v593
                %v595 = vld [vmem:[%s177 + $0xd00] sm:$0xff]
                %596 = vst [vmem:[%s178 + $0x680] sm:$0xff] %v595
                %v597 = vld [vmem:[%s177 + $0xd08] sm:$0xff]
                %598 = vst [vmem:[%s178 + $0x688] sm:$0xff] %v597
                %v599 = vld [vmem:[%s177 + $0xd20] sm:$0xff]
                %600 = vst [vmem:[%s178 + $0x690] sm:$0xff] %v599
                %v601 = vld [vmem:[%s177 + $0xd28] sm:$0xff]
                %602 = vst [vmem:[%s178 + $0x698] sm:$0xff] %v601
                %v603 = vld [vmem:[%s177 + $0xd40] sm:$0xff]
                %604 = vst [vmem:[%s178 + $0x6a0] sm:$0xff] %v603
                %v605 = vld [vmem:[%s177 + $0xd48] sm:$0xff]
                %606 = vst [vmem:[%s178 + $0x6a8] sm:$0xff] %v605
                %v607 = vld [vmem:[%s177 + $0xd60] sm:$0xff]
                %608 = vst [vmem:[%s178 + $0x6b0] sm:$0xff] %v607
                %v609 = vld [vmem:[%s177 + $0xd68] sm:$0xff]
                %610 = vst [vmem:[%s178 + $0x6b8] sm:$0xff] %v609
                %v611 = vld [vmem:[%s177 + $0xd80] sm:$0xff]
                %612 = vst [vmem:[%s178 + $0x6c0] sm:$0xff] %v611
                %v613 = vld [vmem:[%s177 + $0xd88] sm:$0xff]
                %614 = vst [vmem:[%s178 + $0x6c8] sm:$0xff] %v613
                %v615 = vld [vmem:[%s177 + $0xda0] sm:$0xff]
                %616 = vst [vmem:[%s178 + $0x6d0] sm:$0xff] %v615
                %v617 = vld [vmem:[%s177 + $0xda8] sm:$0xff]
                %618 = vst [vmem:[%s178 + $0x6d8] sm:$0xff] %v617
                %v619 = vld [vmem:[%s177 + $0xdc0] sm:$0xff]
                %620 = vst [vmem:[%s178 + $0x6e0] sm:$0xff] %v619
                %v621 = vld [vmem:[%s177 + $0xdc8] sm:$0xff]
                %622 = vst [vmem:[%s178 + $0x6e8] sm:$0xff] %v621
                %v623 = vld [vmem:[%s177 + $0xde0] sm:$0xff]
                %624 = vst [vmem:[%s178 + $0x6f0] sm:$0xff] %v623
                %v625 = vld [vmem:[%s177 + $0xde8] sm:$0xff]
                %626 = vst [vmem:[%s178 + $0x6f8] sm:$0xff] %v625
                %v627 = vld [vmem:[%s177 + $0xe00] sm:$0xff]
                %628 = vst [vmem:[%s178 + $0x700] sm:$0xff] %v627
                %v629 = vld [vmem:[%s177 + $0xe08] sm:$0xff]
                %630 = vst [vmem:[%s178 + $0x708] sm:$0xff] %v629
                %v631 = vld [vmem:[%s177 + $0xe20] sm:$0xff]
                %632 = vst [vmem:[%s178 + $0x710] sm:$0xff] %v631
                %v633 = vld [vmem:[%s177 + $0xe28] sm:$0xff]
                %634 = vst [vmem:[%s178 + $0x718] sm:$0xff] %v633
                %v635 = vld [vmem:[%s177 + $0xe40] sm:$0xff]
                %636 = vst [vmem:[%s178 + $0x720] sm:$0xff] %v635
                %v637 = vld [vmem:[%s177 + $0xe48] sm:$0xff]
                %638 = vst [vmem:[%s178 + $0x728] sm:$0xff] %v637
                %v639 = vld [vmem:[%s177 + $0xe60] sm:$0xff]
                %640 = vst [vmem:[%s178 + $0x730] sm:$0xff] %v639
                %v641 = vld [vmem:[%s177 + $0xe68] sm:$0xff]
                %642 = vst [vmem:[%s178 + $0x738] sm:$0xff] %v641
                %v643 = vld [vmem:[%s177 + $0xe80] sm:$0xff]
                %644 = vst [vmem:[%s178 + $0x740] sm:$0xff] %v643
                %v645 = vld [vmem:[%s177 + $0xe88] sm:$0xff]
                %646 = vst [vmem:[%s178 + $0x748] sm:$0xff] %v645
                %v647 = vld [vmem:[%s177 + $0xea0] sm:$0xff]
                %648 = vst [vmem:[%s178 + $0x750] sm:$0xff] %v647
                %v649 = vld [vmem:[%s177 + $0xea8] sm:$0xff]
                %650 = vst [vmem:[%s178 + $0x758] sm:$0xff] %v649
                %v651 = vld [vmem:[%s177 + $0xec0] sm:$0xff]
                %652 = vst [vmem:[%s178 + $0x760] sm:$0xff] %v651
                %v653 = vld [vmem:[%s177 + $0xec8] sm:$0xff]
                %654 = vst [vmem:[%s178 + $0x768] sm:$0xff] %v653
                %v655 = vld [vmem:[%s177 + $0xee0] sm:$0xff]
                %656 = vst [vmem:[%s178 + $0x770] sm:$0xff] %v655
                %v657 = vld [vmem:[%s177 + $0xee8] sm:$0xff]
                %658 = vst [vmem:[%s178 + $0x778] sm:$0xff] %v657
                %v659 = vld [vmem:[%s177 + $0xf00] sm:$0xff]
                %660 = vst [vmem:[%s178 + $0x780] sm:$0xff] %v659
                %v661 = vld [vmem:[%s177 + $0xf08] sm:$0xff]
                %662 = vst [vmem:[%s178 + $0x788] sm:$0xff] %v661
                %v663 = vld [vmem:[%s177 + $0xf20] sm:$0xff]
                %664 = vst [vmem:[%s178 + $0x790] sm:$0xff] %v663
                %v665 = vld [vmem:[%s177 + $0xf28] sm:$0xff]
                %666 = vst [vmem:[%s178 + $0x798] sm:$0xff] %v665
                %v667 = vld [vmem:[%s177 + $0xf40] sm:$0xff]
                %668 = vst [vmem:[%s178 + $0x7a0] sm:$0xff] %v667
                %v669 = vld [vmem:[%s177 + $0xf48] sm:$0xff]
                %670 = vst [vmem:[%s178 + $0x7a8] sm:$0xff] %v669
                %v671 = vld [vmem:[%s177 + $0xf60] sm:$0xff]
                %672 = vst [vmem:[%s178 + $0x7b0] sm:$0xff] %v671
                %v673 = vld [vmem:[%s177 + $0xf68] sm:$0xff]
                %674 = vst [vmem:[%s178 + $0x7b8] sm:$0xff] %v673
                %v675 = vld [vmem:[%s177 + $0xf80] sm:$0xff]
                %676 = vst [vmem:[%s178 + $0x7c0] sm:$0xff] %v675
                %v677 = vld [vmem:[%s177 + $0xf88] sm:$0xff]
                %678 = vst [vmem:[%s178 + $0x7c8] sm:$0xff] %v677
                %v679 = vld [vmem:[%s177 + $0xfa0] sm:$0xff]
                %680 = vst [vmem:[%s178 + $0x7d0] sm:$0xff] %v679
                %v681 = vld [vmem:[%s177 + $0xfa8] sm:$0xff]
                %682 = vst [vmem:[%s178 + $0x7d8] sm:$0xff] %v681
                %v683 = vld [vmem:[%s177 + $0xfc0] sm:$0xff]
                %684 = vst [vmem:[%s178 + $0x7e0] sm:$0xff] %v683
                %v685 = vld [vmem:[%s177 + $0xfc8] sm:$0xff]
                %686 = vst [vmem:[%s178 + $0x7e8] sm:$0xff] %v685
                %v687 = vld [vmem:[%s177 + $0xfe0] sm:$0xff]
                %688 = vst [vmem:[%s178 + $0x7f0] sm:$0xff] %v687
                %v689 = vld [vmem:[%s177 + $0xfe8] sm:$0xff]
                %690 = vst [vmem:[%s178 + $0x7f8] sm:$0xff] %v689
                %v691 = vld [vmem:[%s177 + $0x1000] sm:$0xff]
                %692 = vst [vmem:[%s178 + $0x800] sm:$0xff] %v691
                %v693 = vld [vmem:[%s177 + $0x1008] sm:$0xff]
                %694 = vst [vmem:[%s178 + $0x808] sm:$0xff] %v693
                %v695 = vld [vmem:[%s177 + $0x1020] sm:$0xff]
                %696 = vst [vmem:[%s178 + $0x810] sm:$0xff] %v695
                %v697 = vld [vmem:[%s177 + $0x1028] sm:$0xff]
                %698 = vst [vmem:[%s178 + $0x818] sm:$0xff] %v697
                %v699 = vld [vmem:[%s177 + $0x1040] sm:$0xff]
                %700 = vst [vmem:[%s178 + $0x820] sm:$0xff] %v699
                %v701 = vld [vmem:[%s177 + $0x1048] sm:$0xff]
                %702 = vst [vmem:[%s178 + $0x828] sm:$0xff] %v701
                %v703 = vld [vmem:[%s177 + $0x1060] sm:$0xff]
                %704 = vst [vmem:[%s178 + $0x830] sm:$0xff] %v703
                %v705 = vld [vmem:[%s177 + $0x1068] sm:$0xff]
                %706 = vst [vmem:[%s178 + $0x838] sm:$0xff] %v705
                %v707 = vld [vmem:[%s177 + $0x1080] sm:$0xff]
                %708 = vst [vmem:[%s178 + $0x840] sm:$0xff] %v707
                %v709 = vld [vmem:[%s177 + $0x1088] sm:$0xff]
                %710 = vst [vmem:[%s178 + $0x848] sm:$0xff] %v709
                %v711 = vld [vmem:[%s177 + $0x10a0] sm:$0xff]
                %712 = vst [vmem:[%s178 + $0x850] sm:$0xff] %v711
                %v713 = vld [vmem:[%s177 + $0x10a8] sm:$0xff]
                %714 = vst [vmem:[%s178 + $0x858] sm:$0xff] %v713
                %v715 = vld [vmem:[%s177 + $0x10c0] sm:$0xff]
                %716 = vst [vmem:[%s178 + $0x860] sm:$0xff] %v715
                %v717 = vld [vmem:[%s177 + $0x10c8] sm:$0xff]
                %718 = vst [vmem:[%s178 + $0x868] sm:$0xff] %v717
                %v719 = vld [vmem:[%s177 + $0x10e0] sm:$0xff]
                %720 = vst [vmem:[%s178 + $0x870] sm:$0xff] %v719
                %v721 = vld [vmem:[%s177 + $0x10e8] sm:$0xff]
                %722 = vst [vmem:[%s178 + $0x878] sm:$0xff] %v721
                %v723 = vld [vmem:[%s177 + $0x1100] sm:$0xff]
                %724 = vst [vmem:[%s178 + $0x880] sm:$0xff] %v723
                %v725 = vld [vmem:[%s177 + $0x1108] sm:$0xff]
                %726 = vst [vmem:[%s178 + $0x888] sm:$0xff] %v725
                %v727 = vld [vmem:[%s177 + $0x1120] sm:$0xff]
                %728 = vst [vmem:[%s178 + $0x890] sm:$0xff] %v727
                %v729 = vld [vmem:[%s177 + $0x1128] sm:$0xff]
                %730 = vst [vmem:[%s178 + $0x898] sm:$0xff] %v729
                %v731 = vld [vmem:[%s177 + $0x1140] sm:$0xff]
                %732 = vst [vmem:[%s178 + $0x8a0] sm:$0xff] %v731
                %v733 = vld [vmem:[%s177 + $0x1148] sm:$0xff]
                %734 = vst [vmem:[%s178 + $0x8a8] sm:$0xff] %v733
                %v735 = vld [vmem:[%s177 + $0x1160] sm:$0xff]
                %736 = vst [vmem:[%s178 + $0x8b0] sm:$0xff] %v735
                %v737 = vld [vmem:[%s177 + $0x1168] sm:$0xff]
                %738 = vst [vmem:[%s178 + $0x8b8] sm:$0xff] %v737
                %v739 = vld [vmem:[%s177 + $0x1180] sm:$0xff]
                %740 = vst [vmem:[%s178 + $0x8c0] sm:$0xff] %v739
                %v741 = vld [vmem:[%s177 + $0x1188] sm:$0xff]
                %742 = vst [vmem:[%s178 + $0x8c8] sm:$0xff] %v741
                %v743 = vld [vmem:[%s177 + $0x11a0] sm:$0xff]
                %744 = vst [vmem:[%s178 + $0x8d0] sm:$0xff] %v743
                %v745 = vld [vmem:[%s177 + $0x11a8] sm:$0xff]
                %746 = vst [vmem:[%s178 + $0x8d8] sm:$0xff] %v745
                %v747 = vld [vmem:[%s177 + $0x11c0] sm:$0xff]
                %748 = vst [vmem:[%s178 + $0x8e0] sm:$0xff] %v747
                %v749 = vld [vmem:[%s177 + $0x11c8] sm:$0xff]
                %750 = vst [vmem:[%s178 + $0x8e8] sm:$0xff] %v749
                %v751 = vld [vmem:[%s177 + $0x11e0] sm:$0xff]
                %752 = vst [vmem:[%s178 + $0x8f0] sm:$0xff] %v751
                %v753 = vld [vmem:[%s177 + $0x11e8] sm:$0xff]
                %754 = vst [vmem:[%s178 + $0x8f8] sm:$0xff] %v753
                %v755 = vld [vmem:[%s177 + $0x1200] sm:$0xff]
                %756 = vst [vmem:[%s178 + $0x900] sm:$0xff] %v755
                %v757 = vld [vmem:[%s177 + $0x1208] sm:$0xff]
                %758 = vst [vmem:[%s178 + $0x908] sm:$0xff] %v757
                %v759 = vld [vmem:[%s177 + $0x1220] sm:$0xff]
                %760 = vst [vmem:[%s178 + $0x910] sm:$0xff] %v759
                %v761 = vld [vmem:[%s177 + $0x1228] sm:$0xff]
                %762 = vst [vmem:[%s178 + $0x918] sm:$0xff] %v761
                %v763 = vld [vmem:[%s177 + $0x1240] sm:$0xff]
                %764 = vst [vmem:[%s178 + $0x920] sm:$0xff] %v763
                %v765 = vld [vmem:[%s177 + $0x1248] sm:$0xff]
                %766 = vst [vmem:[%s178 + $0x928] sm:$0xff] %v765
                %v767 = vld [vmem:[%s177 + $0x1260] sm:$0xff]
                %768 = vst [vmem:[%s178 + $0x930] sm:$0xff] %v767
                %v769 = vld [vmem:[%s177 + $0x1268] sm:$0xff]
                %770 = vst [vmem:[%s178 + $0x938] sm:$0xff] %v769
                %v771 = vld [vmem:[%s177 + $0x1280] sm:$0xff]
                %772 = vst [vmem:[%s178 + $0x940] sm:$0xff] %v771
                %v773 = vld [vmem:[%s177 + $0x1288] sm:$0xff]
                %774 = vst [vmem:[%s178 + $0x948] sm:$0xff] %v773
                %v775 = vld [vmem:[%s177 + $0x12a0] sm:$0xff]
                %776 = vst [vmem:[%s178 + $0x950] sm:$0xff] %v775
                %v777 = vld [vmem:[%s177 + $0x12a8] sm:$0xff]
                %778 = vst [vmem:[%s178 + $0x958] sm:$0xff] %v777
                %v779 = vld [vmem:[%s177 + $0x12c0] sm:$0xff]
                %780 = vst [vmem:[%s178 + $0x960] sm:$0xff] %v779
                %v781 = vld [vmem:[%s177 + $0x12c8] sm:$0xff]
                %782 = vst [vmem:[%s178 + $0x968] sm:$0xff] %v781
                %v783 = vld [vmem:[%s177 + $0x12e0] sm:$0xff]
                %784 = vst [vmem:[%s178 + $0x970] sm:$0xff] %v783
                %v785 = vld [vmem:[%s177 + $0x12e8] sm:$0xff]
                %786 = vst [vmem:[%s178 + $0x978] sm:$0xff] %v785
                %v787 = vld [vmem:[%s177 + $0x1300] sm:$0xff]
                %788 = vst [vmem:[%s178 + $0x980] sm:$0xff] %v787
                %v789 = vld [vmem:[%s177 + $0x1308] sm:$0xff]
                %790 = vst [vmem:[%s178 + $0x988] sm:$0xff] %v789
                %v791 = vld [vmem:[%s177 + $0x1320] sm:$0xff]
                %792 = vst [vmem:[%s178 + $0x990] sm:$0xff] %v791
                %v793 = vld [vmem:[%s177 + $0x1328] sm:$0xff]
                %794 = vst [vmem:[%s178 + $0x998] sm:$0xff] %v793
                %v795 = vld [vmem:[%s177 + $0x1340] sm:$0xff]
                %796 = vst [vmem:[%s178 + $0x9a0] sm:$0xff] %v795
                %v797 = vld [vmem:[%s177 + $0x1348] sm:$0xff]
                %798 = vst [vmem:[%s178 + $0x9a8] sm:$0xff] %v797
                %v799 = vld [vmem:[%s177 + $0x1360] sm:$0xff]
                %800 = vst [vmem:[%s178 + $0x9b0] sm:$0xff] %v799
                %v801 = vld [vmem:[%s177 + $0x1368] sm:$0xff]
                %802 = vst [vmem:[%s178 + $0x9b8] sm:$0xff] %v801
                %v803 = vld [vmem:[%s177 + $0x1380] sm:$0xff]
                %804 = vst [vmem:[%s178 + $0x9c0] sm:$0xff] %v803
                %v805 = vld [vmem:[%s177 + $0x1388] sm:$0xff]
                %806 = vst [vmem:[%s178 + $0x9c8] sm:$0xff] %v805
                %v807 = vld [vmem:[%s177 + $0x13a0] sm:$0xff]
                %808 = vst [vmem:[%s178 + $0x9d0] sm:$0xff] %v807
                %v809 = vld [vmem:[%s177 + $0x13a8] sm:$0xff]
                %810 = vst [vmem:[%s178 + $0x9d8] sm:$0xff] %v809
                %v811 = vld [vmem:[%s177 + $0x13c0] sm:$0xff]
                %812 = vst [vmem:[%s178 + $0x9e0] sm:$0xff] %v811
                %v813 = vld [vmem:[%s177 + $0x13c8] sm:$0xff]
                %814 = vst [vmem:[%s178 + $0x9e8] sm:$0xff] %v813
                %v815 = vld [vmem:[%s177 + $0x13e0] sm:$0xff]
                %816 = vst [vmem:[%s178 + $0x9f0] sm:$0xff] %v815
                %v817 = vld [vmem:[%s177 + $0x13e8] sm:$0xff]
                %818 = vst [vmem:[%s178 + $0x9f8] sm:$0xff] %v817
                %v819 = vld [vmem:[%s177 + $0x1400] sm:$0xff]
                %820 = vst [vmem:[%s178 + $0xa00] sm:$0xff] %v819
                %v821 = vld [vmem:[%s177 + $0x1408] sm:$0xff]
                %822 = vst [vmem:[%s178 + $0xa08] sm:$0xff] %v821
                %v823 = vld [vmem:[%s177 + $0x1420] sm:$0xff]
                %824 = vst [vmem:[%s178 + $0xa10] sm:$0xff] %v823
                %v825 = vld [vmem:[%s177 + $0x1428] sm:$0xff]
                %826 = vst [vmem:[%s178 + $0xa18] sm:$0xff] %v825
                %v827 = vld [vmem:[%s177 + $0x1440] sm:$0xff]
                %828 = vst [vmem:[%s178 + $0xa20] sm:$0xff] %v827
                %v829 = vld [vmem:[%s177 + $0x1448] sm:$0xff]
                %830 = vst [vmem:[%s178 + $0xa28] sm:$0xff] %v829
                %v831 = vld [vmem:[%s177 + $0x1460] sm:$0xff]
                %832 = vst [vmem:[%s178 + $0xa30] sm:$0xff] %v831
                %v833 = vld [vmem:[%s177 + $0x1468] sm:$0xff]
                %834 = vst [vmem:[%s178 + $0xa38] sm:$0xff] %v833
                %v835 = vld [vmem:[%s177 + $0x1480] sm:$0xff]
                %836 = vst [vmem:[%s178 + $0xa40] sm:$0xff] %v835
                %v837 = vld [vmem:[%s177 + $0x1488] sm:$0xff]
                %838 = vst [vmem:[%s178 + $0xa48] sm:$0xff] %v837
                %v839 = vld [vmem:[%s177 + $0x14a0] sm:$0xff]
                %840 = vst [vmem:[%s178 + $0xa50] sm:$0xff] %v839
                %v841 = vld [vmem:[%s177 + $0x14a8] sm:$0xff]
                %842 = vst [vmem:[%s178 + $0xa58] sm:$0xff] %v841
                %v843 = vld [vmem:[%s177 + $0x14c0] sm:$0xff]
                %844 = vst [vmem:[%s178 + $0xa60] sm:$0xff] %v843
                %v845 = vld [vmem:[%s177 + $0x14c8] sm:$0xff]
                %846 = vst [vmem:[%s178 + $0xa68] sm:$0xff] %v845
                %v847 = vld [vmem:[%s177 + $0x14e0] sm:$0xff]
                %848 = vst [vmem:[%s178 + $0xa70] sm:$0xff] %v847
                %v849 = vld [vmem:[%s177 + $0x14e8] sm:$0xff]
                %850 = vst [vmem:[%s178 + $0xa78] sm:$0xff] %v849
                %v851 = vld [vmem:[%s177 + $0x1500] sm:$0xff]
                %852 = vst [vmem:[%s178 + $0xa80] sm:$0xff] %v851
                %v853 = vld [vmem:[%s177 + $0x1508] sm:$0xff]
                %854 = vst [vmem:[%s178 + $0xa88] sm:$0xff] %v853
                %v855 = vld [vmem:[%s177 + $0x1520] sm:$0xff]
                %856 = vst [vmem:[%s178 + $0xa90] sm:$0xff] %v855
                %v857 = vld [vmem:[%s177 + $0x1528] sm:$0xff]
                %858 = vst [vmem:[%s178 + $0xa98] sm:$0xff] %v857
                %v859 = vld [vmem:[%s177 + $0x1540] sm:$0xff]
                %860 = vst [vmem:[%s178 + $0xaa0] sm:$0xff] %v859
                %v861 = vld [vmem:[%s177 + $0x1548] sm:$0xff]
                %862 = vst [vmem:[%s178 + $0xaa8] sm:$0xff] %v861
                %v863 = vld [vmem:[%s177 + $0x1560] sm:$0xff]
                %864 = vst [vmem:[%s178 + $0xab0] sm:$0xff] %v863
                %v865 = vld [vmem:[%s177 + $0x1568] sm:$0xff]
                %866 = vst [vmem:[%s178 + $0xab8] sm:$0xff] %v865
                %v867 = vld [vmem:[%s177 + $0x1580] sm:$0xff]
                %868 = vst [vmem:[%s178 + $0xac0] sm:$0xff] %v867
                %v869 = vld [vmem:[%s177 + $0x1588] sm:$0xff]
                %870 = vst [vmem:[%s178 + $0xac8] sm:$0xff] %v869
                %v871 = vld [vmem:[%s177 + $0x15a0] sm:$0xff]
                %872 = vst [vmem:[%s178 + $0xad0] sm:$0xff] %v871
                %v873 = vld [vmem:[%s177 + $0x15a8] sm:$0xff]
                %874 = vst [vmem:[%s178 + $0xad8] sm:$0xff] %v873
                %v875 = vld [vmem:[%s177 + $0x15c0] sm:$0xff]
                %876 = vst [vmem:[%s178 + $0xae0] sm:$0xff] %v875
                %v877 = vld [vmem:[%s177 + $0x15c8] sm:$0xff]
                %878 = vst [vmem:[%s178 + $0xae8] sm:$0xff] %v877
                %v879 = vld [vmem:[%s177 + $0x15e0] sm:$0xff]
                %880 = vst [vmem:[%s178 + $0xaf0] sm:$0xff] %v879
                %v881 = vld [vmem:[%s177 + $0x15e8] sm:$0xff]
                %882 = vst [vmem:[%s178 + $0xaf8] sm:$0xff] %v881
                %v883 = vld [vmem:[%s177 + $0x1600] sm:$0xff]
                %884 = vst [vmem:[%s178 + $0xb00] sm:$0xff] %v883
                %v885 = vld [vmem:[%s177 + $0x1608] sm:$0xff]
                %886 = vst [vmem:[%s178 + $0xb08] sm:$0xff] %v885
                %v887 = vld [vmem:[%s177 + $0x1620] sm:$0xff]
                %888 = vst [vmem:[%s178 + $0xb10] sm:$0xff] %v887
                %v889 = vld [vmem:[%s177 + $0x1628] sm:$0xff]
                %890 = vst [vmem:[%s178 + $0xb18] sm:$0xff] %v889
                %v891 = vld [vmem:[%s177 + $0x1640] sm:$0xff]
                %892 = vst [vmem:[%s178 + $0xb20] sm:$0xff] %v891
                %v893 = vld [vmem:[%s177 + $0x1648] sm:$0xff]
                %894 = vst [vmem:[%s178 + $0xb28] sm:$0xff] %v893
                %v895 = vld [vmem:[%s177 + $0x1660] sm:$0xff]
                %896 = vst [vmem:[%s178 + $0xb30] sm:$0xff] %v895
                %v897 = vld [vmem:[%s177 + $0x1668] sm:$0xff]
                %898 = vst [vmem:[%s178 + $0xb38] sm:$0xff] %v897
                %v899 = vld [vmem:[%s177 + $0x1680] sm:$0xff]
                %900 = vst [vmem:[%s178 + $0xb40] sm:$0xff] %v899
                %v901 = vld [vmem:[%s177 + $0x1688] sm:$0xff]
                %902 = vst [vmem:[%s178 + $0xb48] sm:$0xff] %v901
                %v903 = vld [vmem:[%s177 + $0x16a0] sm:$0xff]
                %904 = vst [vmem:[%s178 + $0xb50] sm:$0xff] %v903
                %v905 = vld [vmem:[%s177 + $0x16a8] sm:$0xff]
                %906 = vst [vmem:[%s178 + $0xb58] sm:$0xff] %v905
                %v907 = vld [vmem:[%s177 + $0x16c0] sm:$0xff]
                %908 = vst [vmem:[%s178 + $0xb60] sm:$0xff] %v907
                %v909 = vld [vmem:[%s177 + $0x16c8] sm:$0xff]
                %910 = vst [vmem:[%s178 + $0xb68] sm:$0xff] %v909
                %v911 = vld [vmem:[%s177 + $0x16e0] sm:$0xff]
                %912 = vst [vmem:[%s178 + $0xb70] sm:$0xff] %v911
                %v913 = vld [vmem:[%s177 + $0x16e8] sm:$0xff]
                %914 = vst [vmem:[%s178 + $0xb78] sm:$0xff] %v913
                %v915 = vld [vmem:[%s177 + $0x1700] sm:$0xff]
                %916 = vst [vmem:[%s178 + $0xb80] sm:$0xff] %v915
                %v917 = vld [vmem:[%s177 + $0x1708] sm:$0xff]
                %918 = vst [vmem:[%s178 + $0xb88] sm:$0xff] %v917
                %v919 = vld [vmem:[%s177 + $0x1720] sm:$0xff]
                %920 = vst [vmem:[%s178 + $0xb90] sm:$0xff] %v919
                %v921 = vld [vmem:[%s177 + $0x1728] sm:$0xff]
                %922 = vst [vmem:[%s178 + $0xb98] sm:$0xff] %v921
                %v923 = vld [vmem:[%s177 + $0x1740] sm:$0xff]
                %924 = vst [vmem:[%s178 + $0xba0] sm:$0xff] %v923
                %v925 = vld [vmem:[%s177 + $0x1748] sm:$0xff]
                %926 = vst [vmem:[%s178 + $0xba8] sm:$0xff] %v925
                %v927 = vld [vmem:[%s177 + $0x1760] sm:$0xff]
                %928 = vst [vmem:[%s178 + $0xbb0] sm:$0xff] %v927
                %v929 = vld [vmem:[%s177 + $0x1768] sm:$0xff]
                %930 = vst [vmem:[%s178 + $0xbb8] sm:$0xff] %v929
                %v931 = vld [vmem:[%s177 + $0x1780] sm:$0xff]
                %932 = vst [vmem:[%s178 + $0xbc0] sm:$0xff] %v931
                %v933 = vld [vmem:[%s177 + $0x1788] sm:$0xff]
                %934 = vst [vmem:[%s178 + $0xbc8] sm:$0xff] %v933
                %v935 = vld [vmem:[%s177 + $0x17a0] sm:$0xff]
                %936 = vst [vmem:[%s178 + $0xbd0] sm:$0xff] %v935
                %v937 = vld [vmem:[%s177 + $0x17a8] sm:$0xff]
                %938 = vst [vmem:[%s178 + $0xbd8] sm:$0xff] %v937
                %v939 = vld [vmem:[%s177 + $0x17c0] sm:$0xff]
                %940 = vst [vmem:[%s178 + $0xbe0] sm:$0xff] %v939
                %v941 = vld [vmem:[%s177 + $0x17c8] sm:$0xff]
                %942 = vst [vmem:[%s178 + $0xbe8] sm:$0xff] %v941
                %v943 = vld [vmem:[%s177 + $0x17e0] sm:$0xff]
                %944 = vst [vmem:[%s178 + $0xbf0] sm:$0xff] %v943
                %v945 = vld [vmem:[%s177 + $0x17e8] sm:$0xff]
                %946 = vst [vmem:[%s178 + $0xbf8] sm:$0xff] %v945
                %v947 = vld [vmem:[%s177 + $0x1800] sm:$0xff]
                %948 = vst [vmem:[%s178 + $0xc00] sm:$0xff] %v947
                %v949 = vld [vmem:[%s177 + $0x1808] sm:$0xff]
                %950 = vst [vmem:[%s178 + $0xc08] sm:$0xff] %v949
                %v951 = vld [vmem:[%s177 + $0x1820] sm:$0xff]
                %952 = vst [vmem:[%s178 + $0xc10] sm:$0xff] %v951
                %v953 = vld [vmem:[%s177 + $0x1828] sm:$0xff]
                %954 = vst [vmem:[%s178 + $0xc18] sm:$0xff] %v953
                %v955 = vld [vmem:[%s177 + $0x1840] sm:$0xff]
                %956 = vst [vmem:[%s178 + $0xc20] sm:$0xff] %v955
                %v957 = vld [vmem:[%s177 + $0x1848] sm:$0xff]
                %958 = vst [vmem:[%s178 + $0xc28] sm:$0xff] %v957
                %v959 = vld [vmem:[%s177 + $0x1860] sm:$0xff]
                %960 = vst [vmem:[%s178 + $0xc30] sm:$0xff] %v959
                %v961 = vld [vmem:[%s177 + $0x1868] sm:$0xff]
                %962 = vst [vmem:[%s178 + $0xc38] sm:$0xff] %v961
              $region37: #{deepmind_forward.3} parent=31 // loop_footer
                %s176 = sadd.s32 1, %s172
              $region38: #{deepmind_forward.3} parent=31 // loop_footer_branch
                %171 = sbr.rel target = $region34
              $region39: #{deepmind_forward.3} parent=31 // loop_exit
                _
            $region32: #{deepmind_forward.3} parent=27 // pred_fallthru
              _
            // Predicated region
            $region40: #{deepmind_forward.3} parent=27 // pred_check
              _
            $region41: #{deepmind_forward.3} parent=27 // pred_check_branch
              %964 = sbr.rel target = $region43
            $region42: #{deepmind_forward.3} parent=27 // pred_region
              _
            $region43: #{deepmind_forward.3} parent=27 // pred_fallthru
              _
          $region28: #{deepmind_forward.3} parent=23 // pred_fallthru
            _
          %965 = vnop
        $region24: #{deepmind_forward.3} parent=19 // pred_fallthru
          _
        // Predicated region
        $region44: #{deepmind_forward.3} parent=19 // pred_check
          %p966 = pneg %p96
        $region45: #{deepmind_forward.3} parent=19 // pred_check_branch
          %968 = sbr.rel (%p966) target = $region47
        $region46: #{deepmind_forward.3} parent=19 // pred_region
          %s969 = smul.u32 2, %s20
          %p970 = scmp.lt.s32.totalorder %s969, 3
          %s971 = scalar_select %p970, %s969, 3
          %s972 = scalar_lea.vmem %s2, %s971
          %s973 = smul.u32 2, %s20
        $region47: #{deepmind_forward.3} parent=19 // pred_fallthru
          _
      $region20: #{deepmind_forward.3} parent=5 // pred_fallthru
        _
      %p974 = scmp.le.s32.totalorder 1, %s12
      %p975 = scmp.lt.s32.totalorder %s12, 3
      %p976 = pnand %p974, %p975
      %p977 = pneg %p976
      // Predicated region
      $region48: #{deepmind_forward.3} parent=5 // pred_check
        _
      $region49: #{deepmind_forward.3} parent=5 // pred_check_branch
        %979 = sbr.rel (%p976) target = $region51
      $region50: #{deepmind_forward.3} parent=5 // pred_region
        %s980 = ssub.s32 %s12, 1
        %s981 = sand.u32 %s63, 1
        %s982 = sand.u32 %s63, 1
        %s983 = smul.addr %s982, 3136
        %s984 = scalar_lea.vmem [#allocation2], %s983
        // Predicated region
        $region52: #{deepmind_forward.3} parent=50 // pred_check
          %p985 = pneg %p76
        $region53: #{deepmind_forward.3} parent=50 // pred_check_branch
          %987 = sbr.rel (%p985) target = $region55
        $region54: #{deepmind_forward.3} parent=50 // pred_region
          _
        $region55: #{deepmind_forward.3} parent=50 // pred_fallthru
          _
        %p988 = scmp.lt.s32.totalorder %s21, 0
        %s989 = scalar_select %p988, %s21, 0
        %s990 = smul.addr %s989, 13
        %s991 = smul.addr %s990, 2
        %s992 = scalar_lea.vmem %s0, %s991
        %p993 = pneg %p50
        %p994 = pneg %p47
        %s995 = sand.u32 %s63, 1
        %s996 = sand.u32 %s63, 1
        %s997 = smul.addr %s996, 3136
        %s998 = scalar_lea.vmem [#allocation2], %s997
        %p999 = pneg %p76
        %p1000 = pneg %p73
        %s1001 = smul.u32 2, %s22
        %p1002 = scmp.lt.s32.totalorder %s1001, 3
        %s1003 = scalar_select %p1002, %s1001, 3
        %s1004 = scalar_lea.vmem %s2, %s1003
        %p1005 = pneg %p102
        %p1006 = pneg %p99
        %p1007 = pneg %p130
        %p1008 = pneg %p127
        %s1009 = sand.u32 %s117, 1
        %s1010 = scalar_lea.sflag [#allocation4], %s1009
        %s1011 = sand.u32 %s117, 1
        %s1012 = smul.addr %s1011, 4
        %s1013 = scalar_lea.vmem [#allocation3], %s1012
        %p1014 = scmp.lt.s32.totalorder %s21, 0
        %s1015 = scalar_select %p1014, %s21, 0
        %s1016 = smul.addr %s1015, 13
        %s1017 = smul.addr %s1016, 2
        %s1018 = scalar_lea.vmem %s0, %s1017
        %s1019 = smul.u32 2, %s22
        %s1020 = smul.u32 2, %s22
        %p1021 = scmp.lt.s32.totalorder %s1020, 3
        %s1022 = scalar_select %p1021, %s1020, 3
        %s1023 = scalar_lea.vmem %s2, %s1022
        %s1024 = smul.u32 2, %s22
        %s1025 = smul.u32 2, %s22
        %v1026 = vld [vmem:[%s1018] sm:$0xff]
        %v1027 = vld [vmem:[%s1018 + $0x8] sm:$0xff]
        %v1028 = vld [vmem:[%s1018 + $0x10] sm:$0xff]
        %v1029 = vld [vmem:[%s1018 + $0x18] sm:$0x3]
        %v1030 = vld [vmem:[%s984] sm:$0xff]
        %v1031 = vld [vmem:[%s984 + $0x8] sm:$0xff]
        %v1032 = vld [vmem:[%s984 + $0x10] sm:$0xff]
        %v1033 = vld [vmem:[%s984 + $0x18] sm:$0xff]
        %v1034 = vld [vmem:[%s984 + $0x20] sm:$0xff]
        %v1035 = vld [vmem:[%s984 + $0x28] sm:$0xff]
        %v1036 = vld [vmem:[%s984 + $0x30] sm:$0xff]
        %v1037 = vld [vmem:[%s984 + $0x38] sm:$0xff]
        %v1038 = vld [vmem:[%s984 + $0x40] sm:$0xff]
        %v1039 = vld [vmem:[%s984 + $0x48] sm:$0xff]
        %v1040 = vld [vmem:[%s984 + $0x50] sm:$0xff]
        %v1041 = vld [vmem:[%s984 + $0x58] sm:$0xff]
        %v1042 = vld [vmem:[%s984 + $0x60] sm:$0xff]
        %v1043 = vld [vmem:[%s984 + $0x68] sm:$0xff]
        %v1044 = vld [vmem:[%s984 + $0x70] sm:$0xff]
        %v1045 = vld [vmem:[%s984 + $0x78] sm:$0xff]
        %v1046 = vld [vmem:[%s984 + $0x80] sm:$0xff]
        %v1047 = vld [vmem:[%s984 + $0x88] sm:$0xff]
        %v1048 = vld [vmem:[%s984 + $0x90] sm:$0xff]
        %v1049 = vld [vmem:[%s984 + $0x98] sm:$0xff]
        %v1050 = vld [vmem:[%s984 + $0xa0] sm:$0xff]
        %v1051 = vld [vmem:[%s984 + $0xa8] sm:$0xff]
        %v1052 = vld [vmem:[%s984 + $0xb0] sm:$0xff]
        %v1053 = vld [vmem:[%s984 + $0xb8] sm:$0xff]
        %v1054 = vld [vmem:[%s984 + $0xc0] sm:$0xff]
        %v1055 = vld [vmem:[%s984 + $0xc8] sm:$0xff]
        %v1056 = vld [vmem:[%s984 + $0xd0] sm:$0xff]
        %v1057 = vld [vmem:[%s984 + $0xd8] sm:$0xff]
        %v1058 = vld [vmem:[%s984 + $0xe0] sm:$0xff]
        %v1059 = vld [vmem:[%s984 + $0xe8] sm:$0xff]
        %v1060 = vld [vmem:[%s984 + $0xf0] sm:$0xff]
        %v1061 = vld [vmem:[%s984 + $0xf8] sm:$0xff]
        %v1062 = vld [vmem:[%s984 + $0x100] sm:$0xff]
        %v1063 = vld [vmem:[%s984 + $0x108] sm:$0xff]
        %v1064 = vld [vmem:[%s984 + $0x110] sm:$0xff]
        %v1065 = vld [vmem:[%s984 + $0x118] sm:$0xff]
        %v1066 = vld [vmem:[%s984 + $0x120] sm:$0xff]
        %v1067 = vld [vmem:[%s984 + $0x128] sm:$0xff]
        %v1068 = vld [vmem:[%s984 + $0x130] sm:$0xff]
        %v1069 = vld [vmem:[%s984 + $0x138] sm:$0xff]
        %v1070 = vld [vmem:[%s984 + $0x140] sm:$0xff]
        %v1071 = vld [vmem:[%s984 + $0x148] sm:$0xff]
        %v1072 = vld [vmem:[%s984 + $0x150] sm:$0xff]
        %v1073 = vld [vmem:[%s984 + $0x158] sm:$0xff]
        %v1074 = vld [vmem:[%s984 + $0x160] sm:$0xff]
        %v1075 = vld [vmem:[%s984 + $0x168] sm:$0xff]
        %v1076 = vld [vmem:[%s984 + $0x170] sm:$0xff]
        %v1077 = vld [vmem:[%s984 + $0x178] sm:$0xff]
        %v1078 = vld [vmem:[%s984 + $0x180] sm:$0xff]
        %v1079 = vld [vmem:[%s984 + $0x188] sm:$0xff]
        %v1080 = vld [vmem:[%s984 + $0x190] sm:$0xff]
        %v1081 = vld [vmem:[%s984 + $0x198] sm:$0xff]
        %v1082 = vld [vmem:[%s984 + $0x1a0] sm:$0xff]
        %v1083 = vld [vmem:[%s984 + $0x1a8] sm:$0xff]
        %v1084 = vld [vmem:[%s984 + $0x1b0] sm:$0xff]
        %v1085 = vld [vmem:[%s984 + $0x1b8] sm:$0xff]
        %v1086 = vld [vmem:[%s984 + $0x1c0] sm:$0xff]
        %v1087 = vld [vmem:[%s984 + $0x1c8] sm:$0xff]
        %v1088 = vld [vmem:[%s984 + $0x1d0] sm:$0xff]
        %v1089 = vld [vmem:[%s984 + $0x1d8] sm:$0xff]
        %v1090 = vld [vmem:[%s984 + $0x1e0] sm:$0xff]
        %v1091 = vld [vmem:[%s984 + $0x1e8] sm:$0xff]
        %v1092 = vld [vmem:[%s984 + $0x1f0] sm:$0xff]
        %v1093 = vld [vmem:[%s984 + $0x1f8] sm:$0xff]
        %v1094 = vld [vmem:[%s984 + $0x200] sm:$0xff]
        %v1095 = vld [vmem:[%s984 + $0x208] sm:$0xff]
        %v1096 = vld [vmem:[%s984 + $0x210] sm:$0xff]
        %v1097 = vld [vmem:[%s984 + $0x218] sm:$0xff]
        %v1098 = vld [vmem:[%s984 + $0x220] sm:$0xff]
        %v1099 = vld [vmem:[%s984 + $0x228] sm:$0xff]
        %v1100 = vld [vmem:[%s984 + $0x230] sm:$0xff]
        %v1101 = vld [vmem:[%s984 + $0x238] sm:$0xff]
        %v1102 = vld [vmem:[%s984 + $0x240] sm:$0xff]
        %v1103 = vld [vmem:[%s984 + $0x248] sm:$0xff]
        %v1104 = vld [vmem:[%s984 + $0x250] sm:$0xff]
        %v1105 = vld [vmem:[%s984 + $0x258] sm:$0xff]
        %v1106 = vld [vmem:[%s984 + $0x260] sm:$0xff]
        %v1107 = vld [vmem:[%s984 + $0x268] sm:$0xff]
        %v1108 = vld [vmem:[%s984 + $0x270] sm:$0xff]
        %v1109 = vld [vmem:[%s984 + $0x278] sm:$0xff]
        %v1110 = vld [vmem:[%s984 + $0x280] sm:$0xff]
        %v1111 = vld [vmem:[%s984 + $0x288] sm:$0xff]
        %v1112 = vld [vmem:[%s984 + $0x290] sm:$0xff]
        %v1113 = vld [vmem:[%s984 + $0x298] sm:$0xff]
        %v1114 = vld [vmem:[%s984 + $0x2a0] sm:$0xff]
        %v1115 = vld [vmem:[%s984 + $0x2a8] sm:$0xff]
        %v1116 = vld [vmem:[%s984 + $0x2b0] sm:$0xff]
        %v1117 = vld [vmem:[%s984 + $0x2b8] sm:$0xff]
        %v1118 = vld [vmem:[%s984 + $0x2c0] sm:$0xff]
        %v1119 = vld [vmem:[%s984 + $0x2c8] sm:$0xff]
        %v1120 = vld [vmem:[%s984 + $0x2d0] sm:$0xff]
        %v1121 = vld [vmem:[%s984 + $0x2d8] sm:$0xff]
        %v1122 = vld [vmem:[%s984 + $0x2e0] sm:$0xff]
        %v1123 = vld [vmem:[%s984 + $0x2e8] sm:$0xff]
        %v1124 = vld [vmem:[%s984 + $0x2f0] sm:$0xff]
        %v1125 = vld [vmem:[%s984 + $0x2f8] sm:$0xff]
        %v1126 = vld [vmem:[%s984 + $0x300] sm:$0xff]
        %v1127 = vld [vmem:[%s984 + $0x308] sm:$0xff]
        %v1128 = vld [vmem:[%s984 + $0x310] sm:$0xff]
        %v1129 = vld [vmem:[%s984 + $0x318] sm:$0xff]
        %v1130 = vld [vmem:[%s984 + $0x320] sm:$0xff]
        %v1131 = vld [vmem:[%s984 + $0x328] sm:$0xff]
        %v1132 = vld [vmem:[%s984 + $0x330] sm:$0xff]
        %v1133 = vld [vmem:[%s984 + $0x338] sm:$0xff]
        %v1134 = vld [vmem:[%s984 + $0x340] sm:$0xff]
        %v1135 = vld [vmem:[%s984 + $0x348] sm:$0xff]
        %v1136 = vld [vmem:[%s984 + $0x350] sm:$0xff]
        %v1137 = vld [vmem:[%s984 + $0x358] sm:$0xff]
        %v1138 = vld [vmem:[%s984 + $0x360] sm:$0xff]
        %v1139 = vld [vmem:[%s984 + $0x368] sm:$0xff]
        %v1140 = vld [vmem:[%s984 + $0x370] sm:$0xff]
        %v1141 = vld [vmem:[%s984 + $0x378] sm:$0xff]
        %v1142 = vld [vmem:[%s984 + $0x380] sm:$0xff]
        %v1143 = vld [vmem:[%s984 + $0x388] sm:$0xff]
        %v1144 = vld [vmem:[%s984 + $0x390] sm:$0xff]
        %v1145 = vld [vmem:[%s984 + $0x398] sm:$0xff]
        %v1146 = vld [vmem:[%s984 + $0x3a0] sm:$0xff]
        %v1147 = vld [vmem:[%s984 + $0x3a8] sm:$0xff]
        %v1148 = vld [vmem:[%s984 + $0x3b0] sm:$0xff]
        %v1149 = vld [vmem:[%s984 + $0x3b8] sm:$0xff]
        %v1150 = vld [vmem:[%s984 + $0x3c0] sm:$0xff]
        %v1151 = vld [vmem:[%s984 + $0x3c8] sm:$0xff]
        %v1152 = vld [vmem:[%s984 + $0x3d0] sm:$0xff]
        %v1153 = vld [vmem:[%s984 + $0x3d8] sm:$0xff]
        %v1154 = vld [vmem:[%s984 + $0x3e0] sm:$0xff]
        %v1155 = vld [vmem:[%s984 + $0x3e8] sm:$0xff]
        %v1156 = vld [vmem:[%s984 + $0x3f0] sm:$0xff]
        %v1157 = vld [vmem:[%s984 + $0x3f8] sm:$0xff]
        %v1158 = vld [vmem:[%s984 + $0x400] sm:$0xff]
        %v1159 = vld [vmem:[%s984 + $0x408] sm:$0xff]
        %v1160 = vld [vmem:[%s984 + $0x410] sm:$0xff]
        %v1161 = vld [vmem:[%s984 + $0x418] sm:$0xff]
        %v1162 = vld [vmem:[%s984 + $0x420] sm:$0xff]
        %v1163 = vld [vmem:[%s984 + $0x428] sm:$0xff]
        %v1164 = vld [vmem:[%s984 + $0x430] sm:$0xff]
        %v1165 = vld [vmem:[%s984 + $0x438] sm:$0xff]
        %v1166 = vld [vmem:[%s984 + $0x440] sm:$0xff]
        %v1167 = vld [vmem:[%s984 + $0x448] sm:$0xff]
        %v1168 = vld [vmem:[%s984 + $0x450] sm:$0xff]
        %v1169 = vld [vmem:[%s984 + $0x458] sm:$0xff]
        %v1170 = vld [vmem:[%s984 + $0x460] sm:$0xff]
        %v1171 = vld [vmem:[%s984 + $0x468] sm:$0xff]
        %v1172 = vld [vmem:[%s984 + $0x470] sm:$0xff]
        %v1173 = vld [vmem:[%s984 + $0x478] sm:$0xff]
        %v1174 = vld [vmem:[%s984 + $0x480] sm:$0xff]
        %v1175 = vld [vmem:[%s984 + $0x488] sm:$0xff]
        %v1176 = vld [vmem:[%s984 + $0x490] sm:$0xff]
        %v1177 = vld [vmem:[%s984 + $0x498] sm:$0xff]
        %v1178 = vld [vmem:[%s984 + $0x4a0] sm:$0xff]
        %v1179 = vld [vmem:[%s984 + $0x4a8] sm:$0xff]
        %v1180 = vld [vmem:[%s984 + $0x4b0] sm:$0xff]
        %v1181 = vld [vmem:[%s984 + $0x4b8] sm:$0xff]
        %v1182 = vld [vmem:[%s984 + $0x4c0] sm:$0xff]
        %v1183 = vld [vmem:[%s984 + $0x4c8] sm:$0xff]
        %v1184 = vld [vmem:[%s984 + $0x4d0] sm:$0xff]
        %v1185 = vld [vmem:[%s984 + $0x4d8] sm:$0xff]
        %v1186 = vld [vmem:[%s984 + $0x4e0] sm:$0xff]
        %v1187 = vld [vmem:[%s984 + $0x4e8] sm:$0xff]
        %v1188 = vld [vmem:[%s984 + $0x4f0] sm:$0xff]
        %v1189 = vld [vmem:[%s984 + $0x4f8] sm:$0xff]
        %v1190 = vld [vmem:[%s984 + $0x500] sm:$0xff]
        %v1191 = vld [vmem:[%s984 + $0x508] sm:$0xff]
        %v1192 = vld [vmem:[%s984 + $0x510] sm:$0xff]
        %v1193 = vld [vmem:[%s984 + $0x518] sm:$0xff]
        %v1194 = vld [vmem:[%s984 + $0x520] sm:$0xff]
        %v1195 = vld [vmem:[%s984 + $0x528] sm:$0xff]
        %v1196 = vld [vmem:[%s984 + $0x530] sm:$0xff]
        %v1197 = vld [vmem:[%s984 + $0x538] sm:$0xff]
        %v1198 = vld [vmem:[%s984 + $0x540] sm:$0xff]
        %v1199 = vld [vmem:[%s984 + $0x548] sm:$0xff]
        %v1200 = vld [vmem:[%s984 + $0x550] sm:$0xff]
        %v1201 = vld [vmem:[%s984 + $0x558] sm:$0xff]
        %v1202 = vld [vmem:[%s984 + $0x560] sm:$0xff]
        %v1203 = vld [vmem:[%s984 + $0x568] sm:$0xff]
        %v1204 = vld [vmem:[%s984 + $0x570] sm:$0xff]
        %v1205 = vld [vmem:[%s984 + $0x578] sm:$0xff]
        %v1206 = vld [vmem:[%s984 + $0x580] sm:$0xff]
        %v1207 = vld [vmem:[%s984 + $0x588] sm:$0xff]
        %v1208 = vld [vmem:[%s984 + $0x590] sm:$0xff]
        %v1209 = vld [vmem:[%s984 + $0x598] sm:$0xff]
        %v1210 = vld [vmem:[%s984 + $0x5a0] sm:$0xff]
        %v1211 = vld [vmem:[%s984 + $0x5a8] sm:$0xff]
        %v1212 = vld [vmem:[%s984 + $0x5b0] sm:$0xff]
        %v1213 = vld [vmem:[%s984 + $0x5b8] sm:$0xff]
        %v1214 = vld [vmem:[%s984 + $0x5c0] sm:$0xff]
        %v1215 = vld [vmem:[%s984 + $0x5c8] sm:$0xff]
        %v1216 = vld [vmem:[%s984 + $0x5d0] sm:$0xff]
        %v1217 = vld [vmem:[%s984 + $0x5d8] sm:$0xff]
        %v1218 = vld [vmem:[%s984 + $0x5e0] sm:$0xff]
        %v1219 = vld [vmem:[%s984 + $0x5e8] sm:$0xff]
        %v1220 = vld [vmem:[%s984 + $0x5f0] sm:$0xff]
        %v1221 = vld [vmem:[%s984 + $0x5f8] sm:$0xff]
        %v1222 = vld [vmem:[%s984 + $0x600] sm:$0xff]
        %v1223 = vld [vmem:[%s984 + $0x608] sm:$0xff]
        %v1224 = vld [vmem:[%s984 + $0x610] sm:$0xff]
        %v1225 = vld [vmem:[%s984 + $0x618] sm:$0xff]
        %v1226 = vld [vmem:[%s984 + $0x620] sm:$0xff]
        %v1227 = vld [vmem:[%s984 + $0x628] sm:$0xff]
        %v1228 = vld [vmem:[%s984 + $0x630] sm:$0xff]
        %v1229 = vld [vmem:[%s984 + $0x638] sm:$0xff]
        %v1230 = vld [vmem:[%s984 + $0x640] sm:$0xff]
        %v1231 = vld [vmem:[%s984 + $0x648] sm:$0xff]
        %v1232 = vld [vmem:[%s984 + $0x650] sm:$0xff]
        %v1233 = vld [vmem:[%s984 + $0x658] sm:$0xff]
        %v1234 = vld [vmem:[%s984 + $0x660] sm:$0xff]
        %v1235 = vld [vmem:[%s984 + $0x668] sm:$0xff]
        %v1236 = vld [vmem:[%s984 + $0x670] sm:$0xff]
        %v1237 = vld [vmem:[%s984 + $0x678] sm:$0xff]
        %v1238 = vld [vmem:[%s984 + $0x680] sm:$0xff]
        %v1239 = vld [vmem:[%s984 + $0x688] sm:$0xff]
        %v1240 = vld [vmem:[%s984 + $0x690] sm:$0xff]
        %v1241 = vld [vmem:[%s984 + $0x698] sm:$0xff]
        %v1242 = vld [vmem:[%s984 + $0x6a0] sm:$0xff]
        %v1243 = vld [vmem:[%s984 + $0x6a8] sm:$0xff]
        %v1244 = vld [vmem:[%s984 + $0x6b0] sm:$0xff]
        %v1245 = vld [vmem:[%s984 + $0x6b8] sm:$0xff]
        %v1246 = vld [vmem:[%s984 + $0x6c0] sm:$0xff]
        %v1247 = vld [vmem:[%s984 + $0x6c8] sm:$0xff]
        %v1248 = vld [vmem:[%s984 + $0x6d0] sm:$0xff]
        %v1249 = vld [vmem:[%s984 + $0x6d8] sm:$0xff]
        %v1250 = vld [vmem:[%s984 + $0x6e0] sm:$0xff]
        %v1251 = vld [vmem:[%s984 + $0x6e8] sm:$0xff]
        %v1252 = vld [vmem:[%s984 + $0x6f0] sm:$0xff]
        %v1253 = vld [vmem:[%s984 + $0x6f8] sm:$0xff]
        %v1254 = vld [vmem:[%s984 + $0x700] sm:$0xff]
        %v1255 = vld [vmem:[%s984 + $0x708] sm:$0xff]
        %v1256 = vld [vmem:[%s984 + $0x710] sm:$0xff]
        %v1257 = vld [vmem:[%s984 + $0x718] sm:$0xff]
        %v1258 = vld [vmem:[%s984 + $0x720] sm:$0xff]
        %v1259 = vld [vmem:[%s984 + $0x728] sm:$0xff]
        %v1260 = vld [vmem:[%s984 + $0x730] sm:$0xff]
        %v1261 = vld [vmem:[%s984 + $0x738] sm:$0xff]
        %v1262 = vld [vmem:[%s984 + $0x740] sm:$0xff]
        %v1263 = vld [vmem:[%s984 + $0x748] sm:$0xff]
        %v1264 = vld [vmem:[%s984 + $0x750] sm:$0xff]
        %v1265 = vld [vmem:[%s984 + $0x758] sm:$0xff]
        %v1266 = vld [vmem:[%s984 + $0x760] sm:$0xff]
        %v1267 = vld [vmem:[%s984 + $0x768] sm:$0xff]
        %v1268 = vld [vmem:[%s984 + $0x770] sm:$0xff]
        %v1269 = vld [vmem:[%s984 + $0x778] sm:$0xff]
        %v1270 = vld [vmem:[%s984 + $0x780] sm:$0xff]
        %v1271 = vld [vmem:[%s984 + $0x788] sm:$0xff]
        %v1272 = vld [vmem:[%s984 + $0x790] sm:$0xff]
        %v1273 = vld [vmem:[%s984 + $0x798] sm:$0xff]
        %v1274 = vld [vmem:[%s984 + $0x7a0] sm:$0xff]
        %v1275 = vld [vmem:[%s984 + $0x7a8] sm:$0xff]
        %v1276 = vld [vmem:[%s984 + $0x7b0] sm:$0xff]
        %v1277 = vld [vmem:[%s984 + $0x7b8] sm:$0xff]
        %v1278 = vld [vmem:[%s984 + $0x7c0] sm:$0xff]
        %v1279 = vld [vmem:[%s984 + $0x7c8] sm:$0xff]
        %v1280 = vld [vmem:[%s984 + $0x7d0] sm:$0xff]
        %v1281 = vld [vmem:[%s984 + $0x7d8] sm:$0xff]
        %v1282 = vld [vmem:[%s984 + $0x7e0] sm:$0xff]
        %v1283 = vld [vmem:[%s984 + $0x7e8] sm:$0xff]
        %v1284 = vld [vmem:[%s984 + $0x7f0] sm:$0xff]
        %v1285 = vld [vmem:[%s984 + $0x7f8] sm:$0xff]
        %v1286 = vld [vmem:[%s984 + $0x800] sm:$0xff]
        %v1287 = vld [vmem:[%s984 + $0x808] sm:$0xff]
        %v1288 = vld [vmem:[%s984 + $0x810] sm:$0xff]
        %v1289 = vld [vmem:[%s984 + $0x818] sm:$0xff]
        %v1290 = vld [vmem:[%s984 + $0x820] sm:$0xff]
        %v1291 = vld [vmem:[%s984 + $0x828] sm:$0xff]
        %v1292 = vld [vmem:[%s984 + $0x830] sm:$0xff]
        %v1293 = vld [vmem:[%s984 + $0x838] sm:$0xff]
        %v1294 = vld [vmem:[%s984 + $0x840] sm:$0xff]
        %v1295 = vld [vmem:[%s984 + $0x848] sm:$0xff]
        %v1296 = vld [vmem:[%s984 + $0x850] sm:$0xff]
        %v1297 = vld [vmem:[%s984 + $0x858] sm:$0xff]
        %v1298 = vld [vmem:[%s984 + $0x860] sm:$0xff]
        %v1299 = vld [vmem:[%s984 + $0x868] sm:$0xff]
        %v1300 = vld [vmem:[%s984 + $0x870] sm:$0xff]
        %v1301 = vld [vmem:[%s984 + $0x878] sm:$0xff]
        %v1302 = vld [vmem:[%s984 + $0x880] sm:$0xff]
        %v1303 = vld [vmem:[%s984 + $0x888] sm:$0xff]
        %v1304 = vld [vmem:[%s984 + $0x890] sm:$0xff]
        %v1305 = vld [vmem:[%s984 + $0x898] sm:$0xff]
        %v1306 = vld [vmem:[%s984 + $0x8a0] sm:$0xff]
        %v1307 = vld [vmem:[%s984 + $0x8a8] sm:$0xff]
        %v1308 = vld [vmem:[%s984 + $0x8b0] sm:$0xff]
        %v1309 = vld [vmem:[%s984 + $0x8b8] sm:$0xff]
        %v1310 = vld [vmem:[%s984 + $0x8c0] sm:$0xff]
        %v1311 = vld [vmem:[%s984 + $0x8c8] sm:$0xff]
        %v1312 = vld [vmem:[%s984 + $0x8d0] sm:$0xff]
        %v1313 = vld [vmem:[%s984 + $0x8d8] sm:$0xff]
        %v1314 = vld [vmem:[%s984 + $0x8e0] sm:$0xff]
        %v1315 = vld [vmem:[%s984 + $0x8e8] sm:$0xff]
        %v1316 = vld [vmem:[%s984 + $0x8f0] sm:$0xff]
        %v1317 = vld [vmem:[%s984 + $0x8f8] sm:$0xff]
        %v1318 = vld [vmem:[%s984 + $0x900] sm:$0xff]
        %v1319 = vld [vmem:[%s984 + $0x908] sm:$0xff]
        %v1320 = vld [vmem:[%s984 + $0x910] sm:$0xff]
        %v1321 = vld [vmem:[%s984 + $0x918] sm:$0xff]
        %v1322 = vld [vmem:[%s984 + $0x920] sm:$0xff]
        %v1323 = vld [vmem:[%s984 + $0x928] sm:$0xff]
        %v1324 = vld [vmem:[%s984 + $0x930] sm:$0xff]
        %v1325 = vld [vmem:[%s984 + $0x938] sm:$0xff]
        %v1326 = vld [vmem:[%s984 + $0x940] sm:$0xff]
        %v1327 = vld [vmem:[%s984 + $0x948] sm:$0xff]
        %v1328 = vld [vmem:[%s984 + $0x950] sm:$0xff]
        %v1329 = vld [vmem:[%s984 + $0x958] sm:$0xff]
        %v1330 = vld [vmem:[%s984 + $0x960] sm:$0xff]
        %v1331 = vld [vmem:[%s984 + $0x968] sm:$0xff]
        %v1332 = vld [vmem:[%s984 + $0x970] sm:$0xff]
        %v1333 = vld [vmem:[%s984 + $0x978] sm:$0xff]
        %v1334 = vld [vmem:[%s984 + $0x980] sm:$0xff]
        %v1335 = vld [vmem:[%s984 + $0x988] sm:$0xff]
        %v1336 = vld [vmem:[%s984 + $0x990] sm:$0xff]
        %v1337 = vld [vmem:[%s984 + $0x998] sm:$0xff]
        %v1338 = vld [vmem:[%s984 + $0x9a0] sm:$0xff]
        %v1339 = vld [vmem:[%s984 + $0x9a8] sm:$0xff]
        %v1340 = vld [vmem:[%s984 + $0x9b0] sm:$0xff]
        %v1341 = vld [vmem:[%s984 + $0x9b8] sm:$0xff]
        %v1342 = vld [vmem:[%s984 + $0x9c0] sm:$0xff]
        %v1343 = vld [vmem:[%s984 + $0x9c8] sm:$0xff]
        %v1344 = vld [vmem:[%s984 + $0x9d0] sm:$0xff]
        %v1345 = vld [vmem:[%s984 + $0x9d8] sm:$0xff]
        %v1346 = vld [vmem:[%s984 + $0x9e0] sm:$0xff]
        %v1347 = vld [vmem:[%s984 + $0x9e8] sm:$0xff]
        %v1348 = vld [vmem:[%s984 + $0x9f0] sm:$0xff]
        %v1349 = vld [vmem:[%s984 + $0x9f8] sm:$0xff]
        %v1350 = vld [vmem:[%s984 + $0xa00] sm:$0xff]
        %v1351 = vld [vmem:[%s984 + $0xa08] sm:$0xff]
        %v1352 = vld [vmem:[%s984 + $0xa10] sm:$0xff]
        %v1353 = vld [vmem:[%s984 + $0xa18] sm:$0xff]
        %v1354 = vld [vmem:[%s984 + $0xa20] sm:$0xff]
        %v1355 = vld [vmem:[%s984 + $0xa28] sm:$0xff]
        %v1356 = vld [vmem:[%s984 + $0xa30] sm:$0xff]
        %v1357 = vld [vmem:[%s984 + $0xa38] sm:$0xff]
        %v1358 = vld [vmem:[%s984 + $0xa40] sm:$0xff]
        %v1359 = vld [vmem:[%s984 + $0xa48] sm:$0xff]
        %v1360 = vld [vmem:[%s984 + $0xa50] sm:$0xff]
        %v1361 = vld [vmem:[%s984 + $0xa58] sm:$0xff]
        %v1362 = vld [vmem:[%s984 + $0xa60] sm:$0xff]
        %v1363 = vld [vmem:[%s984 + $0xa68] sm:$0xff]
        %v1364 = vld [vmem:[%s984 + $0xa70] sm:$0xff]
        %v1365 = vld [vmem:[%s984 + $0xa78] sm:$0xff]
        %v1366 = vld [vmem:[%s984 + $0xa80] sm:$0xff]
        %v1367 = vld [vmem:[%s984 + $0xa88] sm:$0xff]
        %v1368 = vld [vmem:[%s984 + $0xa90] sm:$0xff]
        %v1369 = vld [vmem:[%s984 + $0xa98] sm:$0xff]
        %v1370 = vld [vmem:[%s984 + $0xaa0] sm:$0xff]
        %v1371 = vld [vmem:[%s984 + $0xaa8] sm:$0xff]
        %v1372 = vld [vmem:[%s984 + $0xab0] sm:$0xff]
        %v1373 = vld [vmem:[%s984 + $0xab8] sm:$0xff]
        %v1374 = vld [vmem:[%s984 + $0xac0] sm:$0xff]
        %v1375 = vld [vmem:[%s984 + $0xac8] sm:$0xff]
        %v1376 = vld [vmem:[%s984 + $0xad0] sm:$0xff]
        %v1377 = vld [vmem:[%s984 + $0xad8] sm:$0xff]
        %v1378 = vld [vmem:[%s984 + $0xae0] sm:$0xff]
        %v1379 = vld [vmem:[%s984 + $0xae8] sm:$0xff]
        %v1380 = vld [vmem:[%s984 + $0xaf0] sm:$0xff]
        %v1381 = vld [vmem:[%s984 + $0xaf8] sm:$0xff]
        %v1382 = vld [vmem:[%s984 + $0xb00] sm:$0xff]
        %v1383 = vld [vmem:[%s984 + $0xb08] sm:$0xff]
        %v1384 = vld [vmem:[%s984 + $0xb10] sm:$0xff]
        %v1385 = vld [vmem:[%s984 + $0xb18] sm:$0xff]
        %v1386 = vld [vmem:[%s984 + $0xb20] sm:$0xff]
        %v1387 = vld [vmem:[%s984 + $0xb28] sm:$0xff]
        %v1388 = vld [vmem:[%s984 + $0xb30] sm:$0xff]
        %v1389 = vld [vmem:[%s984 + $0xb38] sm:$0xff]
        %v1390 = vld [vmem:[%s984 + $0xb40] sm:$0xff]
        %v1391 = vld [vmem:[%s984 + $0xb48] sm:$0xff]
        %v1392 = vld [vmem:[%s984 + $0xb50] sm:$0xff]
        %v1393 = vld [vmem:[%s984 + $0xb58] sm:$0xff]
        %v1394 = vld [vmem:[%s984 + $0xb60] sm:$0xff]
        %v1395 = vld [vmem:[%s984 + $0xb68] sm:$0xff]
        %v1396 = vld [vmem:[%s984 + $0xb70] sm:$0xff]
        %v1397 = vld [vmem:[%s984 + $0xb78] sm:$0xff]
        %v1398 = vld [vmem:[%s984 + $0xb80] sm:$0xff]
        %v1399 = vld [vmem:[%s984 + $0xb88] sm:$0xff]
        %v1400 = vld [vmem:[%s984 + $0xb90] sm:$0xff]
        %v1401 = vld [vmem:[%s984 + $0xb98] sm:$0xff]
        %v1402 = vld [vmem:[%s984 + $0xba0] sm:$0xff]
        %v1403 = vld [vmem:[%s984 + $0xba8] sm:$0xff]
        %v1404 = vld [vmem:[%s984 + $0xbb0] sm:$0xff]
        %v1405 = vld [vmem:[%s984 + $0xbb8] sm:$0xff]
        %v1406 = vld [vmem:[%s984 + $0xbc0] sm:$0xff]
        %v1407 = vld [vmem:[%s984 + $0xbc8] sm:$0xff]
        %v1408 = vld [vmem:[%s984 + $0xbd0] sm:$0xff]
        %v1409 = vld [vmem:[%s984 + $0xbd8] sm:$0xff]
        %v1410 = vld [vmem:[%s984 + $0xbe0] sm:$0xff]
        %v1411 = vld [vmem:[%s984 + $0xbe8] sm:$0xff]
        %v1412 = vld [vmem:[%s984 + $0xbf0] sm:$0xff]
        %v1413 = vld [vmem:[%s984 + $0xbf8] sm:$0xff]
        %v1414 = vld [vmem:[%s984 + $0xc00] sm:$0xff]
        %v1415 = vld [vmem:[%s984 + $0xc08] sm:$0xff]
        %v1416 = vld [vmem:[%s984 + $0xc10] sm:$0xff]
        %v1417 = vld [vmem:[%s984 + $0xc18] sm:$0xff]
        %v1418 = vld [vmem:[%s984 + $0xc20] sm:$0xff]
        %v1419 = vld [vmem:[%s984 + $0xc28] sm:$0xff]
        %v1420 = vld [vmem:[%s984 + $0xc30] sm:$0xff]
        %v1421 = vld [vmem:[%s984 + $0xc38] sm:$0xff]
        %v1422 = vld [vmem:[%s1023] sm:$0x3]
        %v1424 = vperm.slane %v1422, 0
        %v1425 = vperm.slane %v1422, 1
        %1432 = vst [vmem:[#allocation1] ss:$4 sm:$0xff] %v1026
        %s1433 = scalar_lea.vmem [#allocation1], 32
        %1434 = vst [vmem:[%s1433] ss:$4 sm:$0xff] %v1027
        %v1435 = vld.sshfl [vmem:[#allocation1] sm:$0xff pattern:$0x73625140]
        %v1436 = vld.sshfl [vmem:[#allocation1 + $0x8] sm:$0xff pattern:$0x73625140]
        %v1437 = vld.sshfl [vmem:[#allocation1 + $0x10] sm:$0xff pattern:$0x73625140]
        %v1438 = vld.sshfl [vmem:[#allocation1 + $0x18] sm:$0xff pattern:$0x73625140]
        %v1439 = vld.sshfl [vmem:[#allocation1 + $0x20] sm:$0xff pattern:$0x73625140]
        %v1440 = vld.sshfl [vmem:[#allocation1 + $0x28] sm:$0xff pattern:$0x73625140]
        %v1441 = vld.sshfl [vmem:[#allocation1 + $0x30] sm:$0xff pattern:$0x73625140]
        %v1442 = vld.sshfl [vmem:[#allocation1 + $0x38] sm:$0xff pattern:$0x73625140]
        %1443 = vst [vmem:[#allocation1] ss:$4 sm:$0xff] %v1028
        %1444 = vst [vmem:[%s1433] ss:$4 sm:$0xff] %v1029
        %v1445 = vld.sshfl [vmem:[#allocation1] sm:$0xff pattern:$0x73625140]
        %v1446 = vld.sshfl [vmem:[#allocation1 + $0x8] sm:$0xff pattern:$0x73625140]
        %v1447 = vld.sshfl [vmem:[#allocation1 + $0x10] sm:$0xff pattern:$0x73625140]
        %v1448 = vld.sshfl [vmem:[#allocation1 + $0x18] sm:$0xff pattern:$0x73625140]
        %v1449 = vld.sshfl [vmem:[#allocation1 + $0x20] sm:$0xff pattern:$0x73625140]
        %vm1462 = vcmask 261120
        %v1463 = vsel %vm1462, %v1449, 0
        %1465 = vmatpush.msra.mxu0 %v1060
        %1466 = vmatpush.msra.mxu0 %v1058
        %1467 = vmatpush.msra.mxu0 %v1056
        %1468 = vmatpush.msra.mxu0 %v1054
        %1469 = vmatpush.msra.mxu0 %v1052
        %1470 = vmatpush.msra.mxu0 %v1050
        %1471 = vmatpush.msra.mxu0 %v1048
        %1472 = vmatpush.msra.mxu0 %v1046
        %1473 = vmatpush.msra.mxu0 %v1044
        %1474 = vmatpush.msra.mxu0 %v1042
        %1475 = vmatpush.msra.mxu0 %v1040
        %1476 = vmatpush.msra.mxu0 %v1038
        %1477 = vmatpush.msra.mxu0 %v1036
        %1478 = vmatpush.msra.mxu0 %v1034
        %1479 = vmatpush.msra.mxu0 %v1032
        %1480 = vmatpush.msra.mxu0 %v1030
        %1481 = vmatmul.f32.gmra.mxu0 %v1435
        %v1482 = vpop.f32.mrf.mxu0
        %v1483 = vadd.f32 %v1424, %v1482
        %1484 = vdwg.mxu0
        %1485 = vmatpush.msra.mxu0 %v1092
        %1486 = vmatpush.msra.mxu0 %v1090
        %1487 = vmatpush.msra.mxu0 %v1088
        %1488 = vmatpush.msra.mxu0 %v1086
        %1489 = vmatpush.msra.mxu0 %v1084
        %1490 = vmatpush.msra.mxu0 %v1082
        %1491 = vmatpush.msra.mxu0 %v1080
        %1492 = vmatpush.msra.mxu0 %v1078
        %1493 = vmatpush.msra.mxu0 %v1076
        %1494 = vmatpush.msra.mxu0 %v1074
        %1495 = vmatpush.msra.mxu0 %v1072
        %1496 = vmatpush.msra.mxu0 %v1070
        %1497 = vmatpush.msra.mxu0 %v1068
        %1498 = vmatpush.msra.mxu0 %v1066
        %1499 = vmatpush.msra.mxu0 %v1064
        %1500 = vmatpush.msra.mxu0 %v1062
        %1501 = vmatmul.f32.gmra.mxu0 %v1436
        %v1502 = vpop.f32.mrf.mxu0
        %v1503 = vadd.f32 %v1483, %v1502
        %1504 = vdwg.mxu0
        %1505 = vmatpush.msra.mxu0 %v1124
        %1506 = vmatpush.msra.mxu0 %v1122
        %1507 = vmatpush.msra.mxu0 %v1120
        %1508 = vmatpush.msra.mxu0 %v1118
        %1509 = vmatpush.msra.mxu0 %v1116
        %1510 = vmatpush.msra.mxu0 %v1114
        %1511 = vmatpush.msra.mxu0 %v1112
        %1512 = vmatpush.msra.mxu0 %v1110
        %1513 = vmatpush.msra.mxu0 %v1108
        %1514 = vmatpush.msra.mxu0 %v1106
        %1515 = vmatpush.msra.mxu0 %v1104
        %1516 = vmatpush.msra.mxu0 %v1102
        %1517 = vmatpush.msra.mxu0 %v1100
        %1518 = vmatpush.msra.mxu0 %v1098
        %1519 = vmatpush.msra.mxu0 %v1096
        %1520 = vmatpush.msra.mxu0 %v1094
        %1521 = vmatmul.f32.gmra.mxu0 %v1437
        %v1522 = vpop.f32.mrf.mxu0
        %v1523 = vadd.f32 %v1503, %v1522
        %1524 = vdwg.mxu0
        %1525 = vmatpush.msra.mxu0 %v1156
        %1526 = vmatpush.msra.mxu0 %v1154
        %1527 = vmatpush.msra.mxu0 %v1152
        %1528 = vmatpush.msra.mxu0 %v1150
        %1529 = vmatpush.msra.mxu0 %v1148
        %1530 = vmatpush.msra.mxu0 %v1146
        %1531 = vmatpush.msra.mxu0 %v1144
        %1532 = vmatpush.msra.mxu0 %v1142
        %1533 = vmatpush.msra.mxu0 %v1140
        %1534 = vmatpush.msra.mxu0 %v1138
        %1535 = vmatpush.msra.mxu0 %v1136
        %1536 = vmatpush.msra.mxu0 %v1134
        %1537 = vmatpush.msra.mxu0 %v1132
        %1538 = vmatpush.msra.mxu0 %v1130
        %1539 = vmatpush.msra.mxu0 %v1128
        %1540 = vmatpush.msra.mxu0 %v1126
        %1541 = vmatmul.f32.gmra.mxu0 %v1438
        %v1542 = vpop.f32.mrf.mxu0
        %v1543 = vadd.f32 %v1523, %v1542
        %1544 = vdwg.mxu0
        %1545 = vmatpush.msra.mxu0 %v1188
        %1546 = vmatpush.msra.mxu0 %v1186
        %1547 = vmatpush.msra.mxu0 %v1184
        %1548 = vmatpush.msra.mxu0 %v1182
        %1549 = vmatpush.msra.mxu0 %v1180
        %1550 = vmatpush.msra.mxu0 %v1178
        %1551 = vmatpush.msra.mxu0 %v1176
        %1552 = vmatpush.msra.mxu0 %v1174
        %1553 = vmatpush.msra.mxu0 %v1172
        %1554 = vmatpush.msra.mxu0 %v1170
        %1555 = vmatpush.msra.mxu0 %v1168
        %1556 = vmatpush.msra.mxu0 %v1166
        %1557 = vmatpush.msra.mxu0 %v1164
        %1558 = vmatpush.msra.mxu0 %v1162
        %1559 = vmatpush.msra.mxu0 %v1160
        %1560 = vmatpush.msra.mxu0 %v1158
        %1561 = vmatmul.f32.gmra.mxu0 %v1439
        %v1562 = vpop.f32.mrf.mxu0
        %v1563 = vadd.f32 %v1543, %v1562
        %1564 = vdwg.mxu0
        %1565 = vmatpush.msra.mxu0 %v1220
        %1566 = vmatpush.msra.mxu0 %v1218
        %1567 = vmatpush.msra.mxu0 %v1216
        %1568 = vmatpush.msra.mxu0 %v1214
        %1569 = vmatpush.msra.mxu0 %v1212
        %1570 = vmatpush.msra.mxu0 %v1210
        %1571 = vmatpush.msra.mxu0 %v1208
        %1572 = vmatpush.msra.mxu0 %v1206
        %1573 = vmatpush.msra.mxu0 %v1204
        %1574 = vmatpush.msra.mxu0 %v1202
        %1575 = vmatpush.msra.mxu0 %v1200
        %1576 = vmatpush.msra.mxu0 %v1198
        %1577 = vmatpush.msra.mxu0 %v1196
        %1578 = vmatpush.msra.mxu0 %v1194
        %1579 = vmatpush.msra.mxu0 %v1192
        %1580 = vmatpush.msra.mxu0 %v1190
        %1581 = vmatmul.f32.gmra.mxu0 %v1440
        %v1582 = vpop.f32.mrf.mxu0
        %v1583 = vadd.f32 %v1563, %v1582
        %1584 = vdwg.mxu0
        %1585 = vmatpush.msra.mxu0 %v1252
        %1586 = vmatpush.msra.mxu0 %v1250
        %1587 = vmatpush.msra.mxu0 %v1248
        %1588 = vmatpush.msra.mxu0 %v1246
        %1589 = vmatpush.msra.mxu0 %v1244
        %1590 = vmatpush.msra.mxu0 %v1242
        %1591 = vmatpush.msra.mxu0 %v1240
        %1592 = vmatpush.msra.mxu0 %v1238
        %1593 = vmatpush.msra.mxu0 %v1236
        %1594 = vmatpush.msra.mxu0 %v1234
        %1595 = vmatpush.msra.mxu0 %v1232
        %1596 = vmatpush.msra.mxu0 %v1230
        %1597 = vmatpush.msra.mxu0 %v1228
        %1598 = vmatpush.msra.mxu0 %v1226
        %1599 = vmatpush.msra.mxu0 %v1224
        %1600 = vmatpush.msra.mxu0 %v1222
        %1601 = vmatmul.f32.gmra.mxu0 %v1441
        %v1602 = vpop.f32.mrf.mxu0
        %v1603 = vadd.f32 %v1583, %v1602
        %1604 = vdwg.mxu0
        %1605 = vmatpush.msra.mxu0 %v1284
        %1606 = vmatpush.msra.mxu0 %v1282
        %1607 = vmatpush.msra.mxu0 %v1280
        %1608 = vmatpush.msra.mxu0 %v1278
        %1609 = vmatpush.msra.mxu0 %v1276
        %1610 = vmatpush.msra.mxu0 %v1274
        %1611 = vmatpush.msra.mxu0 %v1272
        %1612 = vmatpush.msra.mxu0 %v1270
        %1613 = vmatpush.msra.mxu0 %v1268
        %1614 = vmatpush.msra.mxu0 %v1266
        %1615 = vmatpush.msra.mxu0 %v1264
        %1616 = vmatpush.msra.mxu0 %v1262
        %1617 = vmatpush.msra.mxu0 %v1260
        %1618 = vmatpush.msra.mxu0 %v1258
        %1619 = vmatpush.msra.mxu0 %v1256
        %1620 = vmatpush.msra.mxu0 %v1254
        %1621 = vmatmul.f32.gmra.mxu0 %v1442
        %v1622 = vpop.f32.mrf.mxu0
        %v1623 = vadd.f32 %v1603, %v1622
        %1624 = vdwg.mxu0
        %1625 = vmatpush.msra.mxu0 %v1316
        %1626 = vmatpush.msra.mxu0 %v1314
        %1627 = vmatpush.msra.mxu0 %v1312
        %1628 = vmatpush.msra.mxu0 %v1310
        %1629 = vmatpush.msra.mxu0 %v1308
        %1630 = vmatpush.msra.mxu0 %v1306
        %1631 = vmatpush.msra.mxu0 %v1304
        %1632 = vmatpush.msra.mxu0 %v1302
        %1633 = vmatpush.msra.mxu0 %v1300
        %1634 = vmatpush.msra.mxu0 %v1298
        %1635 = vmatpush.msra.mxu0 %v1296
        %1636 = vmatpush.msra.mxu0 %v1294
        %1637 = vmatpush.msra.mxu0 %v1292
        %1638 = vmatpush.msra.mxu0 %v1290
        %1639 = vmatpush.msra.mxu0 %v1288
        %1640 = vmatpush.msra.mxu0 %v1286
        %1641 = vmatmul.f32.gmra.mxu0 %v1445
        %v1642 = vpop.f32.mrf.mxu0
        %v1643 = vadd.f32 %v1623, %v1642
        %1644 = vdwg.mxu0
        %1645 = vmatpush.msra.mxu0 %v1348
        %1646 = vmatpush.msra.mxu0 %v1346
        %1647 = vmatpush.msra.mxu0 %v1344
        %1648 = vmatpush.msra.mxu0 %v1342
        %1649 = vmatpush.msra.mxu0 %v1340
        %1650 = vmatpush.msra.mxu0 %v1338
        %1651 = vmatpush.msra.mxu0 %v1336
        %1652 = vmatpush.msra.mxu0 %v1334
        %1653 = vmatpush.msra.mxu0 %v1332
        %1654 = vmatpush.msra.mxu0 %v1330
        %1655 = vmatpush.msra.mxu0 %v1328
        %1656 = vmatpush.msra.mxu0 %v1326
        %1657 = vmatpush.msra.mxu0 %v1324
        %1658 = vmatpush.msra.mxu0 %v1322
        %1659 = vmatpush.msra.mxu0 %v1320
        %1660 = vmatpush.msra.mxu0 %v1318
        %1661 = vmatmul.f32.gmra.mxu0 %v1446
        %v1662 = vpop.f32.mrf.mxu0
        %v1663 = vadd.f32 %v1643, %v1662
        %1664 = vdwg.mxu0
        %1665 = vmatpush.msra.mxu0 %v1380
        %1666 = vmatpush.msra.mxu0 %v1378
        %1667 = vmatpush.msra.mxu0 %v1376
        %1668 = vmatpush.msra.mxu0 %v1374
        %1669 = vmatpush.msra.mxu0 %v1372
        %1670 = vmatpush.msra.mxu0 %v1370
        %1671 = vmatpush.msra.mxu0 %v1368
        %1672 = vmatpush.msra.mxu0 %v1366
        %1673 = vmatpush.msra.mxu0 %v1364
        %1674 = vmatpush.msra.mxu0 %v1362
        %1675 = vmatpush.msra.mxu0 %v1360
        %1676 = vmatpush.msra.mxu0 %v1358
        %1677 = vmatpush.msra.mxu0 %v1356
        %1678 = vmatpush.msra.mxu0 %v1354
        %1679 = vmatpush.msra.mxu0 %v1352
        %1680 = vmatpush.msra.mxu0 %v1350
        %1681 = vmatmul.f32.gmra.mxu0 %v1447
        %v1682 = vpop.f32.mrf.mxu0
        %v1683 = vadd.f32 %v1663, %v1682
        %1684 = vdwg.mxu0
        %1685 = vmatpush.msra.mxu0 %v1412
        %1686 = vmatpush.msra.mxu0 %v1410
        %1687 = vmatpush.msra.mxu0 %v1408
        %1688 = vmatpush.msra.mxu0 %v1406
        %1689 = vmatpush.msra.mxu0 %v1404
        %1690 = vmatpush.msra.mxu0 %v1402
        %1691 = vmatpush.msra.mxu0 %v1400
        %1692 = vmatpush.msra.mxu0 %v1398
        %1693 = vmatpush.msra.mxu0 %v1396
        %1694 = vmatpush.msra.mxu0 %v1394
        %1695 = vmatpush.msra.mxu0 %v1392
        %1696 = vmatpush.msra.mxu0 %v1390
        %1697 = vmatpush.msra.mxu0 %v1388
        %1698 = vmatpush.msra.mxu0 %v1386
        %1699 = vmatpush.msra.mxu0 %v1384
        %1700 = vmatpush.msra.mxu0 %v1382
        %1701 = vmatmul.f32.gmra.mxu0 %v1448
        %v1702 = vpop.f32.mrf.mxu0
        %v1703 = vadd.f32 %v1683, %v1702
        %1704 = vdwg.mxu0
        %1705 = vmatpush.msra.mxu0 0.0
        %1706 = vmatpush.msra.mxu0 0.0
        %1707 = vmatpush.msra.mxu0 0.0
        %1708 = vmatpush.msra.mxu0 0.0
        %1709 = vmatpush.msra.mxu0 0.0
        %1710 = vmatpush.msra.mxu0 0.0
        %1711 = vmatpush.msra.mxu0 0.0
        %1712 = vmatpush.msra.mxu0 0.0
        %1713 = vmatpush.msra.mxu0 0.0
        %1714 = vmatpush.msra.mxu0 0.0
        %1715 = vmatpush.msra.mxu0 0.0
        %1716 = vmatpush.msra.mxu0 0.0
        %1717 = vmatpush.msra.mxu0 %v1420
        %1718 = vmatpush.msra.mxu0 %v1418
        %1719 = vmatpush.msra.mxu0 %v1416
        %1720 = vmatpush.msra.mxu0 %v1414
        %1721 = vmatmul.f32.gmra.mxu0 %v1463
        %v1722 = vpop.f32.mrf.mxu0
        %v1723 = vadd.f32 %v1703, %v1722
        %1724 = vdwg.mxu0
        %1725 = vmatpush.msra.mxu0 %v1061
        %1726 = vmatpush.msra.mxu0 %v1059
        %1727 = vmatpush.msra.mxu0 %v1057
        %1728 = vmatpush.msra.mxu0 %v1055
        %1729 = vmatpush.msra.mxu0 %v1053
        %1730 = vmatpush.msra.mxu0 %v1051
        %1731 = vmatpush.msra.mxu0 %v1049
        %1732 = vmatpush.msra.mxu0 %v1047
        %1733 = vmatpush.msra.mxu0 %v1045
        %1734 = vmatpush.msra.mxu0 %v1043
        %1735 = vmatpush.msra.mxu0 %v1041
        %1736 = vmatpush.msra.mxu0 %v1039
        %1737 = vmatpush.msra.mxu0 %v1037
        %1738 = vmatpush.msra.mxu0 %v1035
        %1739 = vmatpush.msra.mxu0 %v1033
        %1740 = vmatpush.msra.mxu0 %v1031
        %1741 = vmatmul.f32.gmra.mxu0 %v1435
        %v1742 = vpop.f32.mrf.mxu0
        %v1743 = vadd.f32 %v1425, %v1742
        %1744 = vdwg.mxu0
        %1745 = vmatpush.msra.mxu0 %v1093
        %1746 = vmatpush.msra.mxu0 %v1091
        %1747 = vmatpush.msra.mxu0 %v1089
        %1748 = vmatpush.msra.mxu0 %v1087
        %1749 = vmatpush.msra.mxu0 %v1085
        %1750 = vmatpush.msra.mxu0 %v1083
        %1751 = vmatpush.msra.mxu0 %v1081
        %1752 = vmatpush.msra.mxu0 %v1079
        %1753 = vmatpush.msra.mxu0 %v1077
        %1754 = vmatpush.msra.mxu0 %v1075
        %1755 = vmatpush.msra.mxu0 %v1073
        %1756 = vmatpush.msra.mxu0 %v1071
        %1757 = vmatpush.msra.mxu0 %v1069
        %1758 = vmatpush.msra.mxu0 %v1067
        %1759 = vmatpush.msra.mxu0 %v1065
        %1760 = vmatpush.msra.mxu0 %v1063
        %1761 = vmatmul.f32.gmra.mxu0 %v1436
        %v1762 = vpop.f32.mrf.mxu0
        %v1763 = vadd.f32 %v1743, %v1762
        %1764 = vdwg.mxu0
        %1765 = vmatpush.msra.mxu0 %v1125
        %1766 = vmatpush.msra.mxu0 %v1123
        %1767 = vmatpush.msra.mxu0 %v1121
        %1768 = vmatpush.msra.mxu0 %v1119
        %1769 = vmatpush.msra.mxu0 %v1117
        %1770 = vmatpush.msra.mxu0 %v1115
        %1771 = vmatpush.msra.mxu0 %v1113
        %1772 = vmatpush.msra.mxu0 %v1111
        %1773 = vmatpush.msra.mxu0 %v1109
        %1774 = vmatpush.msra.mxu0 %v1107
        %1775 = vmatpush.msra.mxu0 %v1105
        %1776 = vmatpush.msra.mxu0 %v1103
        %1777 = vmatpush.msra.mxu0 %v1101
        %1778 = vmatpush.msra.mxu0 %v1099
        %1779 = vmatpush.msra.mxu0 %v1097
        %1780 = vmatpush.msra.mxu0 %v1095
        %1781 = vmatmul.f32.gmra.mxu0 %v1437
        %v1782 = vpop.f32.mrf.mxu0
        %v1783 = vadd.f32 %v1763, %v1782
        %1784 = vdwg.mxu0
        %1785 = vmatpush.msra.mxu0 %v1157
        %1786 = vmatpush.msra.mxu0 %v1155
        %1787 = vmatpush.msra.mxu0 %v1153
        %1788 = vmatpush.msra.mxu0 %v1151
        %1789 = vmatpush.msra.mxu0 %v1149
        %1790 = vmatpush.msra.mxu0 %v1147
        %1791 = vmatpush.msra.mxu0 %v1145
        %1792 = vmatpush.msra.mxu0 %v1143
        %1793 = vmatpush.msra.mxu0 %v1141
        %1794 = vmatpush.msra.mxu0 %v1139
        %1795 = vmatpush.msra.mxu0 %v1137
        %1796 = vmatpush.msra.mxu0 %v1135
        %1797 = vmatpush.msra.mxu0 %v1133
        %1798 = vmatpush.msra.mxu0 %v1131
        %1799 = vmatpush.msra.mxu0 %v1129
        %1800 = vmatpush.msra.mxu0 %v1127
        %1801 = vmatmul.f32.gmra.mxu0 %v1438
        %v1802 = vpop.f32.mrf.mxu0
        %v1803 = vadd.f32 %v1783, %v1802
        %1804 = vdwg.mxu0
        %1805 = vmatpush.msra.mxu0 %v1189
        %1806 = vmatpush.msra.mxu0 %v1187
        %1807 = vmatpush.msra.mxu0 %v1185
        %1808 = vmatpush.msra.mxu0 %v1183
        %1809 = vmatpush.msra.mxu0 %v1181
        %1810 = vmatpush.msra.mxu0 %v1179
        %1811 = vmatpush.msra.mxu0 %v1177
        %1812 = vmatpush.msra.mxu0 %v1175
        %1813 = vmatpush.msra.mxu0 %v1173
        %1814 = vmatpush.msra.mxu0 %v1171
        %1815 = vmatpush.msra.mxu0 %v1169
        %1816 = vmatpush.msra.mxu0 %v1167
        %1817 = vmatpush.msra.mxu0 %v1165
        %1818 = vmatpush.msra.mxu0 %v1163
        %1819 = vmatpush.msra.mxu0 %v1161
        %1820 = vmatpush.msra.mxu0 %v1159
        %1821 = vmatmul.f32.gmra.mxu0 %v1439
        %v1822 = vpop.f32.mrf.mxu0
        %v1823 = vadd.f32 %v1803, %v1822
        %1824 = vdwg.mxu0
        %1825 = vmatpush.msra.mxu0 %v1221
        %1826 = vmatpush.msra.mxu0 %v1219
        %1827 = vmatpush.msra.mxu0 %v1217
        %1828 = vmatpush.msra.mxu0 %v1215
        %1829 = vmatpush.msra.mxu0 %v1213
        %1830 = vmatpush.msra.mxu0 %v1211
        %1831 = vmatpush.msra.mxu0 %v1209
        %1832 = vmatpush.msra.mxu0 %v1207
        %1833 = vmatpush.msra.mxu0 %v1205
        %1834 = vmatpush.msra.mxu0 %v1203
        %1835 = vmatpush.msra.mxu0 %v1201
        %1836 = vmatpush.msra.mxu0 %v1199
        %1837 = vmatpush.msra.mxu0 %v1197
        %1838 = vmatpush.msra.mxu0 %v1195
        %1839 = vmatpush.msra.mxu0 %v1193
        %1840 = vmatpush.msra.mxu0 %v1191
        %1841 = vmatmul.f32.gmra.mxu0 %v1440
        %v1842 = vpop.f32.mrf.mxu0
        %v1843 = vadd.f32 %v1823, %v1842
        %1844 = vdwg.mxu0
        %1845 = vmatpush.msra.mxu0 %v1253
        %1846 = vmatpush.msra.mxu0 %v1251
        %1847 = vmatpush.msra.mxu0 %v1249
        %1848 = vmatpush.msra.mxu0 %v1247
        %1849 = vmatpush.msra.mxu0 %v1245
        %1850 = vmatpush.msra.mxu0 %v1243
        %1851 = vmatpush.msra.mxu0 %v1241
        %1852 = vmatpush.msra.mxu0 %v1239
        %1853 = vmatpush.msra.mxu0 %v1237
        %1854 = vmatpush.msra.mxu0 %v1235
        %1855 = vmatpush.msra.mxu0 %v1233
        %1856 = vmatpush.msra.mxu0 %v1231
        %1857 = vmatpush.msra.mxu0 %v1229
        %1858 = vmatpush.msra.mxu0 %v1227
        %1859 = vmatpush.msra.mxu0 %v1225
        %1860 = vmatpush.msra.mxu0 %v1223
        %1861 = vmatmul.f32.gmra.mxu0 %v1441
        %v1862 = vpop.f32.mrf.mxu0
        %v1863 = vadd.f32 %v1843, %v1862
        %1864 = vdwg.mxu0
        %1865 = vmatpush.msra.mxu0 %v1285
        %1866 = vmatpush.msra.mxu0 %v1283
        %1867 = vmatpush.msra.mxu0 %v1281
        %1868 = vmatpush.msra.mxu0 %v1279
        %1869 = vmatpush.msra.mxu0 %v1277
        %1870 = vmatpush.msra.mxu0 %v1275
        %1871 = vmatpush.msra.mxu0 %v1273
        %1872 = vmatpush.msra.mxu0 %v1271
        %1873 = vmatpush.msra.mxu0 %v1269
        %1874 = vmatpush.msra.mxu0 %v1267
        %1875 = vmatpush.msra.mxu0 %v1265
        %1876 = vmatpush.msra.mxu0 %v1263
        %1877 = vmatpush.msra.mxu0 %v1261
        %1878 = vmatpush.msra.mxu0 %v1259
        %1879 = vmatpush.msra.mxu0 %v1257
        %1880 = vmatpush.msra.mxu0 %v1255
        %1881 = vmatmul.f32.gmra.mxu0 %v1442
        %v1882 = vpop.f32.mrf.mxu0
        %v1883 = vadd.f32 %v1863, %v1882
        %1884 = vdwg.mxu0
        %1885 = vmatpush.msra.mxu0 %v1317
        %1886 = vmatpush.msra.mxu0 %v1315
        %1887 = vmatpush.msra.mxu0 %v1313
        %1888 = vmatpush.msra.mxu0 %v1311
        %1889 = vmatpush.msra.mxu0 %v1309
        %1890 = vmatpush.msra.mxu0 %v1307
        %1891 = vmatpush.msra.mxu0 %v1305
        %1892 = vmatpush.msra.mxu0 %v1303
        %1893 = vmatpush.msra.mxu0 %v1301
        %1894 = vmatpush.msra.mxu0 %v1299
        %1895 = vmatpush.msra.mxu0 %v1297
        %1896 = vmatpush.msra.mxu0 %v1295
        %1897 = vmatpush.msra.mxu0 %v1293
        %1898 = vmatpush.msra.mxu0 %v1291
        %1899 = vmatpush.msra.mxu0 %v1289
        %1900 = vmatpush.msra.mxu0 %v1287
        %1901 = vmatmul.f32.gmra.mxu0 %v1445
        %v1902 = vpop.f32.mrf.mxu0
        %v1903 = vadd.f32 %v1883, %v1902
        %1904 = vdwg.mxu0
        %1905 = vmatpush.msra.mxu0 %v1349
        %1906 = vmatpush.msra.mxu0 %v1347
        %1907 = vmatpush.msra.mxu0 %v1345
        %1908 = vmatpush.msra.mxu0 %v1343
        %1909 = vmatpush.msra.mxu0 %v1341
        %1910 = vmatpush.msra.mxu0 %v1339
        %1911 = vmatpush.msra.mxu0 %v1337
        %1912 = vmatpush.msra.mxu0 %v1335
        %1913 = vmatpush.msra.mxu0 %v1333
        %1914 = vmatpush.msra.mxu0 %v1331
        %1915 = vmatpush.msra.mxu0 %v1329
        %1916 = vmatpush.msra.mxu0 %v1327
        %1917 = vmatpush.msra.mxu0 %v1325
        %1918 = vmatpush.msra.mxu0 %v1323
        %1919 = vmatpush.msra.mxu0 %v1321
        %1920 = vmatpush.msra.mxu0 %v1319
        %1921 = vmatmul.f32.gmra.mxu0 %v1446
        %v1922 = vpop.f32.mrf.mxu0
        %v1923 = vadd.f32 %v1903, %v1922
        %1924 = vdwg.mxu0
        %1925 = vmatpush.msra.mxu0 %v1381
        %1926 = vmatpush.msra.mxu0 %v1379
        %1927 = vmatpush.msra.mxu0 %v1377
        %1928 = vmatpush.msra.mxu0 %v1375
        %1929 = vmatpush.msra.mxu0 %v1373
        %1930 = vmatpush.msra.mxu0 %v1371
        %1931 = vmatpush.msra.mxu0 %v1369
        %1932 = vmatpush.msra.mxu0 %v1367
        %1933 = vmatpush.msra.mxu0 %v1365
        %1934 = vmatpush.msra.mxu0 %v1363
        %1935 = vmatpush.msra.mxu0 %v1361
        %1936 = vmatpush.msra.mxu0 %v1359
        %1937 = vmatpush.msra.mxu0 %v1357
        %1938 = vmatpush.msra.mxu0 %v1355
        %1939 = vmatpush.msra.mxu0 %v1353
        %1940 = vmatpush.msra.mxu0 %v1351
        %1941 = vmatmul.f32.gmra.mxu0 %v1447
        %v1942 = vpop.f32.mrf.mxu0
        %v1943 = vadd.f32 %v1923, %v1942
        %1944 = vdwg.mxu0
        %1945 = vmatpush.msra.mxu0 %v1413
        %1946 = vmatpush.msra.mxu0 %v1411
        %1947 = vmatpush.msra.mxu0 %v1409
        %1948 = vmatpush.msra.mxu0 %v1407
        %1949 = vmatpush.msra.mxu0 %v1405
        %1950 = vmatpush.msra.mxu0 %v1403
        %1951 = vmatpush.msra.mxu0 %v1401
        %1952 = vmatpush.msra.mxu0 %v1399
        %1953 = vmatpush.msra.mxu0 %v1397
        %1954 = vmatpush.msra.mxu0 %v1395
        %1955 = vmatpush.msra.mxu0 %v1393
        %1956 = vmatpush.msra.mxu0 %v1391
        %1957 = vmatpush.msra.mxu0 %v1389
        %1958 = vmatpush.msra.mxu0 %v1387
        %1959 = vmatpush.msra.mxu0 %v1385
        %1960 = vmatpush.msra.mxu0 %v1383
        %1961 = vmatmul.f32.gmra.mxu0 %v1448
        %v1962 = vpop.f32.mrf.mxu0
        %v1963 = vadd.f32 %v1943, %v1962
        %1964 = vdwg.mxu0
        %1965 = vmatpush.msra.mxu0 0.0
        %1966 = vmatpush.msra.mxu0 0.0
        %1967 = vmatpush.msra.mxu0 0.0
        %1968 = vmatpush.msra.mxu0 0.0
        %1969 = vmatpush.msra.mxu0 0.0
        %1970 = vmatpush.msra.mxu0 0.0
        %1971 = vmatpush.msra.mxu0 0.0
        %1972 = vmatpush.msra.mxu0 0.0
        %1973 = vmatpush.msra.mxu0 0.0
        %1974 = vmatpush.msra.mxu0 0.0
        %1975 = vmatpush.msra.mxu0 0.0
        %1976 = vmatpush.msra.mxu0 0.0
        %1977 = vmatpush.msra.mxu0 %v1421
        %1978 = vmatpush.msra.mxu0 %v1419
        %1979 = vmatpush.msra.mxu0 %v1417
        %1980 = vmatpush.msra.mxu0 %v1415
        %1981 = vmatmul.f32.gmra.mxu0 %v1463
        %v1982 = vpop.f32.mrf.mxu0
        %v1983 = vadd.f32 %v1963, %v1982
        %1984 = vdwg.mxu0
        %v1985 = vmax.f32 %v1723, 0.0
        %v1986 = vmax.f32 %v1983, 0.0
        %v1989 = vrot.slane %v1986, 6
        %vm1990 = vcmask 1041408
        %v1991 = vsel %vm1990, %v1985, %v1989
        %1993 = vst [vmem:[%s1013] sm:$0xf] %v1991
        %s1994 = sand.u32 %s117, 1
        %s1995 = scalar_lea.sflag [#allocation4], %s1994
        %s1996 = sand.u32 %s117, 1
        %s1997 = smul.addr %s1996, 4
        %s1998 = scalar_lea.vmem [#allocation3], %s1997
        // Predicated region
        $region56: #{deepmind_forward.3} parent=50 // pred_check
          %p1999 = pneg %p127
        $region57: #{deepmind_forward.3} parent=50 // pred_check_branch
          %2001 = sbr.rel (%p1999) target = $region59
        $region58: #{deepmind_forward.3} parent=50 // pred_region
          %s2002 = smul.u32 2, %s22
          %2004 = vsyncadd %s1995, 0
          %s2005 = smul.addr %s21, 4
          %s2006 = sadd.s32 %s2002, %s2005
          %s2007 = smul.addr %s2006, 2
          %s2008 = scalar_lea.hbm %s3, %s2007
          %s2010 = sshll.u32 %s1998, 4
          %s2011 = int_to_ptr.vmem [resolvable:$true] %s2010
          %s2012 = sshll.u32 %s2008, 4
          %s2013 = int_to_ptr.hbm [resolvable:$true] %s2012
          %2015 = dma.vmem_to_hbm [thread:$0]  %s2011, 64, %s2013, %s1995
        $region59: #{deepmind_forward.3} parent=50 // pred_fallthru
          _
      $region51: #{deepmind_forward.3} parent=5 // pred_fallthru
        _
      %p2016 = scmp.le.s32.totalorder 2, %s12
      // Predicated region
      $region60: #{deepmind_forward.3} parent=5 // pred_check
        %p2017 = pneg %p2016
      $region61: #{deepmind_forward.3} parent=5 // pred_check_branch
        %2019 = sbr.rel (%p2017) target = $region63
      $region62: #{deepmind_forward.3} parent=5 // pred_region
        %s2020 = ssub.s32 %s12, 2
        // Predicated region
        $region64: #{deepmind_forward.3} parent=62 // pred_check
          %p2021 = pneg %p133
        $region65: #{deepmind_forward.3} parent=62 // pred_check_branch
          %2023 = sbr.rel (%p2021) target = $region67
        $region66: #{deepmind_forward.3} parent=62 // pred_region
          %s2024 = sand.u32 %s118, 1
          %s2025 = scalar_lea.sflag [#allocation4], %s2024
          %s2026 = sand.u32 %s118, 1
          %s2027 = smul.addr %s2026, 4
          %s2028 = scalar_lea.vmem [#allocation3], %s2027
          %2030 = dma.done %s2025, 64
        $region67: #{deepmind_forward.3} parent=62 // pred_fallthru
          _
      $region63: #{deepmind_forward.3} parent=5 // pred_fallthru
        _
    $region6: #{deepmind_forward.3} parent=1 // loop_footer
      %s16 = sadd.s32 1, %s12
    $region7: #{deepmind_forward.3} parent=1 // loop_footer_branch
      %11 = sbr.rel target = $region3
    $region8: #{deepmind_forward.3} parent=1 // loop_exit
      _
    %2031 = vsyncpa [#allocation4], 1
    %s2032 = scalar_lea.sflag [#allocation4], 1
    %2033 = vsyncpa %s2032, 1

</llo_original>
